<compile_context>
chip_gen: v6e
topology: v6e:2x2x1
jax: 0.10.0
libtpu: 0.0.40
codegen_flags: <defaults>
</compile_context>

<pallas_src>
import functools
import numpy as np
import jax
import jax.numpy as jnp
from jax import lax
from jax.experimental import pallas as pl
from jax.experimental.pallas import tpu as pltpu


# ----------------------------------------------------------------------------
# Sinusoid position-encoding table (exact port of the PyTorch helper)
# ----------------------------------------------------------------------------
def get_sinusoid_encoding_table(n_position, d_hid, padding_idx=None):
    def cal_angle(position, hid_idx):
        return position / np.power(10000, 2 * (hid_idx // 2) / d_hid)

    def get_posi_angle_vec(position):
        return [cal_angle(position, hid_j) for hid_j in range(d_hid)]

    sinusoid_table = np.array(
        [get_posi_angle_vec(pos_i) for pos_i in range(n_position)])
    sinusoid_table[:, 0::2] = np.sin(sinusoid_table[:, 0::2])
    sinusoid_table[:, 1::2] = np.cos(sinusoid_table[:, 1::2])
    if padding_idx is not None:
        sinusoid_table[padding_idx] = 0.0
    return np.asarray(sinusoid_table, dtype=np.float32)


# ----------------------------------------------------------------------------
# Shared helper (f32 math, used by kernel and reference)
# ----------------------------------------------------------------------------
def _layer_norm(x, gamma, beta, eps=1e-5):
    mean = jnp.mean(x, axis=-1, keepdims=True)
    var = jnp.mean((x - mean) ** 2, axis=-1, keepdims=True)
    return (x - mean) * lax.rsqrt(var + eps) * gamma + beta


# ----------------------------------------------------------------------------
# Fused decoder kernel: one (batch_tile, layer) grid step = one FFTBlock on a
# whole batch tile.  out_ref doubles as the VMEM-resident activation.
# ----------------------------------------------------------------------------
def decoder_stack_kernel(lens_ref,                        # scalar prefetch (SMEM)
                         x_in_ref, pos_ref,
                         wqkv_ref, bqkv_ref, wo_ref, bo_ref,
                         g1_ref, be1_ref,
                         w1_ref, b1_ref, w2_ref, b2_ref,
                         g2_ref, be2_ref,
                         out_ref,
                         xp_sc,
                         *, n_head, d_k, d_v, k1, k2):
    bt_idx = pl.program_id(0)
    layer = pl.program_id(1)
    Bt, L, D = out_ref.shape
    BL = Bt * L
    b0 = bt_idx * Bt                      # first sequence of this batch tile
    p1 = (k1 - 1) // 2

    # ---- padding masks from per-sequence lengths (SMEM scalars) ------------
    # TODO(synk): assumes contiguous right-padding (get_mask_from_lengths).
    kpos = lax.broadcasted_iota(jnp.int32, (Bt, 1, L), 2)
    kseq = lax.broadcasted_iota(jnp.int32, (Bt, 1, L), 0)
    klen = jnp.zeros((Bt, 1, L), jnp.int32)
    qrow = lax.broadcasted_iota(jnp.int32, (BL, 1), 0)
    qend = jnp.zeros((BL, 1), jnp.int32)
    for i in range(Bt):                   # small static loop over sequences
        ln = lens_ref[b0 + i]
        klen = jnp.where(kseq == i, ln, klen)
        qend = jnp.where((qrow >= i * L) & (qrow < (i + 1) * L), ln + i * L, qend)
    k_pad = kpos >= klen                  # (Bt, 1, L)  padded key columns
    q_pad = qrow >= qend                  # (Bt*L, 1)   padded query rows

    # ---- layer 0: materialize x + pos-enc in the resident output block and
    #      zero the conv halos of the persistent scratch ---------------------
    @pl.when(layer == 0)
    def _():
        out_ref[...] = x_in_ref[...] + pos_ref[...][None, :, :]
        if p1 > 0:
            xp_sc[:, 0:p1, :] = jnp.zeros((Bt, p1, D), jnp.float32)
            xp_sc[:, p1 + L:p1 + L + p1, :] = jnp.zeros((Bt, p1, D), jnp.float32)

    x = out_ref[...]                      # (Bt, L, D) resident activation
    x_flat = x.reshape(BL, D)
    xb = x_flat.astype(jnp.bfloat16)      # bf16 operand for weight matmuls

    # ---- multi-head self-attention (fused QKV, bf16 weights, f32 acc) ------
    qkv = jnp.dot(xb, wqkv_ref[...],
                  preferred_element_type=jnp.float32) + bqkv_ref[...]
    hdk = n_head * d_k
    inv_temp = float(1.0 / np.sqrt(d_k))

    o = None
    for h in range(n_head):               # small static head loop
        qh = qkv[:, h * d_k:(h + 1) * d_k].reshape(Bt, L, d_k)
        kh = qkv[:, hdk + h * d_k:hdk + (h + 1) * d_k].reshape(Bt, L, d_k)
        vh = qkv[:, 2 * hdk + h * d_v:2 * hdk + (h + 1) * d_v].reshape(Bt, L, d_v)
        # softmax path stays in f32 (v5e has no bf16 VPU/EUP)
        scores = jnp.einsum('bqd,bkd->bqk', qh, kh,
                            preferred_element_type=jnp.float32) * inv_temp
        scores = jnp.where(k_pad, -1e9, scores)      # masked_fill(mask, -inf)
        m = jnp.max(scores, axis=-1, keepdims=True)
        e = jnp.exp(scores - m)
        attn = e * pl.reciprocal(jnp.sum(e, axis=-1, keepdims=True), approx=True)
        head_out = jnp.einsum('bqk,bkd->bqd', attn, vh,
                              preferred_element_type=jnp.float32)
        # fold the head straight into the output projection (no lane concat)
        contrib = jnp.dot(head_out.reshape(BL, d_v).astype(jnp.bfloat16),
                          wo_ref[h * d_v:(h + 1) * d_v, :],
                          preferred_element_type=jnp.float32)
        o = contrib if o is None else o + contrib
    # TODO(synk): for mel-length L (~1000), tile attention over key blocks with
    # an online softmax instead of materializing (L, L) scores per head.
    o = o + bo_ref[...]
    o = _layer_norm(o + x_flat, g1_ref[...], be1_ref[...])
    o = jnp.where(q_pad, 0.0, o)                      # masked_fill(mask, 0)

    # ---- position-wise FFN: Conv1d(k1) -> ReLU -> Conv1d(k2) ---------------
    d_inner = w1_ref.shape[-1]
    if p1 > 0:
        # per-sequence zero halos live in the persistent scratch
        xp_sc[:, p1:p1 + L, :] = o.reshape(Bt, L, D)
        acc1 = jnp.dot(xp_sc[:, 0:L, :].reshape(BL, D).astype(jnp.bfloat16),
                       w1_ref[0], preferred_element_type=jnp.float32)
        for t in range(1, k1):                        # per-tap matmul
            acc1 = acc1 + jnp.dot(
                xp_sc[:, t:t + L, :].reshape(BL, D).astype(jnp.bfloat16),
                w1_ref[t], preferred_element_type=jnp.float32)
        # TODO(synk): if the MXU is underfed at real sizes, stage an im2col
        # (BL, k1*D) tile and do a single large-K matmul instead.
    else:
        acc1 = jnp.dot(o.astype(jnp.bfloat16), w1_ref[0],
                       preferred_element_type=jnp.float32)
    h1 = jnp.maximum(acc1 + b1_ref[...], 0.0)

    if k2 == 1:
        # FastSpeech2 uses kernel_size[1] == 1: plain matmul
        ff = jnp.dot(h1.astype(jnp.bfloat16), w2_ref[0],
                     preferred_element_type=jnp.float32) + b2_ref[...]
    else:
        p2 = (k2 - 1) // 2
        h3 = h1.reshape(Bt, L, d_inner)
        z2 = jnp.zeros((Bt, p2, d_inner), jnp.float32)
        hp = jnp.concatenate([z2, h3, z2], axis=1)
        ff = jnp.dot(hp[:, 0:L, :].reshape(BL, d_inner).astype(jnp.bfloat16),
                     w2_ref[0], preferred_element_type=jnp.float32)
        for t in range(1, k2):
            ff = ff + jnp.dot(
                hp[:, t:t + L, :].reshape(BL, d_inner).astype(jnp.bfloat16),
                w2_ref[t], preferred_element_type=jnp.float32)
        ff = ff + b2_ref[...]

    new_x = _layer_norm(ff + o, g2_ref[...], be2_ref[...])
    new_x = jnp.where(q_pad, 0.0, new_x)              # masked_fill(mask, 0)

    # out_ref IS the resident activation: its block index depends only on the
    # batch-tile axis, so it stays in VMEM across the layer axis and is
    # written back to HBM once per batch tile.
    out_ref[...] = new_x.reshape(Bt, L, D)


# ----------------------------------------------------------------------------
# Pallas wrapper: one fused pallas_call for the whole decoder
# ----------------------------------------------------------------------------
def _vmem_limit_bytes():
    """~3/4 of physical VMEM, capped at 100 MiB (v7x ≈48 MiB, v5e/v6e 96 MiB)."""
    cap = 128 * 1024 * 1024
    try:
        cap = int(getattr(pltpu.get_tpu_info(), 'vmem_capacity_bytes', cap))
    except Exception:
        pass
    return max(32 * 1024 * 1024, min(cap * 3 // 4, 100 * 1024 * 1024))


def run_decoder_stack(x, pos, lengths, pw, *, n_head, d_k, d_v, k1, k2,
                      batch_tile=None):
    B, L, D = x.shape
    n_layers = pw['wqkv'].shape[0]
    p1 = (k1 - 1) // 2

    # One grid step processes a whole batch tile for one layer, so each
    # layer's weights are fetched from HBM only ceil(B / Bt) times (exactly
    # once with the default Bt == B).  On v7x prefer batch_tile = B // 2 so
    # the "parallel" batch-tile axis spans both TensorCores.
    Bt = B if batch_tile is None else batch_tile
    assert B % Bt == 0, "batch must be divisible by batch_tile"
    n_bt = B // Bt
    # TODO(synk): for D < 128 (toy configs) the lanes are only partly used;
    # real FastSpeech2 (D=256, d_inner=1024) is already lane-dense.

    kern = functools.partial(decoder_stack_kernel, n_head=n_head, d_k=d_k,
                             d_v=d_v, k1=k1, k2=k2)

    def lspec(arr):
        # layer-stacked weight: block is one layer's slice, indexed by grid l
        nrest = arr.ndim - 1
        blk = (None,) + arr.shape[1:]
        return pl.BlockSpec(blk, lambda b, l, lens, _n=nrest: (l,) + (0,) * _n)

    grid_spec = pltpu.PrefetchScalarGridSpec(
        num_scalar_prefetch=1,                     # lengths -> SMEM
        grid=(n_bt, n_layers),
        in_specs=[
            pl.BlockSpec((Bt, L, D), lambda b, l, lens: (b, 0, 0)),   # x
            pl.BlockSpec((L, D), lambda b, l, lens: (0, 0)),          # pos enc
            lspec(pw['wqkv']), lspec(pw['bqkv']),
            lspec(pw['wo']), lspec(pw['bo']),
            lspec(pw['g1']), lspec(pw['be1']),
            lspec(pw['w1']), lspec(pw['b1']),
            lspec(pw['w2']), lspec(pw['b2']),
            lspec(pw['g2']), lspec(pw['be2']),
        ],
        out_specs=pl.BlockSpec((Bt, L, D), lambda b, l, lens: (b, 0, 0)),
        scratch_shapes=[
            pltpu.VMEM((Bt, L + 2 * p1, D), jnp.float32),   # padded conv1 input
        ],
    )

    return pl.pallas_call(
        kern,
        out_shape=jax.ShapeDtypeStruct((B, L, D), jnp.float32),
        grid_spec=grid_spec,
        compiler_params=pltpu.CompilerParams(
            dimension_semantics=("parallel", "arbitrary"),
            vmem_limit_bytes=_vmem_limit_bytes()),
    )(lengths, x, pos,
      pw['wqkv'], pw['bqkv'], pw['wo'], pw['bo'], pw['g1'], pw['be1'],
      pw['w1'], pw['b1'], pw['w2'], pw['b2'], pw['g2'], pw['be2'])


def pack_layer_params(layers):
    """Stack per-layer weights along a leading layer axis; fuse Q/K/V; cast the
    matmul weights to bf16 (biases / LayerNorm params stay f32)."""
    def stack(key, dtype=jnp.float32):
        return jnp.stack([lw[key] for lw in layers], axis=0).astype(dtype)

    wqkv = jnp.stack(
        [jnp.concatenate([lw['wq'], lw['wk'], lw['wv']], axis=1)
         for lw in layers], 0).astype(jnp.bfloat16)
    bqkv = jnp.stack(
        [jnp.concatenate([lw['bq'], lw['bk'], lw['bv']], axis=1)
         for lw in layers], 0)
    return {
        'wqkv': wqkv, 'bqkv': bqkv,
        'wo': stack('wo', jnp.bfloat16), 'bo': stack('bo'),
        'g1': stack('g1'), 'be1': stack('be1'),
        'w1': stack('w1', jnp.bfloat16), 'b1': stack('b1'),
        'w2': stack('w2', jnp.bfloat16), 'b2': stack('b2'),
        'g2': stack('g2'), 'be2': stack('be2'),
    }


def decoder_forward(enc_seq, mask_bool, params, cfg):
    """Mirrors Decoder.forward (eval / non-training path, return_attns=False)."""
    tcfg = cfg['transformer']
    d_model = tcfg['decoder_hidden']
    n_head = tcfg['decoder_head']
    d_k = d_v = d_model // n_head
    k1, k2 = tcfg['conv_kernel_size']
    max_seq_len = cfg['max_seq_len']

    B, L, _ = enc_seq.shape
    if L > max_seq_len:
        # TODO(synk): table rebuilt with a trace-time Python loop (rare branch).
        pos = jnp.asarray(get_sinusoid_encoding_table(L, d_model))
    else:
        max_len = min(L, max_seq_len)
        enc_seq = enc_seq[:, :max_len, :]
        mask_bool = mask_bool[:, :max_len]
        pos = params['position_enc'][:max_len, :]

    # TODO(synk): masks are assumed to be contiguous right-padding masks (as
    # produced by get_mask_from_lengths); lengths are recovered from the mask
    # and the padding mask is rebuilt in-kernel (scalar prefetch).
    lengths = jnp.sum(jnp.logical_not(mask_bool), axis=-1).astype(jnp.int32)

    packed = pack_layer_params(params['layers'])
    out = run_decoder_stack(enc_seq, pos, lengths, packed,
                            n_head=n_head, d_k=d_k, d_v=d_v, k1=k1, k2=k2)
    return out, mask_bool
    # TODO(synk): dropout is identity (eval mode); attention maps not returned.


# ----------------------------------------------------------------------------
# Pure-JAX f32 reference (for verification)
# ----------------------------------------------------------------------------
def decoder_reference(enc_seq, mask_bool, params, cfg):
    tcfg = cfg['transformer']
    d_model = tcfg['decoder_hidden']
    n_head = tcfg['decoder_head']
    d_k = d_v = d_model // n_head
    k1, k2 = tcfg['conv_kernel_size']

    B, L, D = enc_seq.shape
    x = enc_seq + params['position_enc'][None, :L, :]
    pad_q = mask_bool[:, :, None]
    pad_k = mask_bool[:, None, :]
    inv_temp = float(1.0 / np.sqrt(d_k))

    def conv1d(z, w, b, ksz):              # z (B,L,Cin), w (k,Cin,Cout)
        p = (ksz - 1) // 2
        zp = jnp.pad(z, ((0, 0), (p, p), (0, 0)))
        acc = 0.0
        for t in range(ksz):
            acc = acc + jnp.einsum('bli,io->blo', zp[:, t:t + L, :], w[t])
        return acc + b

    for lw in params['layers']:
        q = x @ lw['wq'] + lw['bq']
        k = x @ lw['wk'] + lw['bk']
        v = x @ lw['wv'] + lw['bv']
        q = q.reshape(B, L, n_head, d_k)
        k = k.reshape(B, L, n_head, d_k)
        v = v.reshape(B, L, n_head, d_v)
        scores = jnp.einsum('blhd,bmhd->bhlm', q, k) * inv_temp
        scores = jnp.where(pad_k[:, None, :, :], -1e9, scores)
        attn = jax.nn.softmax(scores, axis=-1)
        o = jnp.einsum('bhlm,bmhd->blhd', attn, v).reshape(B, L, n_head * d_v)
        o = o @ lw['wo'] + lw['bo']
        o = _layer_norm(o + x, lw['g1'], lw['be1'])
        o = jnp.where(pad_q, 0.0, o)

        h1 = jnp.maximum(conv1d(o, lw['w1'], lw['b1'], k1), 0.0)
        ff = conv1d(h1, lw['w2'], lw['b2'], k2)
        o2 = _layer_norm(ff + o, lw['g2'], lw['be2'])
        x = jnp.where(pad_q, 0.0, o2)
    return x, mask_bool


# ----------------------------------------------------------------------------
# Parameter initialization (deterministic, synthetic)
# ----------------------------------------------------------------------------
def init_params(key, cfg):
    tcfg = cfg['transformer']
    d = tcfg['decoder_hidden']
    h = tcfg['decoder_head']
    dk = d // h
    di = tcfg['conv_filter_size']
    k1, k2 = tcfg['conv_kernel_size']
    n_layers = tcfg['decoder_layer']

    pos = jnp.asarray(get_sinusoid_encoding_table(cfg['max_seq_len'] + 1, d))

    layers = []
    for li in range(n_layers):
        lk = jax.random.fold_in(key, li)

        def rnd(i, shape, scale=0.1):
            return (jax.random.normal(jax.random.fold_in(lk, i), shape,
                                      dtype=jnp.float32) * scale)

        lw = {
            'wq': rnd(0, (d, h * dk)), 'bq': rnd(1, (1, h * dk), 0.02),
            'wk': rnd(2, (d, h * dk)), 'bk': rnd(3, (1, h * dk), 0.02),
            'wv': rnd(4, (d, h * dk)), 'bv': rnd(5, (1, h * dk), 0.02),
            'wo': rnd(6, (h * dk, d)), 'bo': rnd(7, (1, d), 0.02),
            'g1': jnp.ones((1, d), jnp.float32),
            'be1': jnp.zeros((1, d), jnp.float32),
            # conv weights stored as (k, C_in, C_out) = torch weight transposed
            'w1': rnd(8, (k1, d, di)), 'b1': rnd(9, (1, di), 0.02),
            'w2': rnd(10, (k2, di, d)), 'b2': rnd(11, (1, d), 0.02),
            'g2': jnp.ones((1, d), jnp.float32),
            'be2': jnp.zeros((1, d), jnp.float32),
        }
        layers.append(lw)
    return {'position_enc': pos, 'layers': layers}


# ----------------------------------------------------------------------------
# Main
# ----------------------------------------------------------------------------
if __name__ == "__main__":
    cfg = {
        'max_seq_len': 32,
        'transformer': {
            'decoder_hidden': 32,
            'decoder_layer': 2,
            'decoder_head': 2,
            'conv_filter_size': 64,
            'conv_kernel_size': [9, 1],
            'decoder_dropout': 0.1,
        },
    }

    B, L, D = 2, 16, cfg['transformer']['decoder_hidden']

    root = jax.random.PRNGKey(0)
    k_x, k_p = jax.random.split(root)
    enc_seq = jax.random.normal(k_x, (B, L, D), dtype=jnp.float32)

    lengths = jnp.array([16, 11], dtype=jnp.int32)
    positions = jnp.arange(L, dtype=jnp.int32)[None, :]
    mask_bool = positions >= lengths[:, None]           # True at padded steps

    params = init_params(k_p, cfg)

    out, out_mask = decoder_forward(enc_seq, mask_bool, params, cfg)
    out = jax.block_until_ready(out)

    ref, _ = decoder_reference(enc_seq, mask_bool, params, cfg)
    ref = jax.block_until_ready(ref)

    # Tolerance relaxed vs exact f32 because (a) matmul weights are cast to
    # bfloat16 (f32 accumulate) and (b) the softmax denominator uses the EUP
    # approximate reciprocal.  Acceptable for inference per perf review.
    np.testing.assert_allclose(np.asarray(out), np.asarray(ref),
                               rtol=3e-2, atol=3e-2)
    assert out.shape == (B, L, D)
    assert out_mask.shape == (B, L)
    print("KERNEL_OK")
</pallas_src>

<mosaic_0001>
module attributes {stable_mosaic.version = 11 : i64} {
  func.func @decoder_stack_kernel(%arg0: i32, %arg1: i32, %arg2: memref<2xi32, #tpu.memory_space<smem>>, %arg3: memref<2x16x32xf32, #tpu.memory_space<vmem>>, %arg4: memref<16x32xf32, #tpu.memory_space<vmem>>, %arg5: memref<1x32x96xbf16, #tpu.memory_space<vmem>>, %arg6: memref<1x1x96xf32, #tpu.memory_space<vmem>>, %arg7: memref<1x32x32xbf16, #tpu.memory_space<vmem>>, %arg8: memref<1x1x32xf32, #tpu.memory_space<vmem>>, %arg9: memref<1x1x32xf32, #tpu.memory_space<vmem>>, %arg10: memref<1x1x32xf32, #tpu.memory_space<vmem>>, %arg11: memref<1x9x32x64xbf16, #tpu.memory_space<vmem>>, %arg12: memref<1x1x64xf32, #tpu.memory_space<vmem>>, %arg13: memref<1x1x64x32xbf16, #tpu.memory_space<vmem>>, %arg14: memref<1x1x32xf32, #tpu.memory_space<vmem>>, %arg15: memref<1x1x32xf32, #tpu.memory_space<vmem>>, %arg16: memref<1x1x32xf32, #tpu.memory_space<vmem>>, %arg17: memref<2x16x32xf32, #tpu.memory_space<vmem>>, %arg18: memref<2x24x32xf32, #tpu.memory_space<vmem>>) attributes {dimension_semantics = [#tpu.dimension_semantics<parallel>, #tpu.dimension_semantics<arbitrary>], iteration_bounds = array<i64: 1, 2>, scalar_prefetch = 1 : i64, scratch_operands = 1 : i64, tpu.core_type = #tpu.core_type<tc>, window_params = [{transform_indices = @transform_0, window_bounds = array<i64: 2, 16, 32>}, {pipeline_mode = #tpu.pipeline_mode<synchronous>, transform_indices = @transform_1, window_bounds = array<i64: 16, 32>}, {transform_indices = @transform_2, window_bounds = array<i64: 1, 32, 96>}, {transform_indices = @transform_3, window_bounds = array<i64: 1, 1, 96>}, {transform_indices = @transform_4, window_bounds = array<i64: 1, 32, 32>}, {transform_indices = @transform_5, window_bounds = array<i64: 1, 1, 32>}, {transform_indices = @transform_6, window_bounds = array<i64: 1, 1, 32>}, {transform_indices = @transform_7, window_bounds = array<i64: 1, 1, 32>}, {transform_indices = @transform_8, window_bounds = array<i64: 1, 9, 32, 64>}, {transform_indices = @transform_9, window_bounds = array<i64: 1, 1, 64>}, {transform_indices = @transform_10, window_bounds = array<i64: 1, 1, 64, 32>}, {transform_indices = @transform_11, window_bounds = array<i64: 1, 1, 32>}, {transform_indices = @transform_12, window_bounds = array<i64: 1, 1, 32>}, {transform_indices = @transform_13, window_bounds = array<i64: 1, 1, 32>}, {transform_indices = @transform_14, window_bounds = array<i64: 2, 16, 32>}]} {
    %c2_i32 = arith.constant 2 : i32
    %0 = arith.muli %arg0, %c2_i32 : i32
    %1 = tpu.iota {dimensions = array<i32: 2>} : vector<2x1x16xi32>
    %2 = tpu.iota {dimensions = array<i32: 0>} : vector<2x1x16xi32>
    %c0_i32 = arith.constant 0 : i32
    %3 = vector.broadcast %c0_i32 : i32 to vector<2x1x16xi32>
    %4 = tpu.iota {dimensions = array<i32: 0>} : vector<32x1xi32>
    %c0_i32_0 = arith.constant 0 : i32
    %5 = vector.broadcast %c0_i32_0 : i32 to vector<32x1xi32>
    %c0_i32_1 = arith.constant 0 : i32
    %6 = arith.addi %0, %c0_i32_1 : i32
    %7 = arith.index_cast %6 : i32 to index
    %8 = memref.load %arg2[%7] : memref<2xi32, #tpu.memory_space<smem>>
    %c0_i32_2 = arith.constant 0 : i32
    %9 = vector.broadcast %c0_i32_2 : i32 to vector<2x1x16xi32>
    %10 = arith.cmpi eq, %2, %9 : vector<2x1x16xi32>
    %11 = vector.broadcast %8 : i32 to vector<2x1x16xi32>
    %12 = arith.select %10, %11, %3 : vector<2x1x16xi1>, vector<2x1x16xi32>
    %c0_i32_3 = arith.constant 0 : i32
    %13 = vector.broadcast %c0_i32_3 : i32 to vector<32x1xi32>
    %14 = arith.cmpi sge, %4, %13 : vector<32x1xi32>
    %c16_i32 = arith.constant 16 : i32
    %15 = vector.broadcast %c16_i32 : i32 to vector<32x1xi32>
    %16 = arith.cmpi slt, %4, %15 : vector<32x1xi32>
    %17 = arith.andi %14, %16 : vector<32x1xi1>
    %c0_i32_4 = arith.constant 0 : i32
    %18 = arith.addi %8, %c0_i32_4 : i32
    %19 = vector.broadcast %18 : i32 to vector<32x1xi32>
    %20 = arith.select %17, %19, %5 : vector<32x1xi1>, vector<32x1xi32>
    %c1_i32 = arith.constant 1 : i32
    %21 = arith.addi %0, %c1_i32 : i32
    %22 = arith.index_cast %21 : i32 to index
    %23 = memref.load %arg2[%22] : memref<2xi32, #tpu.memory_space<smem>>
    %c1_i32_5 = arith.constant 1 : i32
    %24 = vector.broadcast %c1_i32_5 : i32 to vector<2x1x16xi32>
    %25 = arith.cmpi eq, %2, %24 : vector<2x1x16xi32>
    %26 = vector.broadcast %23 : i32 to vector<2x1x16xi32>
    %27 = arith.select %25, %26, %12 : vector<2x1x16xi1>, vector<2x1x16xi32>
    %c16_i32_6 = arith.constant 16 : i32
    %28 = vector.broadcast %c16_i32_6 : i32 to vector<32x1xi32>
    %29 = arith.cmpi sge, %4, %28 : vector<32x1xi32>
    %c32_i32 = arith.constant 32 : i32
    %30 = vector.broadcast %c32_i32 : i32 to vector<32x1xi32>
    %31 = arith.cmpi slt, %4, %30 : vector<32x1xi32>
    %32 = arith.andi %29, %31 : vector<32x1xi1>
    %c16_i32_7 = arith.constant 16 : i32
    %33 = arith.addi %23, %c16_i32_7 : i32
    %34 = vector.broadcast %33 : i32 to vector<32x1xi32>
    %35 = arith.select %32, %34, %20 : vector<32x1xi1>, vector<32x1xi32>
    %36 = arith.cmpi sge, %1, %27 : vector<2x1x16xi32>
    %37 = arith.cmpi sge, %4, %35 : vector<32x1xi32>
    %c0_i32_8 = arith.constant 0 : i32
    %38 = arith.cmpi eq, %arg1, %c0_i32_8 : i32
    %39 = arith.extui %38 : i1 to i32
    %c0_i32_9 = arith.constant 0 : i32
    %40 = arith.cmpi ne, %39, %c0_i32_9 : i32
    scf.if %40 {
      %c0_146 = arith.constant 0 : index
      %c0_147 = arith.constant 0 : index
      %c0_148 = arith.constant 0 : index
      %256 = vector.load %arg3[%c0_146, %c0_147, %c0_148] : memref<2x16x32xf32, #tpu.memory_space<vmem>>, vector<2x16x32xf32>
      %c0_149 = arith.constant 0 : index
      %c0_150 = arith.constant 0 : index
      %257 = vector.load %arg4[%c0_149, %c0_150] : memref<16x32xf32, #tpu.memory_space<vmem>>, vector<16x32xf32>
      %258 = vector.shape_cast %257 : vector<16x32xf32> to vector<1x16x32xf32>
      %259 = vector.broadcast %258 : vector<1x16x32xf32> to vector<2x16x32xf32>
      %260 = arith.addf %256, %259 : vector<2x16x32xf32>
      %c0_151 = arith.constant 0 : index
      %c0_152 = arith.constant 0 : index
      %c0_153 = arith.constant 0 : index
      %261 = vector.load %arg17[%c0_151, %c0_152, %c0_153] : memref<2x16x32xf32, #tpu.memory_space<vmem>>, vector<2x16x32xf32>
      tpu.vector_store %arg17[%c0_151, %c0_152, %c0_153], %260 {strides = array<i32>} : memref<2x16x32xf32, #tpu.memory_space<vmem>>, vector<2x16x32xf32>,
      %cst_154 = arith.constant 0.000000e+00 : f32
      %262 = vector.broadcast %cst_154 : f32 to vector<2x4x32xf32>
      %c0_155 = arith.constant 0 : index
      %c0_156 = arith.constant 0 : index
      %c0_157 = arith.constant 0 : index
      %263 = vector.load %arg18[%c0_155, %c0_156, %c0_157] : memref<2x24x32xf32, #tpu.memory_space<vmem>>, vector<2x4x32xf32>
      tpu.vector_store %arg18[%c0_155, %c0_156, %c0_157], %262 {strides = array<i32>} : memref<2x24x32xf32, #tpu.memory_space<vmem>>, vector<2x4x32xf32>,
      %cst_158 = arith.constant 0.000000e+00 : f32
      %264 = vector.broadcast %cst_158 : f32 to vector<2x4x32xf32>
      %c0_159 = arith.constant 0 : index
      %c20 = arith.constant 20 : index
      %c0_160 = arith.constant 0 : index
      %265 = vector.load %arg18[%c0_159, %c20, %c0_160] : memref<2x24x32xf32, #tpu.memory_space<vmem>>, vector<2x4x32xf32>
      tpu.vector_store %arg18[%c0_159, %c20, %c0_160], %264 {strides = array<i32>} : memref<2x24x32xf32, #tpu.memory_space<vmem>>, vector<2x4x32xf32>,
    } else {
    }
    %c0 = arith.constant 0 : index
    %c0_10 = arith.constant 0 : index
    %c0_11 = arith.constant 0 : index
    %41 = vector.load %arg17[%c0, %c0_10, %c0_11] : memref<2x16x32xf32, #tpu.memory_space<vmem>>, vector<2x16x32xf32>
    %42 = vector.shape_cast %41 : vector<2x16x32xf32> to vector<32x32xf32>
    %43 = arith.truncf %42 : vector<32x32xf32> to vector<32x32xbf16>
    %c0_12 = arith.constant 0 : index
    %c0_13 = arith.constant 0 : index
    %c0_14 = arith.constant 0 : index
    %44 = vector.load %arg5[%c0_12, %c0_13, %c0_14] : memref<1x32x96xbf16, #tpu.memory_space<vmem>>, vector<1x32x96xbf16>
    %45 = vector.shape_cast %44 : vector<1x32x96xbf16> to vector<32x96xbf16>
    %cst = arith.constant dense<0.000000e+00> : vector<32x96xf32>
    %46 = tpu.matmul %43, %45, %cst {dimension_numbers = #tpu.dot_dimension_numbers<[1], [0], [0], [1], [0, 0, 1, 1], [], []>} : vector<32x32xbf16>, vector<32x96xbf16>, vector<32x96xf32> -> vector<32x96xf32>
    %c0_15 = arith.constant 0 : index
    %c0_16 = arith.constant 0 : index
    %c0_17 = arith.constant 0 : index
    %47 = vector.load %arg6[%c0_15, %c0_16, %c0_17] : memref<1x1x96xf32, #tpu.memory_space<vmem>>, vector<1x1x96xf32>
    %48 = vector.shape_cast %47 : vector<1x1x96xf32> to vector<1x96xf32>
    %49 = vector.broadcast %48 : vector<1x96xf32> to vector<32x96xf32>
    %50 = arith.addf %46, %49 : vector<32x96xf32>
    %51 = vector.extract_strided_slice %50 {offsets = [0, 0], sizes = [32, 16], strides = [1, 1]} : vector<32x96xf32> to vector<32x16xf32>
    %52 = vector.shape_cast %51 : vector<32x16xf32> to vector<2x16x16xf32>
    %53 = vector.extract_strided_slice %50 {offsets = [0, 32], sizes = [32, 16], strides = [1, 1]} : vector<32x96xf32> to vector<32x16xf32>
    %54 = vector.shape_cast %53 : vector<32x16xf32> to vector<2x16x16xf32>
    %55 = vector.extract_strided_slice %50 {offsets = [0, 64], sizes = [32, 16], strides = [1, 1]} : vector<32x96xf32> to vector<32x16xf32>
    %56 = vector.shape_cast %55 : vector<32x16xf32> to vector<2x16x16xf32>
    "tpu.trace_start"() <{level = 10 : i32, message = "bqd,bkd->bqk"}> : () -> ()
    %cst_18 = arith.constant dense<0.000000e+00> : vector<2x16x16xf32>
    %57 = tpu.matmul %52, %54, %cst_18 {dimension_numbers = #tpu.dot_dimension_numbers<[2], [2], [1], [1], [0, 0, 0, 1, 1, 1], [0], [0]>} : vector<2x16x16xf32>, vector<2x16x16xf32>, vector<2x16x16xf32> -> vector<2x16x16xf32>
    "tpu.trace_stop"() : () -> ()
    %cst_19 = arith.constant 2.500000e-01 : f32
    %58 = vector.broadcast %cst_19 : f32 to vector<2x16x16xf32>
    %59 = arith.mulf %57, %58 : vector<2x16x16xf32>
    %cst_20 = arith.constant -1.000000e+09 : f32
    %60 = vector.shape_cast %36 : vector<2x1x16xi1> to vector<2x1x16xi1>
    %61 = vector.broadcast %60 : vector<2x1x16xi1> to vector<2x16x16xi1>
    %62 = vector.broadcast %cst_20 : f32 to vector<2x16x16xf32>
    %63 = arith.select %61, %62, %59 : vector<2x16x16xi1>, vector<2x16x16xf32>
    %cst_21 = arith.constant dense<0xFF800000> : vector<2x16xf32>
    %64 = vector.multi_reduction <maximumf>, %63, %cst_21 [2] : vector<2x16x16xf32> to vector<2x16xf32>
    %65 = vector.shape_cast %64 : vector<2x16xf32> to vector<2x16x1xf32>
    %66 = vector.broadcast %65 : vector<2x16x1xf32> to vector<2x16x16xf32>
    %67 = arith.subf %63, %66 : vector<2x16x16xf32>
    %68 = math.exp %67 : vector<2x16x16xf32>
    %cst_22 = arith.constant dense<0.000000e+00> : vector<2x16xf32>
    %69 = vector.multi_reduction <add>, %68, %cst_22 [2] : vector<2x16x16xf32> to vector<2x16xf32>
    %70 = vector.shape_cast %69 : vector<2x16xf32> to vector<2x16x1xf32>
    %71 = tpu.reciprocal %70 {approx = true} : vector<2x16x1xf32> -> vector<2x16x1xf32>
    %72 = vector.broadcast %71 : vector<2x16x1xf32> to vector<2x16x16xf32>
    %73 = arith.mulf %68, %72 : vector<2x16x16xf32>
    "tpu.trace_start"() <{level = 10 : i32, message = "bqk,bkd->bqd"}> : () -> ()
    %cst_23 = arith.constant dense<0.000000e+00> : vector<2x16x16xf32>
    %74 = tpu.matmul %73, %56, %cst_23 {dimension_numbers = #tpu.dot_dimension_numbers<[2], [1], [1], [2], [0, 0, 0, 1, 1, 2], [0], [0]>} : vector<2x16x16xf32>, vector<2x16x16xf32>, vector<2x16x16xf32> -> vector<2x16x16xf32>
    "tpu.trace_stop"() : () -> ()
    %75 = vector.shape_cast %74 : vector<2x16x16xf32> to vector<32x16xf32>
    %76 = arith.truncf %75 : vector<32x16xf32> to vector<32x16xbf16>
    %c0_24 = arith.constant 0 : index
    %c0_25 = arith.constant 0 : index
    %c0_26 = arith.constant 0 : index
    %77 = vector.load %arg7[%c0_24, %c0_25, %c0_26] : memref<1x32x32xbf16, #tpu.memory_space<vmem>>, vector<1x16x32xbf16>
    %78 = vector.shape_cast %77 : vector<1x16x32xbf16> to vector<16x32xbf16>
    %cst_27 = arith.constant dense<0.000000e+00> : vector<32x32xf32>
    %79 = tpu.matmul %76, %78, %cst_27 {dimension_numbers = #tpu.dot_dimension_numbers<[1], [0], [0], [1], [0, 0, 1, 1], [], []>} : vector<32x16xbf16>, vector<16x32xbf16>, vector<32x32xf32> -> vector<32x32xf32>
    %80 = vector.extract_strided_slice %50 {offsets = [0, 16], sizes = [32, 16], strides = [1, 1]} : vector<32x96xf32> to vector<32x16xf32>
    %81 = vector.shape_cast %80 : vector<32x16xf32> to vector<2x16x16xf32>
    %82 = vector.extract_strided_slice %50 {offsets = [0, 48], sizes = [32, 16], strides = [1, 1]} : vector<32x96xf32> to vector<32x16xf32>
    %83 = vector.shape_cast %82 : vector<32x16xf32> to vector<2x16x16xf32>
    %84 = vector.extract_strided_slice %50 {offsets = [0, 80], sizes = [32, 16], strides = [1, 1]} : vector<32x96xf32> to vector<32x16xf32>
    %85 = vector.shape_cast %84 : vector<32x16xf32> to vector<2x16x16xf32>
    "tpu.trace_start"() <{level = 10 : i32, message = "bqd,bkd->bqk"}> : () -> ()
    %cst_28 = arith.constant dense<0.000000e+00> : vector<2x16x16xf32>
    %86 = tpu.matmul %81, %83, %cst_28 {dimension_numbers = #tpu.dot_dimension_numbers<[2], [2], [1], [1], [0, 0, 0, 1, 1, 1], [0], [0]>} : vector<2x16x16xf32>, vector<2x16x16xf32>, vector<2x16x16xf32> -> vector<2x16x16xf32>
    "tpu.trace_stop"() : () -> ()
    %cst_29 = arith.constant 2.500000e-01 : f32
    %87 = vector.broadcast %cst_29 : f32 to vector<2x16x16xf32>
    %88 = arith.mulf %86, %87 : vector<2x16x16xf32>
    %cst_30 = arith.constant -1.000000e+09 : f32
    %89 = vector.shape_cast %36 : vector<2x1x16xi1> to vector<2x1x16xi1>
    %90 = vector.broadcast %89 : vector<2x1x16xi1> to vector<2x16x16xi1>
    %91 = vector.broadcast %cst_30 : f32 to vector<2x16x16xf32>
    %92 = arith.select %90, %91, %88 : vector<2x16x16xi1>, vector<2x16x16xf32>
    %cst_31 = arith.constant dense<0xFF800000> : vector<2x16xf32>
    %93 = vector.multi_reduction <maximumf>, %92, %cst_31 [2] : vector<2x16x16xf32> to vector<2x16xf32>
    %94 = vector.shape_cast %93 : vector<2x16xf32> to vector<2x16x1xf32>
    %95 = vector.broadcast %94 : vector<2x16x1xf32> to vector<2x16x16xf32>
    %96 = arith.subf %92, %95 : vector<2x16x16xf32>
    %97 = math.exp %96 : vector<2x16x16xf32>
    %cst_32 = arith.constant dense<0.000000e+00> : vector<2x16xf32>
    %98 = vector.multi_reduction <add>, %97, %cst_32 [2] : vector<2x16x16xf32> to vector<2x16xf32>
    %99 = vector.shape_cast %98 : vector<2x16xf32> to vector<2x16x1xf32>
    %100 = tpu.reciprocal %99 {approx = true} : vector<2x16x1xf32> -> vector<2x16x1xf32>
    %101 = vector.broadcast %100 : vector<2x16x1xf32> to vector<2x16x16xf32>
    %102 = arith.mulf %97, %101 : vector<2x16x16xf32>
    "tpu.trace_start"() <{level = 10 : i32, message = "bqk,bkd->bqd"}> : () -> ()
    %cst_33 = arith.constant dense<0.000000e+00> : vector<2x16x16xf32>
    %103 = tpu.matmul %102, %85, %cst_33 {dimension_numbers = #tpu.dot_dimension_numbers<[2], [1], [1], [2], [0, 0, 0, 1, 1, 2], [0], [0]>} : vector<2x16x16xf32>, vector<2x16x16xf32>, vector<2x16x16xf32> -> vector<2x16x16xf32>
    "tpu.trace_stop"() : () -> ()
    %104 = vector.shape_cast %103 : vector<2x16x16xf32> to vector<32x16xf32>
    %105 = arith.truncf %104 : vector<32x16xf32> to vector<32x16xbf16>
    %c0_34 = arith.constant 0 : index
    %c16 = arith.constant 16 : index
    %c0_35 = arith.constant 0 : index
    %106 = vector.load %arg7[%c0_34, %c16, %c0_35] : memref<1x32x32xbf16, #tpu.memory_space<vmem>>, vector<1x16x32xbf16>
    %107 = vector.shape_cast %106 : vector<1x16x32xbf16> to vector<16x32xbf16>
    %cst_36 = arith.constant dense<0.000000e+00> : vector<32x32xf32>
    %108 = tpu.matmul %105, %107, %cst_36 {dimension_numbers = #tpu.dot_dimension_numbers<[1], [0], [0], [1], [0, 0, 1, 1], [], []>} : vector<32x16xbf16>, vector<16x32xbf16>, vector<32x32xf32> -> vector<32x32xf32>
    %109 = arith.addf %79, %108 : vector<32x32xf32>
    %c0_37 = arith.constant 0 : index
    %c0_38 = arith.constant 0 : index
    %c0_39 = arith.constant 0 : index
    %110 = vector.load %arg8[%c0_37, %c0_38, %c0_39] : memref<1x1x32xf32, #tpu.memory_space<vmem>>, vector<1x1x32xf32>
    %111 = vector.shape_cast %110 : vector<1x1x32xf32> to vector<1x32xf32>
    %112 = vector.broadcast %111 : vector<1x32xf32> to vector<32x32xf32>
    %113 = arith.addf %109, %112 : vector<32x32xf32>
    %114 = arith.addf %113, %42 : vector<32x32xf32>
    %c0_40 = arith.constant 0 : index
    %c0_41 = arith.constant 0 : index
    %c0_42 = arith.constant 0 : index
    %115 = vector.load %arg9[%c0_40, %c0_41, %c0_42] : memref<1x1x32xf32, #tpu.memory_space<vmem>>, vector<1x1x32xf32>
    %116 = vector.shape_cast %115 : vector<1x1x32xf32> to vector<1x32xf32>
    %c0_43 = arith.constant 0 : index
    %c0_44 = arith.constant 0 : index
    %c0_45 = arith.constant 0 : index
    %117 = vector.load %arg10[%c0_43, %c0_44, %c0_45] : memref<1x1x32xf32, #tpu.memory_space<vmem>>, vector<1x1x32xf32>
    %118 = vector.shape_cast %117 : vector<1x1x32xf32> to vector<1x32xf32>
    %cst_46 = arith.constant dense<0.000000e+00> : vector<32xf32>
    %119 = vector.multi_reduction <add>, %114, %cst_46 [1] : vector<32x32xf32> to vector<32xf32>
    %120 = vector.shape_cast %119 : vector<32xf32> to vector<32x1xf32>
    %cst_47 = arith.constant 3.200000e+01 : f32
    %121 = vector.broadcast %cst_47 : f32 to vector<32x1xf32>
    %122 = arith.divf %120, %121 : vector<32x1xf32>
    %123 = vector.broadcast %122 : vector<32x1xf32> to vector<32x32xf32>
    %124 = arith.subf %114, %123 : vector<32x32xf32>
    %125 = arith.mulf %124, %124 : vector<32x32xf32>
    %cst_48 = arith.constant dense<0.000000e+00> : vector<32xf32>
    %126 = vector.multi_reduction <add>, %125, %cst_48 [1] : vector<32x32xf32> to vector<32xf32>
    %127 = vector.shape_cast %126 : vector<32xf32> to vector<32x1xf32>
    %cst_49 = arith.constant 3.200000e+01 : f32
    %128 = vector.broadcast %cst_49 : f32 to vector<32x1xf32>
    %129 = arith.divf %127, %128 : vector<32x1xf32>
    %130 = vector.broadcast %122 : vector<32x1xf32> to vector<32x32xf32>
    %131 = arith.subf %114, %130 : vector<32x32xf32>
    %cst_50 = arith.constant 9.99999974E-6 : f32
    %132 = vector.broadcast %cst_50 : f32 to vector<32x1xf32>
    %133 = arith.addf %129, %132 : vector<32x1xf32>
    %134 = math.rsqrt %133 : vector<32x1xf32>
    %135 = vector.broadcast %134 : vector<32x1xf32> to vector<32x32xf32>
    %136 = arith.mulf %131, %135 : vector<32x32xf32>
    %137 = vector.broadcast %116 : vector<1x32xf32> to vector<32x32xf32>
    %138 = arith.mulf %136, %137 : vector<32x32xf32>
    %139 = vector.broadcast %118 : vector<1x32xf32> to vector<32x32xf32>
    %140 = arith.addf %138, %139 : vector<32x32xf32>
    %cst_51 = arith.constant 0.000000e+00 : f32
    %141 = vector.shape_cast %37 : vector<32x1xi1> to vector<32x1xi1>
    %142 = vector.broadcast %141 : vector<32x1xi1> to vector<32x32xi1>
    %143 = vector.broadcast %cst_51 : f32 to vector<32x32xf32>
    %144 = arith.select %142, %143, %140 : vector<32x32xi1>, vector<32x32xf32>
    %145 = vector.shape_cast %144 : vector<32x32xf32> to vector<2x16x32xf32>
    %c0_52 = arith.constant 0 : index
    %c4 = arith.constant 4 : index
    %c0_53 = arith.constant 0 : index
    %146 = vector.load %arg18[%c0_52, %c4, %c0_53] : memref<2x24x32xf32, #tpu.memory_space<vmem>>, vector<2x16x32xf32>
    tpu.vector_store %arg18[%c0_52, %c4, %c0_53], %145 {strides = array<i32>} : memref<2x24x32xf32, #tpu.memory_space<vmem>>, vector<2x16x32xf32>,
    %c0_54 = arith.constant 0 : index
    %c0_55 = arith.constant 0 : index
    %c0_56 = arith.constant 0 : index
    %147 = vector.load %arg18[%c0_54, %c0_55, %c0_56] : memref<2x24x32xf32, #tpu.memory_space<vmem>>, vector<2x16x32xf32>
    %148 = vector.shape_cast %147 : vector<2x16x32xf32> to vector<32x32xf32>
    %149 = arith.truncf %148 : vector<32x32xf32> to vector<32x32xbf16>
    %c0_57 = arith.constant 0 : index
    %c0_58 = arith.constant 0 : index
    %c0_59 = arith.constant 0 : index
    %c0_60 = arith.constant 0 : index
    %150 = vector.load %arg11[%c0_57, %c0_58, %c0_59, %c0_60] : memref<1x9x32x64xbf16, #tpu.memory_space<vmem>>, vector<1x1x32x64xbf16>
    %151 = vector.shape_cast %150 : vector<1x1x32x64xbf16> to vector<32x64xbf16>
    %cst_61 = arith.constant dense<0.000000e+00> : vector<32x64xf32>
    %152 = tpu.matmul %149, %151, %cst_61 {dimension_numbers = #tpu.dot_dimension_numbers<[1], [0], [0], [1], [0, 0, 1, 1], [], []>} : vector<32x32xbf16>, vector<32x64xbf16>, vector<32x64xf32> -> vector<32x64xf32>
    %c0_62 = arith.constant 0 : index
    %c1 = arith.constant 1 : index
    %c0_63 = arith.constant 0 : index
    %153 = vector.load %arg18[%c0_62, %c1, %c0_63] : memref<2x24x32xf32, #tpu.memory_space<vmem>>, vector<2x16x32xf32>
    %154 = vector.shape_cast %153 : vector<2x16x32xf32> to vector<32x32xf32>
    %155 = arith.truncf %154 : vector<32x32xf32> to vector<32x32xbf16>
    %c0_64 = arith.constant 0 : index
    %c1_65 = arith.constant 1 : index
    %c0_66 = arith.constant 0 : index
    %c0_67 = arith.constant 0 : index
    %156 = vector.load %arg11[%c0_64, %c1_65, %c0_66, %c0_67] : memref<1x9x32x64xbf16, #tpu.memory_space<vmem>>, vector<1x1x32x64xbf16>
    %157 = vector.shape_cast %156 : vector<1x1x32x64xbf16> to vector<32x64xbf16>
    %cst_68 = arith.constant dense<0.000000e+00> : vector<32x64xf32>
    %158 = tpu.matmul %155, %157, %cst_68 {dimension_numbers = #tpu.dot_dimension_numbers<[1], [0], [0], [1], [0, 0, 1, 1], [], []>} : vector<32x32xbf16>, vector<32x64xbf16>, vector<32x64xf32> -> vector<32x64xf32>
    %159 = arith.addf %152, %158 : vector<32x64xf32>
    %c0_69 = arith.constant 0 : index
    %c2 = arith.constant 2 : index
    %c0_70 = arith.constant 0 : index
    %160 = vector.load %arg18[%c0_69, %c2, %c0_70] : memref<2x24x32xf32, #tpu.memory_space<vmem>>, vector<2x16x32xf32>
    %161 = vector.shape_cast %160 : vector<2x16x32xf32> to vector<32x32xf32>
    %162 = arith.truncf %161 : vector<32x32xf32> to vector<32x32xbf16>
    %c0_71 = arith.constant 0 : index
    %c2_72 = arith.constant 2 : index
    %c0_73 = arith.constant 0 : index
    %c0_74 = arith.constant 0 : index
    %163 = vector.load %arg11[%c0_71, %c2_72, %c0_73, %c0_74] : memref<1x9x32x64xbf16, #tpu.memory_space<vmem>>, vector<1x1x32x64xbf16>
    %164 = vector.shape_cast %163 : vector<1x1x32x64xbf16> to vector<32x64xbf16>
    %cst_75 = arith.constant dense<0.000000e+00> : vector<32x64xf32>
    %165 = tpu.matmul %162, %164, %cst_75 {dimension_numbers = #tpu.dot_dimension_numbers<[1], [0], [0], [1], [0, 0, 1, 1], [], []>} : vector<32x32xbf16>, vector<32x64xbf16>, vector<32x64xf32> -> vector<32x64xf32>
    %166 = arith.addf %159, %165 : vector<32x64xf32>
    %c0_76 = arith.constant 0 : index
    %c3 = arith.constant 3 : index
    %c0_77 = arith.constant 0 : index
    %167 = vector.load %arg18[%c0_76, %c3, %c0_77] : memref<2x24x32xf32, #tpu.memory_space<vmem>>, vector<2x16x32xf32>
    %168 = vector.shape_cast %167 : vector<2x16x32xf32> to vector<32x32xf32>
    %169 = arith.truncf %168 : vector<32x32xf32> to vector<32x32xbf16>
    %c0_78 = arith.constant 0 : index
    %c3_79 = arith.constant 3 : index
    %c0_80 = arith.constant 0 : index
    %c0_81 = arith.constant 0 : index
    %170 = vector.load %arg11[%c0_78, %c3_79, %c0_80, %c0_81] : memref<1x9x32x64xbf16, #tpu.memory_space<vmem>>, vector<1x1x32x64xbf16>
    %171 = vector.shape_cast %170 : vector<1x1x32x64xbf16> to vector<32x64xbf16>
    %cst_82 = arith.constant dense<0.000000e+00> : vector<32x64xf32>
    %172 = tpu.matmul %169, %171, %cst_82 {dimension_numbers = #tpu.dot_dimension_numbers<[1], [0], [0], [1], [0, 0, 1, 1], [], []>} : vector<32x32xbf16>, vector<32x64xbf16>, vector<32x64xf32> -> vector<32x64xf32>
    %173 = arith.addf %166, %172 : vector<32x64xf32>
    %c0_83 = arith.constant 0 : index
    %c4_84 = arith.constant 4 : index
    %c0_85 = arith.constant 0 : index
    %174 = vector.load %arg18[%c0_83, %c4_84, %c0_85] : memref<2x24x32xf32, #tpu.memory_space<vmem>>, vector<2x16x32xf32>
    %175 = vector.shape_cast %174 : vector<2x16x32xf32> to vector<32x32xf32>
    %176 = arith.truncf %175 : vector<32x32xf32> to vector<32x32xbf16>
    %c0_86 = arith.constant 0 : index
    %c4_87 = arith.constant 4 : index
    %c0_88 = arith.constant 0 : index
    %c0_89 = arith.constant 0 : index
    %177 = vector.load %arg11[%c0_86, %c4_87, %c0_88, %c0_89] : memref<1x9x32x64xbf16, #tpu.memory_space<vmem>>, vector<1x1x32x64xbf16>
    %178 = vector.shape_cast %177 : vector<1x1x32x64xbf16> to vector<32x64xbf16>
    %cst_90 = arith.constant dense<0.000000e+00> : vector<32x64xf32>
    %179 = tpu.matmul %176, %178, %cst_90 {dimension_numbers = #tpu.dot_dimension_numbers<[1], [0], [0], [1], [0, 0, 1, 1], [], []>} : vector<32x32xbf16>, vector<32x64xbf16>, vector<32x64xf32> -> vector<32x64xf32>
    %180 = arith.addf %173, %179 : vector<32x64xf32>
    %c0_91 = arith.constant 0 : index
    %c5 = arith.constant 5 : index
    %c0_92 = arith.constant 0 : index
    %181 = vector.load %arg18[%c0_91, %c5, %c0_92] : memref<2x24x32xf32, #tpu.memory_space<vmem>>, vector<2x16x32xf32>
    %182 = vector.shape_cast %181 : vector<2x16x32xf32> to vector<32x32xf32>
    %183 = arith.truncf %182 : vector<32x32xf32> to vector<32x32xbf16>
    %c0_93 = arith.constant 0 : index
    %c5_94 = arith.constant 5 : index
    %c0_95 = arith.constant 0 : index
    %c0_96 = arith.constant 0 : index
    %184 = vector.load %arg11[%c0_93, %c5_94, %c0_95, %c0_96] : memref<1x9x32x64xbf16, #tpu.memory_space<vmem>>, vector<1x1x32x64xbf16>
    %185 = vector.shape_cast %184 : vector<1x1x32x64xbf16> to vector<32x64xbf16>
    %cst_97 = arith.constant dense<0.000000e+00> : vector<32x64xf32>
    %186 = tpu.matmul %183, %185, %cst_97 {dimension_numbers = #tpu.dot_dimension_numbers<[1], [0], [0], [1], [0, 0, 1, 1], [], []>} : vector<32x32xbf16>, vector<32x64xbf16>, vector<32x64xf32> -> vector<32x64xf32>
    %187 = arith.addf %180, %186 : vector<32x64xf32>
    %c0_98 = arith.constant 0 : index
    %c6 = arith.constant 6 : index
    %c0_99 = arith.constant 0 : index
    %188 = vector.load %arg18[%c0_98, %c6, %c0_99] : memref<2x24x32xf32, #tpu.memory_space<vmem>>, vector<2x16x32xf32>
    %189 = vector.shape_cast %188 : vector<2x16x32xf32> to vector<32x32xf32>
    %190 = arith.truncf %189 : vector<32x32xf32> to vector<32x32xbf16>
    %c0_100 = arith.constant 0 : index
    %c6_101 = arith.constant 6 : index
    %c0_102 = arith.constant 0 : index
    %c0_103 = arith.constant 0 : index
    %191 = vector.load %arg11[%c0_100, %c6_101, %c0_102, %c0_103] : memref<1x9x32x64xbf16, #tpu.memory_space<vmem>>, vector<1x1x32x64xbf16>
    %192 = vector.shape_cast %191 : vector<1x1x32x64xbf16> to vector<32x64xbf16>
    %cst_104 = arith.constant dense<0.000000e+00> : vector<32x64xf32>
    %193 = tpu.matmul %190, %192, %cst_104 {dimension_numbers = #tpu.dot_dimension_numbers<[1], [0], [0], [1], [0, 0, 1, 1], [], []>} : vector<32x32xbf16>, vector<32x64xbf16>, vector<32x64xf32> -> vector<32x64xf32>
    %194 = arith.addf %187, %193 : vector<32x64xf32>
    %c0_105 = arith.constant 0 : index
    %c7 = arith.constant 7 : index
    %c0_106 = arith.constant 0 : index
    %195 = vector.load %arg18[%c0_105, %c7, %c0_106] : memref<2x24x32xf32, #tpu.memory_space<vmem>>, vector<2x16x32xf32>
    %196 = vector.shape_cast %195 : vector<2x16x32xf32> to vector<32x32xf32>
    %197 = arith.truncf %196 : vector<32x32xf32> to vector<32x32xbf16>
    %c0_107 = arith.constant 0 : index
    %c7_108 = arith.constant 7 : index
    %c0_109 = arith.constant 0 : index
    %c0_110 = arith.constant 0 : index
    %198 = vector.load %arg11[%c0_107, %c7_108, %c0_109, %c0_110] : memref<1x9x32x64xbf16, #tpu.memory_space<vmem>>, vector<1x1x32x64xbf16>
    %199 = vector.shape_cast %198 : vector<1x1x32x64xbf16> to vector<32x64xbf16>
    %cst_111 = arith.constant dense<0.000000e+00> : vector<32x64xf32>
    %200 = tpu.matmul %197, %199, %cst_111 {dimension_numbers = #tpu.dot_dimension_numbers<[1], [0], [0], [1], [0, 0, 1, 1], [], []>} : vector<32x32xbf16>, vector<32x64xbf16>, vector<32x64xf32> -> vector<32x64xf32>
    %201 = arith.addf %194, %200 : vector<32x64xf32>
    %c0_112 = arith.constant 0 : index
    %c8 = arith.constant 8 : index
    %c0_113 = arith.constant 0 : index
    %202 = vector.load %arg18[%c0_112, %c8, %c0_113] : memref<2x24x32xf32, #tpu.memory_space<vmem>>, vector<2x16x32xf32>
    %203 = vector.shape_cast %202 : vector<2x16x32xf32> to vector<32x32xf32>
    %204 = arith.truncf %203 : vector<32x32xf32> to vector<32x32xbf16>
    %c0_114 = arith.constant 0 : index
    %c8_115 = arith.constant 8 : index
    %c0_116 = arith.constant 0 : index
    %c0_117 = arith.constant 0 : index
    %205 = vector.load %arg11[%c0_114, %c8_115, %c0_116, %c0_117] : memref<1x9x32x64xbf16, #tpu.memory_space<vmem>>, vector<1x1x32x64xbf16>
    %206 = vector.shape_cast %205 : vector<1x1x32x64xbf16> to vector<32x64xbf16>
    %cst_118 = arith.constant dense<0.000000e+00> : vector<32x64xf32>
    %207 = tpu.matmul %204, %206, %cst_118 {dimension_numbers = #tpu.dot_dimension_numbers<[1], [0], [0], [1], [0, 0, 1, 1], [], []>} : vector<32x32xbf16>, vector<32x64xbf16>, vector<32x64xf32> -> vector<32x64xf32>
    %208 = arith.addf %201, %207 : vector<32x64xf32>
    %c0_119 = arith.constant 0 : index
    %c0_120 = arith.constant 0 : index
    %c0_121 = arith.constant 0 : index
    %209 = vector.load %arg12[%c0_119, %c0_120, %c0_121] : memref<1x1x64xf32, #tpu.memory_space<vmem>>, vector<1x1x64xf32>
    %210 = vector.shape_cast %209 : vector<1x1x64xf32> to vector<1x64xf32>
    %211 = vector.broadcast %210 : vector<1x64xf32> to vector<32x64xf32>
    %212 = arith.addf %208, %211 : vector<32x64xf32>
    %cst_122 = arith.constant 0.000000e+00 : f32
    %213 = vector.broadcast %cst_122 : f32 to vector<32x64xf32>
    %214 = arith.maximumf %212, %213 : vector<32x64xf32>
    %215 = arith.truncf %214 : vector<32x64xf32> to vector<32x64xbf16>
    %c0_123 = arith.constant 0 : index
    %c0_124 = arith.constant 0 : index
    %c0_125 = arith.constant 0 : index
    %c0_126 = arith.constant 0 : index
    %216 = vector.load %arg13[%c0_123, %c0_124, %c0_125, %c0_126] : memref<1x1x64x32xbf16, #tpu.memory_space<vmem>>, vector<1x1x64x32xbf16>
    %217 = vector.shape_cast %216 : vector<1x1x64x32xbf16> to vector<64x32xbf16>
    %cst_127 = arith.constant dense<0.000000e+00> : vector<32x32xf32>
    %218 = tpu.matmul %215, %217, %cst_127 {dimension_numbers = #tpu.dot_dimension_numbers<[1], [0], [0], [1], [0, 0, 1, 1], [], []>} : vector<32x64xbf16>, vector<64x32xbf16>, vector<32x32xf32> -> vector<32x32xf32>
    %c0_128 = arith.constant 0 : index
    %c0_129 = arith.constant 0 : index
    %c0_130 = arith.constant 0 : index
    %219 = vector.load %arg14[%c0_128, %c0_129, %c0_130] : memref<1x1x32xf32, #tpu.memory_space<vmem>>, vector<1x1x32xf32>
    %220 = vector.shape_cast %219 : vector<1x1x32xf32> to vector<1x32xf32>
    %221 = vector.broadcast %220 : vector<1x32xf32> to vector<32x32xf32>
    %222 = arith.addf %218, %221 : vector<32x32xf32>
    %223 = arith.addf %222, %144 : vector<32x32xf32>
    %c0_131 = arith.constant 0 : index
    %c0_132 = arith.constant 0 : index
    %c0_133 = arith.constant 0 : index
    %224 = vector.load %arg15[%c0_131, %c0_132, %c0_133] : memref<1x1x32xf32, #tpu.memory_space<vmem>>, vector<1x1x32xf32>
    %225 = vector.shape_cast %224 : vector<1x1x32xf32> to vector<1x32xf32>
    %c0_134 = arith.constant 0 : index
    %c0_135 = arith.constant 0 : index
    %c0_136 = arith.constant 0 : index
    %226 = vector.load %arg16[%c0_134, %c0_135, %c0_136] : memref<1x1x32xf32, #tpu.memory_space<vmem>>, vector<1x1x32xf32>
    %227 = vector.shape_cast %226 : vector<1x1x32xf32> to vector<1x32xf32>
    %cst_137 = arith.constant dense<0.000000e+00> : vector<32xf32>
    %228 = vector.multi_reduction <add>, %223, %cst_137 [1] : vector<32x32xf32> to vector<32xf32>
    %229 = vector.shape_cast %228 : vector<32xf32> to vector<32x1xf32>
    %cst_138 = arith.constant 3.200000e+01 : f32
    %230 = vector.broadcast %cst_138 : f32 to vector<32x1xf32>
    %231 = arith.divf %229, %230 : vector<32x1xf32>
    %232 = vector.broadcast %231 : vector<32x1xf32> to vector<32x32xf32>
    %233 = arith.subf %223, %232 : vector<32x32xf32>
    %234 = arith.mulf %233, %233 : vector<32x32xf32>
    %cst_139 = arith.constant dense<0.000000e+00> : vector<32xf32>
    %235 = vector.multi_reduction <add>, %234, %cst_139 [1] : vector<32x32xf32> to vector<32xf32>
    %236 = vector.shape_cast %235 : vector<32xf32> to vector<32x1xf32>
    %cst_140 = arith.constant 3.200000e+01 : f32
    %237 = vector.broadcast %cst_140 : f32 to vector<32x1xf32>
    %238 = arith.divf %236, %237 : vector<32x1xf32>
    %239 = vector.broadcast %231 : vector<32x1xf32> to vector<32x32xf32>
    %240 = arith.subf %223, %239 : vector<32x32xf32>
    %cst_141 = arith.constant 9.99999974E-6 : f32
    %241 = vector.broadcast %cst_141 : f32 to vector<32x1xf32>
    %242 = arith.addf %238, %241 : vector<32x1xf32>
    %243 = math.rsqrt %242 : vector<32x1xf32>
    %244 = vector.broadcast %243 : vector<32x1xf32> to vector<32x32xf32>
    %245 = arith.mulf %240, %244 : vector<32x32xf32>
    %246 = vector.broadcast %225 : vector<1x32xf32> to vector<32x32xf32>
    %247 = arith.mulf %245, %246 : vector<32x32xf32>
    %248 = vector.broadcast %227 : vector<1x32xf32> to vector<32x32xf32>
    %249 = arith.addf %247, %248 : vector<32x32xf32>
    %cst_142 = arith.constant 0.000000e+00 : f32
    %250 = vector.shape_cast %37 : vector<32x1xi1> to vector<32x1xi1>
    %251 = vector.broadcast %250 : vector<32x1xi1> to vector<32x32xi1>
    %252 = vector.broadcast %cst_142 : f32 to vector<32x32xf32>
    %253 = arith.select %251, %252, %249 : vector<32x32xi1>, vector<32x32xf32>
    %254 = vector.shape_cast %253 : vector<32x32xf32> to vector<2x16x32xf32>
    %c0_143 = arith.constant 0 : index
    %c0_144 = arith.constant 0 : index
    %c0_145 = arith.constant 0 : index
    %255 = vector.load %arg17[%c0_143, %c0_144, %c0_145] : memref<2x16x32xf32, #tpu.memory_space<vmem>>, vector<2x16x32xf32>
    tpu.vector_store %arg17[%c0_143, %c0_144, %c0_145], %254 {strides = array<i32>} : memref<2x16x32xf32, #tpu.memory_space<vmem>>, vector<2x16x32xf32>,
    return
  }
  func.func @transform_0(%arg0: i32, %arg1: i32, %arg2: memref<2xi32, #tpu.memory_space<smem>>) -> (i32, i32, i32) {
    %c0_i32 = arith.constant 0 : i32
    %c0_i32_0 = arith.constant 0 : i32
    %c0_i32_1 = arith.constant 0 : i32
    return %arg0, %c0_i32, %c0_i32_0 : i32, i32, i32
  }
  func.func @transform_1(%arg0: i32, %arg1: i32, %arg2: memref<2xi32, #tpu.memory_space<smem>>) -> (i32, i32) {
    %c0_i32 = arith.constant 0 : i32
    %c0_i32_0 = arith.constant 0 : i32
    %c0_i32_1 = arith.constant 0 : i32
    return %c0_i32, %c0_i32_0 : i32, i32
  }
  func.func @transform_2(%arg0: i32, %arg1: i32, %arg2: memref<2xi32, #tpu.memory_space<smem>>) -> (i32, i32, i32) {
    %c0_i32 = arith.constant 0 : i32
    %c0_i32_0 = arith.constant 0 : i32
    %c0_i32_1 = arith.constant 0 : i32
    return %arg1, %c0_i32, %c0_i32_0 : i32, i32, i32
  }
  func.func @transform_3(%arg0: i32, %arg1: i32, %arg2: memref<2xi32, #tpu.memory_space<smem>>) -> (i32, i32, i32) {
    %c0_i32 = arith.constant 0 : i32
    %c0_i32_0 = arith.constant 0 : i32
    %c0_i32_1 = arith.constant 0 : i32
    return %arg1, %c0_i32, %c0_i32_0 : i32, i32, i32
  }
  func.func @transform_4(%arg0: i32, %arg1: i32, %arg2: memref<2xi32, #tpu.memory_space<smem>>) -> (i32, i32, i32) {
    %c0_i32 = arith.constant 0 : i32
    %c0_i32_0 = arith.constant 0 : i32
    %c0_i32_1 = arith.constant 0 : i32
    return %arg1, %c0_i32, %c0_i32_0 : i32, i32, i32
  }
  func.func @transform_5(%arg0: i32, %arg1: i32, %arg2: memref<2xi32, #tpu.memory_space<smem>>) -> (i32, i32, i32) {
    %c0_i32 = arith.constant 0 : i32
    %c0_i32_0 = arith.constant 0 : i32
    %c0_i32_1 = arith.constant 0 : i32
    return %arg1, %c0_i32, %c0_i32_0 : i32, i32, i32
  }
  func.func @transform_6(%arg0: i32, %arg1: i32, %arg2: memref<2xi32, #tpu.memory_space<smem>>) -> (i32, i32, i32) {
    %c0_i32 = arith.constant 0 : i32
    %c0_i32_0 = arith.constant 0 : i32
    %c0_i32_1 = arith.constant 0 : i32
    return %arg1, %c0_i32, %c0_i32_0 : i32, i32, i32
  }
  func.func @transform_7(%arg0: i32, %arg1: i32, %arg2: memref<2xi32, #tpu.memory_space<smem>>) -> (i32, i32, i32) {
    %c0_i32 = arith.constant 0 : i32
    %c0_i32_0 = arith.constant 0 : i32
    %c0_i32_1 = arith.constant 0 : i32
    return %arg1, %c0_i32, %c0_i32_0 : i32, i32, i32
  }
  func.func @transform_8(%arg0: i32, %arg1: i32, %arg2: memref<2xi32, #tpu.memory_space<smem>>) -> (i32, i32, i32, i32) {
    %c0_i32 = arith.constant 0 : i32
    %c0_i32_0 = arith.constant 0 : i32
    %c0_i32_1 = arith.constant 0 : i32
    %c0_i32_2 = arith.constant 0 : i32
    return %arg1, %c0_i32, %c0_i32_0, %c0_i32_1 : i32, i32, i32, i32
  }
  func.func @transform_9(%arg0: i32, %arg1: i32, %arg2: memref<2xi32, #tpu.memory_space<smem>>) -> (i32, i32, i32) {
    %c0_i32 = arith.constant 0 : i32
    %c0_i32_0 = arith.constant 0 : i32
    %c0_i32_1 = arith.constant 0 : i32
    return %arg1, %c0_i32, %c0_i32_0 : i32, i32, i32
  }
  func.func @transform_10(%arg0: i32, %arg1: i32, %arg2: memref<2xi32, #tpu.memory_space<smem>>) -> (i32, i32, i32, i32) {
    %c0_i32 = arith.constant 0 : i32
    %c0_i32_0 = arith.constant 0 : i32
    %c0_i32_1 = arith.constant 0 : i32
    %c0_i32_2 = arith.constant 0 : i32
    return %arg1, %c0_i32, %c0_i32_0, %c0_i32_1 : i32, i32, i32, i32
  }
  func.func @transform_11(%arg0: i32, %arg1: i32, %arg2: memref<2xi32, #tpu.memory_space<smem>>) -> (i32, i32, i32) {
    %c0_i32 = arith.constant 0 : i32
    %c0_i32_0 = arith.constant 0 : i32
    %c0_i32_1 = arith.constant 0 : i32
    return %arg1, %c0_i32, %c0_i32_0 : i32, i32, i32
  }
  func.func @transform_12(%arg0: i32, %arg1: i32, %arg2: memref<2xi32, #tpu.memory_space<smem>>) -> (i32, i32, i32) {
    %c0_i32 = arith.constant 0 : i32
    %c0_i32_0 = arith.constant 0 : i32
    %c0_i32_1 = arith.constant 0 : i32
    return %arg1, %c0_i32, %c0_i32_0 : i32, i32, i32
  }
  func.func @transform_13(%arg0: i32, %arg1: i32, %arg2: memref<2xi32, #tpu.memory_space<smem>>) -> (i32, i32, i32) {
    %c0_i32 = arith.constant 0 : i32
    %c0_i32_0 = arith.constant 0 : i32
    %c0_i32_1 = arith.constant 0 : i32
    return %arg1, %c0_i32, %c0_i32_0 : i32, i32, i32
  }
  func.func @transform_14(%arg0: i32, %arg1: i32, %arg2: memref<2xi32, #tpu.memory_space<smem>>) -> (i32, i32, i32) {
    %c0_i32 = arith.constant 0 : i32
    %c0_i32_0 = arith.constant 0 : i32
    %c0_i32_1 = arith.constant 0 : i32
    return %arg0, %c0_i32, %c0_i32_0 : i32, i32, i32
  }
}

</mosaic_0001>

<llo_original>
// kernel: tpu_custom_call.1
$region0: #{tpu_custom_call.1}
  #allocation0 [shape = 'u32[]', space=smem, size = 0x4, offset = 0x4, fixed_abs, tag = 'smem constant byte address 0x4 - core index']
  #allocation1 [shape = 'u32[144,128]{1,0:T(1,128)}', space=vmem, size = 0x12000, scoped, tag = 'internal scratch']
  #allocation2 [shape = 'f32[2,24,32]{2,1,0:T(8,128)}', space=vmem, size = 0x6000, scoped, tag = 'scratch operand']
  #allocation3 [shape = 's32[1]{0}', space=sflag, size = 0x4, scoped, tag = 'scoped memory for tpu_custom_call.1']
  #allocation4 [shape = 'u8[512]{0}', space=smem, size = 0x200, scoped, tag = 'prefetched SMEM operand 0']
  %s0 = inlined_call_operand.hbm [shape: s32[2], index: 0, kind: input, shape index: {}]
  %s1 = inlined_call_operand.vmem [shape: f32[2,16,32], index: 1, kind: input, shape index: {}]
  %s2 = inlined_call_operand.hbm [shape: f32[16,32], index: 2, kind: input, shape index: {}]
  %s3 = inlined_call_operand.vmem [shape: bf16[2,32,96], index: 3, kind: input, shape index: {}]
  %s4 = inlined_call_operand.vmem [shape: f32[2,1,96], index: 4, kind: input, shape index: {}]
  %s5 = inlined_call_operand.vmem [shape: bf16[2,32,32], index: 5, kind: input, shape index: {}]
  %s6 = inlined_call_operand.vmem [shape: f32[2,1,32], index: 6, kind: input, shape index: {}]
  %s7 = inlined_call_operand.vmem [shape: f32[2,1,32], index: 7, kind: input, shape index: {}]
  %s8 = inlined_call_operand.vmem [shape: f32[2,1,32], index: 8, kind: input, shape index: {}]
  %s9 = inlined_call_operand.hbm [shape: bf16[2,9,32,64], index: 9, kind: input, shape index: {}]
  %s10 = inlined_call_operand.vmem [shape: f32[2,1,64], index: 10, kind: input, shape index: {}]
  %s11 = inlined_call_operand.vmem [shape: bf16[2,1,64,32], index: 11, kind: input, shape index: {}]
  %s12 = inlined_call_operand.vmem [shape: f32[2,1,32], index: 12, kind: input, shape index: {}]
  %s13 = inlined_call_operand.vmem [shape: f32[2,1,32], index: 13, kind: input, shape index: {}]
  %s14 = inlined_call_operand.vmem [shape: f32[2,1,32], index: 14, kind: input, shape index: {}]
  %s15 = inlined_call_operand.hbm [shape: f32[2,16,32], index: 15, kind: output, shape index: {}]
  %s16 = sld [smem:[#allocation0]]
  $region101: #{tpu_custom_call.1} parent=0
    _
  %s18 = ssub.s32 1, %s16
  %s19 = scalar_select 0, %s18, %s16
  %21 = dma.hbm_to_smem %s0, 16, [#allocation4], [#allocation3]
  %22 = dma.done [#allocation3], 16
  %23 = sfence
  $region1: #{tpu_custom_call.1} parent=0
    #allocation5 [shape = 'u8[8192]{0}', space=vmem, size = 0x2000, scoped, tag = 'input window, operand 2, single buffered']
    #allocation6 [shape = 's32[2]{0}', space=sflag, size = 0x8, scoped, tag = 'scoped memory for tpu_custom_call.1']
    #allocation7 [shape = 's32[2]{0}', space=sflag, size = 0x8, scoped, tag = 'scoped memory for tpu_custom_call.1']
    #allocation8 [shape = 'u8[147456]{0}', space=vmem, size = 0x24000, scoped, tag = 'input window, operand 9']
    #allocation9 [shape = 's32[2]{0}', space=sflag, size = 0x8, scoped, tag = 'scoped memory for tpu_custom_call.1']
    #allocation10 [shape = 'u8[16384]{0}', space=vmem, size = 0x4000, scoped, tag = 'output window, operand 0, single buffered']
    %24 = vsyncpa [#allocation6], 0
    %25 = vsyncpa [#allocation9], 0
    %s26 = scalar_lea.sflag [#allocation9], 1
    %27 = vsyncpa %s26, 0
    %28 = vsyncpa [#allocation7], 0
    loop: start=0, step=1, limit=4
    $region2: #{tpu_custom_call.1} parent=1 // loop_pre_header
      _
    $region3: #{tpu_custom_call.1} parent=1 // loop_header
      %s30 = sphi 0, %s34
      %p31 = scmp.ge.s32.totalorder %s30, 4
      %s37 = sphi 0, %s49
      %s38 = sphi 0, %s45
      %s39 = sphi 0, %s37
      %s40 = sphi 0, %s38
      %s41 = sphi 0, %s39
      %s42 = sphi 0, %s40
      %s52 = sphi 0, %s54
      %s55 = sphi 0, %s52
      %s56 = sphi 0, %s55
      %s72 = sphi 0, %s56
      %s76 = sphi 0, %s76
      %s78 = sphi 0, %s76
      %s79 = sphi 0, %s78
      %s93 = sphi 0, %s79
      %s99 = sphi 0, %s101
      %s102 = sphi 0, %s99
      %s103 = sphi 0, %s102
      %s119 = sphi 0, %s103
      %s125 = sphi 0, %s127
      %s128 = sphi 0, %s125
      %s129 = sphi 0, %s128
      %s145 = sphi 0, %s129
      %s151 = sphi 0, %s153
      %s154 = sphi 0, %s151
      %s155 = sphi 0, %s154
      %s171 = sphi 0, %s155
      %s177 = sphi 0, %s179
      %s180 = sphi 0, %s177
      %s181 = sphi 0, %s180
      %s197 = sphi 0, %s181
      %s203 = sphi 0, %s205
      %s206 = sphi 0, %s203
      %s207 = sphi 0, %s206
      %s223 = sphi 0, %s207
      %s229 = sphi 0, %s231
      %s232 = sphi 0, %s229
      %s233 = sphi 0, %s232
      %s249 = sphi 0, %s233
      %s255 = sphi 0, %s257
      %s258 = sphi 0, %s255
      %s259 = sphi 0, %s258
      %s275 = sphi 0, %s259
      %s281 = sphi 0, %s283
      %s284 = sphi 0, %s281
      %s285 = sphi 0, %s284
      %s301 = sphi 0, %s285
      %s307 = sphi 0, %s309
      %s310 = sphi 0, %s307
      %s311 = sphi 0, %s310
      %s327 = sphi 0, %s311
      %s333 = sphi 0, %s335
      %s336 = sphi 0, %s333
      %s337 = sphi 0, %s336
      %s353 = sphi 0, %s337
      %s359 = sphi 0, %s361
      %s362 = sphi 0, %s359
      %s363 = sphi 0, %s362
      %s379 = sphi 0, %s363
      %s385 = sphi 0, %s387
      %s388 = sphi 0, %s385
      %s389 = sphi 0, %s388
      %s405 = sphi 0, %s389
      %s411 = sphi 0, %s413
      %s414 = sphi 0, %s411
      %s415 = sphi 0, %s414
      %s431 = sphi 0, %s415
    $region4: #{tpu_custom_call.1} parent=1 // loop_header_branch
      %33 = sbr.rel (%p31) target = $region8
    $region5: #{tpu_custom_call.1} parent=1 // loop_body
      %s35 = ssub.s32 %s30, 1
      %s36 = ssub.s32 %s30, 2
      %s43 = sadd.s32 1, %s38
      %p44 = scmp.ge.s32.totalorder %s43, 2
      %s45 = scalar_select %p44, 0, %s43
      %s46 = sadd.s32 1, %s37
      %s47 = scalar_select %p44, %s46, %s37
      %p48 = scmp.ge.s32.totalorder %s47, 1
      %s49 = scalar_select %p48, 0, %s47
      %s50 = ssub.s32 %s37, %s49
      %p51 = scmp.eq.s32.totalorder %s50, 0
      %s53 = sadd.s32 %s52, 1
      %s54 = scalar_select %p51, %s52, %s53
      %p57 = pneg %p51
      %p58 = scmp.eq.s32.totalorder %s30, 1
      %p59 = por %p57, %p58
      %p60 = scmp.ne.s32.totalorder %s52, %s55
      %p61 = scmp.eq.s32.totalorder %s30, 0
      %p62 = por %p60, %p61
      %p63 = scmp.ne.s32.totalorder %s52, %s55
      %p64 = scmp.eq.s32.totalorder %s35, 1
      %p65 = por %p63, %p64
      %p66 = scmp.ne.s32.totalorder %s55, %s56
      %p67 = scmp.eq.s32.totalorder %s35, 0
      %p68 = por %p66, %p67
      %p69 = scmp.ne.s32.totalorder %s55, %s56
      %p70 = scmp.eq.s32.totalorder %s36, 1
      %p71 = por %p69, %p70
      %p73 = scmp.ne.s32.totalorder %s56, %s72
      %p74 = scmp.eq.s32.totalorder %s36, 0
      %p75 = por %p73, %p74
      %s77 = sadd.s32 %s76, 1
      %p80 = scmp.eq.s32.totalorder %s30, 1
      %p81 = scmp.ne.s32.totalorder %s76, %s78
      %p82 = scmp.eq.s32.totalorder %s30, 0
      %p83 = por %p81, %p82
      %p84 = scmp.ne.s32.totalorder %s76, %s78
      %p85 = scmp.eq.s32.totalorder %s35, 1
      %p86 = por %p84, %p85
      %p87 = scmp.ne.s32.totalorder %s78, %s79
      %p88 = scmp.eq.s32.totalorder %s35, 0
      %p89 = por %p87, %p88
      %p90 = scmp.ne.s32.totalorder %s78, %s79
      %p91 = scmp.eq.s32.totalorder %s36, 1
      %p92 = por %p90, %p91
      %p94 = scmp.ne.s32.totalorder %s79, %s93
      %p95 = scmp.eq.s32.totalorder %s36, 0
      %p96 = por %p94, %p95
      %s97 = ssub.s32 %s38, %s45
      %p98 = scmp.eq.s32.totalorder %s97, 0
      %s100 = sadd.s32 %s99, 1
      %s101 = scalar_select %p98, %s99, %s100
      %p104 = pneg %p98
      %p105 = scmp.eq.s32.totalorder %s30, 1
      %p106 = por %p104, %p105
      %p107 = scmp.ne.s32.totalorder %s99, %s102
      %p108 = scmp.eq.s32.totalorder %s30, 0
      %p109 = por %p107, %p108
      %p110 = scmp.ne.s32.totalorder %s99, %s102
      %p111 = scmp.eq.s32.totalorder %s35, 1
      %p112 = por %p110, %p111
      %p113 = scmp.ne.s32.totalorder %s102, %s103
      %p114 = scmp.eq.s32.totalorder %s35, 0
      %p115 = por %p113, %p114
      %p116 = scmp.ne.s32.totalorder %s102, %s103
      %p117 = scmp.eq.s32.totalorder %s36, 1
      %p118 = por %p116, %p117
      %p120 = scmp.ne.s32.totalorder %s103, %s119
      %p121 = scmp.eq.s32.totalorder %s36, 0
      %p122 = por %p120, %p121
      %s123 = ssub.s32 %s38, %s45
      %p124 = scmp.eq.s32.totalorder %s123, 0
      %s126 = sadd.s32 %s125, 1
      %s127 = scalar_select %p124, %s125, %s126
      %p130 = pneg %p124
      %p131 = scmp.eq.s32.totalorder %s30, 1
      %p132 = por %p130, %p131
      %p133 = scmp.ne.s32.totalorder %s125, %s128
      %p134 = scmp.eq.s32.totalorder %s30, 0
      %p135 = por %p133, %p134
      %p136 = scmp.ne.s32.totalorder %s125, %s128
      %p137 = scmp.eq.s32.totalorder %s35, 1
      %p138 = por %p136, %p137
      %p139 = scmp.ne.s32.totalorder %s128, %s129
      %p140 = scmp.eq.s32.totalorder %s35, 0
      %p141 = por %p139, %p140
      %p142 = scmp.ne.s32.totalorder %s128, %s129
      %p143 = scmp.eq.s32.totalorder %s36, 1
      %p144 = por %p142, %p143
      %p146 = scmp.ne.s32.totalorder %s129, %s145
      %p147 = scmp.eq.s32.totalorder %s36, 0
      %p148 = por %p146, %p147
      %s149 = ssub.s32 %s38, %s45
      %p150 = scmp.eq.s32.totalorder %s149, 0
      %s152 = sadd.s32 %s151, 1
      %s153 = scalar_select %p150, %s151, %s152
      %p156 = pneg %p150
      %p157 = scmp.eq.s32.totalorder %s30, 1
      %p158 = por %p156, %p157
      %p159 = scmp.ne.s32.totalorder %s151, %s154
      %p160 = scmp.eq.s32.totalorder %s30, 0
      %p161 = por %p159, %p160
      %p162 = scmp.ne.s32.totalorder %s151, %s154
      %p163 = scmp.eq.s32.totalorder %s35, 1
      %p164 = por %p162, %p163
      %p165 = scmp.ne.s32.totalorder %s154, %s155
      %p166 = scmp.eq.s32.totalorder %s35, 0
      %p167 = por %p165, %p166
      %p168 = scmp.ne.s32.totalorder %s154, %s155
      %p169 = scmp.eq.s32.totalorder %s36, 1
      %p170 = por %p168, %p169
      %p172 = scmp.ne.s32.totalorder %s155, %s171
      %p173 = scmp.eq.s32.totalorder %s36, 0
      %p174 = por %p172, %p173
      %s175 = ssub.s32 %s38, %s45
      %p176 = scmp.eq.s32.totalorder %s175, 0
      %s178 = sadd.s32 %s177, 1
      %s179 = scalar_select %p176, %s177, %s178
      %p182 = pneg %p176
      %p183 = scmp.eq.s32.totalorder %s30, 1
      %p184 = por %p182, %p183
      %p185 = scmp.ne.s32.totalorder %s177, %s180
      %p186 = scmp.eq.s32.totalorder %s30, 0
      %p187 = por %p185, %p186
      %p188 = scmp.ne.s32.totalorder %s177, %s180
      %p189 = scmp.eq.s32.totalorder %s35, 1
      %p190 = por %p188, %p189
      %p191 = scmp.ne.s32.totalorder %s180, %s181
      %p192 = scmp.eq.s32.totalorder %s35, 0
      %p193 = por %p191, %p192
      %p194 = scmp.ne.s32.totalorder %s180, %s181
      %p195 = scmp.eq.s32.totalorder %s36, 1
      %p196 = por %p194, %p195
      %p198 = scmp.ne.s32.totalorder %s181, %s197
      %p199 = scmp.eq.s32.totalorder %s36, 0
      %p200 = por %p198, %p199
      %s201 = ssub.s32 %s38, %s45
      %p202 = scmp.eq.s32.totalorder %s201, 0
      %s204 = sadd.s32 %s203, 1
      %s205 = scalar_select %p202, %s203, %s204
      %p208 = pneg %p202
      %p209 = scmp.eq.s32.totalorder %s30, 1
      %p210 = por %p208, %p209
      %p211 = scmp.ne.s32.totalorder %s203, %s206
      %p212 = scmp.eq.s32.totalorder %s30, 0
      %p213 = por %p211, %p212
      %p214 = scmp.ne.s32.totalorder %s203, %s206
      %p215 = scmp.eq.s32.totalorder %s35, 1
      %p216 = por %p214, %p215
      %p217 = scmp.ne.s32.totalorder %s206, %s207
      %p218 = scmp.eq.s32.totalorder %s35, 0
      %p219 = por %p217, %p218
      %p220 = scmp.ne.s32.totalorder %s206, %s207
      %p221 = scmp.eq.s32.totalorder %s36, 1
      %p222 = por %p220, %p221
      %p224 = scmp.ne.s32.totalorder %s207, %s223
      %p225 = scmp.eq.s32.totalorder %s36, 0
      %p226 = por %p224, %p225
      %s227 = ssub.s32 %s38, %s45
      %p228 = scmp.eq.s32.totalorder %s227, 0
      %s230 = sadd.s32 %s229, 1
      %s231 = scalar_select %p228, %s229, %s230
      %p234 = pneg %p228
      %p235 = scmp.eq.s32.totalorder %s30, 1
      %p236 = por %p234, %p235
      %p237 = scmp.ne.s32.totalorder %s229, %s232
      %p238 = scmp.eq.s32.totalorder %s30, 0
      %p239 = por %p237, %p238
      %p240 = scmp.ne.s32.totalorder %s229, %s232
      %p241 = scmp.eq.s32.totalorder %s35, 1
      %p242 = por %p240, %p241
      %p243 = scmp.ne.s32.totalorder %s232, %s233
      %p244 = scmp.eq.s32.totalorder %s35, 0
      %p245 = por %p243, %p244
      %p246 = scmp.ne.s32.totalorder %s232, %s233
      %p247 = scmp.eq.s32.totalorder %s36, 1
      %p248 = por %p246, %p247
      %p250 = scmp.ne.s32.totalorder %s233, %s249
      %p251 = scmp.eq.s32.totalorder %s36, 0
      %p252 = por %p250, %p251
      %s253 = ssub.s32 %s38, %s45
      %p254 = scmp.eq.s32.totalorder %s253, 0
      %s256 = sadd.s32 %s255, 1
      %s257 = scalar_select %p254, %s255, %s256
      %p260 = pneg %p254
      %p261 = scmp.eq.s32.totalorder %s30, 1
      %p262 = por %p260, %p261
      %p263 = scmp.ne.s32.totalorder %s255, %s258
      %p264 = scmp.eq.s32.totalorder %s30, 0
      %p265 = por %p263, %p264
      %p266 = scmp.ne.s32.totalorder %s255, %s258
      %p267 = scmp.eq.s32.totalorder %s35, 1
      %p268 = por %p266, %p267
      %p269 = scmp.ne.s32.totalorder %s258, %s259
      %p270 = scmp.eq.s32.totalorder %s35, 0
      %p271 = por %p269, %p270
      %p272 = scmp.ne.s32.totalorder %s258, %s259
      %p273 = scmp.eq.s32.totalorder %s36, 1
      %p274 = por %p272, %p273
      %p276 = scmp.ne.s32.totalorder %s259, %s275
      %p277 = scmp.eq.s32.totalorder %s36, 0
      %p278 = por %p276, %p277
      %s279 = ssub.s32 %s38, %s45
      %p280 = scmp.eq.s32.totalorder %s279, 0
      %s282 = sadd.s32 %s281, 1
      %s283 = scalar_select %p280, %s281, %s282
      %p286 = pneg %p280
      %p287 = scmp.eq.s32.totalorder %s30, 1
      %p288 = por %p286, %p287
      %p289 = scmp.ne.s32.totalorder %s281, %s284
      %p290 = scmp.eq.s32.totalorder %s30, 0
      %p291 = por %p289, %p290
      %p292 = scmp.ne.s32.totalorder %s281, %s284
      %p293 = scmp.eq.s32.totalorder %s35, 1
      %p294 = por %p292, %p293
      %p295 = scmp.ne.s32.totalorder %s284, %s285
      %p296 = scmp.eq.s32.totalorder %s35, 0
      %p297 = por %p295, %p296
      %p298 = scmp.ne.s32.totalorder %s284, %s285
      %p299 = scmp.eq.s32.totalorder %s36, 1
      %p300 = por %p298, %p299
      %p302 = scmp.ne.s32.totalorder %s285, %s301
      %p303 = scmp.eq.s32.totalorder %s36, 0
      %p304 = por %p302, %p303
      %s305 = ssub.s32 %s38, %s45
      %p306 = scmp.eq.s32.totalorder %s305, 0
      %s308 = sadd.s32 %s307, 1
      %s309 = scalar_select %p306, %s307, %s308
      %p312 = pneg %p306
      %p313 = scmp.eq.s32.totalorder %s30, 1
      %p314 = por %p312, %p313
      %p315 = scmp.ne.s32.totalorder %s307, %s310
      %p316 = scmp.eq.s32.totalorder %s30, 0
      %p317 = por %p315, %p316
      %p318 = scmp.ne.s32.totalorder %s307, %s310
      %p319 = scmp.eq.s32.totalorder %s35, 1
      %p320 = por %p318, %p319
      %p321 = scmp.ne.s32.totalorder %s310, %s311
      %p322 = scmp.eq.s32.totalorder %s35, 0
      %p323 = por %p321, %p322
      %p324 = scmp.ne.s32.totalorder %s310, %s311
      %p325 = scmp.eq.s32.totalorder %s36, 1
      %p326 = por %p324, %p325
      %p328 = scmp.ne.s32.totalorder %s311, %s327
      %p329 = scmp.eq.s32.totalorder %s36, 0
      %p330 = por %p328, %p329
      %s331 = ssub.s32 %s38, %s45
      %p332 = scmp.eq.s32.totalorder %s331, 0
      %s334 = sadd.s32 %s333, 1
      %s335 = scalar_select %p332, %s333, %s334
      %p338 = pneg %p332
      %p339 = scmp.eq.s32.totalorder %s30, 1
      %p340 = por %p338, %p339
      %p341 = scmp.ne.s32.totalorder %s333, %s336
      %p342 = scmp.eq.s32.totalorder %s30, 0
      %p343 = por %p341, %p342
      %p344 = scmp.ne.s32.totalorder %s333, %s336
      %p345 = scmp.eq.s32.totalorder %s35, 1
      %p346 = por %p344, %p345
      %p347 = scmp.ne.s32.totalorder %s336, %s337
      %p348 = scmp.eq.s32.totalorder %s35, 0
      %p349 = por %p347, %p348
      %p350 = scmp.ne.s32.totalorder %s336, %s337
      %p351 = scmp.eq.s32.totalorder %s36, 1
      %p352 = por %p350, %p351
      %p354 = scmp.ne.s32.totalorder %s337, %s353
      %p355 = scmp.eq.s32.totalorder %s36, 0
      %p356 = por %p354, %p355
      %s357 = ssub.s32 %s38, %s45
      %p358 = scmp.eq.s32.totalorder %s357, 0
      %s360 = sadd.s32 %s359, 1
      %s361 = scalar_select %p358, %s359, %s360
      %p364 = pneg %p358
      %p365 = scmp.eq.s32.totalorder %s30, 1
      %p366 = por %p364, %p365
      %p367 = scmp.ne.s32.totalorder %s359, %s362
      %p368 = scmp.eq.s32.totalorder %s30, 0
      %p369 = por %p367, %p368
      %p370 = scmp.ne.s32.totalorder %s359, %s362
      %p371 = scmp.eq.s32.totalorder %s35, 1
      %p372 = por %p370, %p371
      %p373 = scmp.ne.s32.totalorder %s362, %s363
      %p374 = scmp.eq.s32.totalorder %s35, 0
      %p375 = por %p373, %p374
      %p376 = scmp.ne.s32.totalorder %s362, %s363
      %p377 = scmp.eq.s32.totalorder %s36, 1
      %p378 = por %p376, %p377
      %p380 = scmp.ne.s32.totalorder %s363, %s379
      %p381 = scmp.eq.s32.totalorder %s36, 0
      %p382 = por %p380, %p381
      %s383 = ssub.s32 %s38, %s45
      %p384 = scmp.eq.s32.totalorder %s383, 0
      %s386 = sadd.s32 %s385, 1
      %s387 = scalar_select %p384, %s385, %s386
      %p390 = pneg %p384
      %p391 = scmp.eq.s32.totalorder %s30, 1
      %p392 = por %p390, %p391
      %p393 = scmp.ne.s32.totalorder %s385, %s388
      %p394 = scmp.eq.s32.totalorder %s30, 0
      %p395 = por %p393, %p394
      %p396 = scmp.ne.s32.totalorder %s385, %s388
      %p397 = scmp.eq.s32.totalorder %s35, 1
      %p398 = por %p396, %p397
      %p399 = scmp.ne.s32.totalorder %s388, %s389
      %p400 = scmp.eq.s32.totalorder %s35, 0
      %p401 = por %p399, %p400
      %p402 = scmp.ne.s32.totalorder %s388, %s389
      %p403 = scmp.eq.s32.totalorder %s36, 1
      %p404 = por %p402, %p403
      %p406 = scmp.ne.s32.totalorder %s389, %s405
      %p407 = scmp.eq.s32.totalorder %s36, 0
      %p408 = por %p406, %p407
      %s409 = ssub.s32 %s37, %s49
      %p410 = scmp.eq.s32.totalorder %s409, 0
      %s412 = sadd.s32 %s411, 1
      %s413 = scalar_select %p410, %s411, %s412
      %p416 = pneg %p410
      %p417 = scmp.eq.s32.totalorder %s30, 1
      %p418 = por %p416, %p417
      %p419 = scmp.ne.s32.totalorder %s411, %s414
      %p420 = scmp.eq.s32.totalorder %s30, 0
      %p421 = por %p419, %p420
      %p422 = scmp.ne.s32.totalorder %s411, %s414
      %p423 = scmp.eq.s32.totalorder %s35, 1
      %p424 = por %p422, %p423
      %p425 = scmp.ne.s32.totalorder %s414, %s415
      %p426 = scmp.eq.s32.totalorder %s35, 0
      %p427 = por %p425, %p426
      %p428 = scmp.ne.s32.totalorder %s414, %s415
      %p429 = scmp.eq.s32.totalorder %s36, 1
      %p430 = por %p428, %p429
      %p432 = scmp.ne.s32.totalorder %s415, %s431
      %p433 = scmp.eq.s32.totalorder %s36, 0
      %p434 = por %p432, %p433
      %p435 = scmp.le.s32.totalorder 1, %s30
      %p436 = scmp.lt.s32.totalorder %s30, 3
      %p437 = pnand %p435, %p436
      %p438 = pneg %p437
      // Predicated region
      $region9: #{tpu_custom_call.1} parent=5 // pred_check
        _
      $region10: #{tpu_custom_call.1} parent=5 // pred_check_branch
        %440 = sbr.rel (%p437) target = $region12
      $region11: #{tpu_custom_call.1} parent=5 // pred_region
        %s441 = ssub.s32 %s30, 1
        // Predicated region
        $region13: #{tpu_custom_call.1} parent=11 // pred_check
          %p442 = pneg %p68
        $region14: #{tpu_custom_call.1} parent=11 // pred_check_branch
          %444 = sbr.rel (%p442) target = $region16
        $region15: #{tpu_custom_call.1} parent=11 // pred_region
          %s445 = smul.u32 2, %s39
          %p446 = scmp.lt.s32.totalorder %s445, 1
          %s447 = scalar_select %p446, %s445, 1
          %s448 = smul.addr %s447, 2
          %s449 = smul.addr %s448, 8
          %s450 = scalar_lea.vmem %s1, %s449
          %s451 = smul.u32 2, %s39
        $region16: #{tpu_custom_call.1} parent=11 // pred_fallthru
          _
        // Predicated region
        $region17: #{tpu_custom_call.1} parent=11 // pred_check
          %p452 = pneg %p89
        $region18: #{tpu_custom_call.1} parent=11 // pred_check_branch
          %454 = sbr.rel (%p452) target = $region20
        $region19: #{tpu_custom_call.1} parent=11 // pred_region
          %s456 = ssub.s32 256, 256
          %457 = vsyncadd [#allocation6], %s456
          %s458 = sshll.u32 [#allocation5], 4
          %s459 = int_to_ptr.vmem [resolvable:$true] %s458
          %464 = dma.hbm_to_vmem [thread:$0]  %s2, 256, %s459, [#allocation6], 128, 128, 8
        $region20: #{tpu_custom_call.1} parent=11 // pred_fallthru
          _
      $region12: #{tpu_custom_call.1} parent=5 // pred_fallthru
        _
      %p465 = scmp.lt.s32.totalorder %s30, 2
      // Predicated region
      $region21: #{tpu_custom_call.1} parent=5 // pred_check
        %p466 = pneg %p465
      $region22: #{tpu_custom_call.1} parent=5 // pred_check_branch
        %468 = sbr.rel (%p466) target = $region24
      $region23: #{tpu_custom_call.1} parent=5 // pred_region
        // Predicated region
        $region25: #{tpu_custom_call.1} parent=23 // pred_check
          %p469 = pneg %p109
        $region26: #{tpu_custom_call.1} parent=23 // pred_check_branch
          %471 = sbr.rel (%p469) target = $region28
        $region27: #{tpu_custom_call.1} parent=23 // pred_region
          %p472 = scmp.lt.s32.totalorder %s38, 1
          %s473 = scalar_select %p472, %s38, 1
          %s474 = smul.addr %s473, 4
          %s475 = smul.addr %s474, 4
          %s476 = scalar_lea.vmem %s3, %s475
        $region28: #{tpu_custom_call.1} parent=23 // pred_fallthru
          _
        // Predicated region
        $region29: #{tpu_custom_call.1} parent=23 // pred_check
          %p477 = pneg %p135
        $region30: #{tpu_custom_call.1} parent=23 // pred_check_branch
          %479 = sbr.rel (%p477) target = $region32
        $region31: #{tpu_custom_call.1} parent=23 // pred_region
          %p480 = scmp.lt.s32.totalorder %s38, 1
          %s481 = scalar_select %p480, %s38, 1
          %s482 = scalar_lea.vmem %s4, %s481
        $region32: #{tpu_custom_call.1} parent=23 // pred_fallthru
          _
        // Predicated region
        $region33: #{tpu_custom_call.1} parent=23 // pred_check
          %p483 = pneg %p161
        $region34: #{tpu_custom_call.1} parent=23 // pred_check_branch
          %485 = sbr.rel (%p483) target = $region36
        $region35: #{tpu_custom_call.1} parent=23 // pred_region
          %p486 = scmp.lt.s32.totalorder %s38, 1
          %s487 = scalar_select %p486, %s38, 1
          %s488 = smul.addr %s487, 4
          %s489 = smul.addr %s488, 4
          %s490 = scalar_lea.vmem %s5, %s489
        $region36: #{tpu_custom_call.1} parent=23 // pred_fallthru
          _
        // Predicated region
        $region37: #{tpu_custom_call.1} parent=23 // pred_check
          %p491 = pneg %p187
        $region38: #{tpu_custom_call.1} parent=23 // pred_check_branch
          %493 = sbr.rel (%p491) target = $region40
        $region39: #{tpu_custom_call.1} parent=23 // pred_region
          %p494 = scmp.lt.s32.totalorder %s38, 1
          %s495 = scalar_select %p494, %s38, 1
          %s496 = scalar_lea.vmem %s6, %s495
        $region40: #{tpu_custom_call.1} parent=23 // pred_fallthru
          _
        // Predicated region
        $region41: #{tpu_custom_call.1} parent=23 // pred_check
          %p497 = pneg %p213
        $region42: #{tpu_custom_call.1} parent=23 // pred_check_branch
          %499 = sbr.rel (%p497) target = $region44
        $region43: #{tpu_custom_call.1} parent=23 // pred_region
          %p500 = scmp.lt.s32.totalorder %s38, 1
          %s501 = scalar_select %p500, %s38, 1
          %s502 = scalar_lea.vmem %s7, %s501
        $region44: #{tpu_custom_call.1} parent=23 // pred_fallthru
          _
        // Predicated region
        $region45: #{tpu_custom_call.1} parent=23 // pred_check
          %p503 = pneg %p239
        $region46: #{tpu_custom_call.1} parent=23 // pred_check_branch
          %505 = sbr.rel (%p503) target = $region48
        $region47: #{tpu_custom_call.1} parent=23 // pred_region
          %p506 = scmp.lt.s32.totalorder %s38, 1
          %s507 = scalar_select %p506, %s38, 1
          %s508 = scalar_lea.vmem %s8, %s507
        $region48: #{tpu_custom_call.1} parent=23 // pred_fallthru
          _
        // Predicated region
        $region49: #{tpu_custom_call.1} parent=23 // pred_check
          %p509 = pneg %p265
        $region50: #{tpu_custom_call.1} parent=23 // pred_check_branch
          %511 = sbr.rel (%p509) target = $region52
        $region51: #{tpu_custom_call.1} parent=23 // pred_region
          %s512 = sand.u32 %s255, 1
          %s513 = scalar_lea.sflag [#allocation9], %s512
          %s514 = sand.u32 %s255, 1
          %s515 = smul.addr %s514, 144
          %s516 = scalar_lea.vmem [#allocation8], %s515
          %s518 = ssub.s32 2304, 2304
          %519 = vsyncadd %s513, %s518
          %s520 = smul.addr %s38, 36
          %s521 = smul.addr %s520, 64
          %s522 = scalar_lea.hbm %s9, %s521
          %s523 = sshll.u32 %s516, 4
          %s524 = int_to_ptr.vmem [resolvable:$true] %s523
          %529 = dma.hbm_to_vmem [thread:$0]  %s522, 2304, %s524, %s513, 64, 64, 4
        $region52: #{tpu_custom_call.1} parent=23 // pred_fallthru
          _
        // Predicated region
        $region53: #{tpu_custom_call.1} parent=23 // pred_check
          %p530 = pneg %p291
        $region54: #{tpu_custom_call.1} parent=23 // pred_check_branch
          %532 = sbr.rel (%p530) target = $region56
        $region55: #{tpu_custom_call.1} parent=23 // pred_region
          %p533 = scmp.lt.s32.totalorder %s38, 1
          %s534 = scalar_select %p533, %s38, 1
          %s535 = scalar_lea.vmem %s10, %s534
        $region56: #{tpu_custom_call.1} parent=23 // pred_fallthru
          _
        // Predicated region
        $region57: #{tpu_custom_call.1} parent=23 // pred_check
          %p536 = pneg %p317
        $region58: #{tpu_custom_call.1} parent=23 // pred_check_branch
          %538 = sbr.rel (%p536) target = $region60
        $region59: #{tpu_custom_call.1} parent=23 // pred_region
          %p539 = scmp.lt.s32.totalorder %s38, 1
          %s540 = scalar_select %p539, %s38, 1
          %s541 = smul.addr %s540, 8
          %s542 = smul.addr %s541, 4
          %s543 = scalar_lea.vmem %s11, %s542
        $region60: #{tpu_custom_call.1} parent=23 // pred_fallthru
          _
        // Predicated region
        $region61: #{tpu_custom_call.1} parent=23 // pred_check
          %p544 = pneg %p343
        $region62: #{tpu_custom_call.1} parent=23 // pred_check_branch
          %546 = sbr.rel (%p544) target = $region64
        $region63: #{tpu_custom_call.1} parent=23 // pred_region
          %p547 = scmp.lt.s32.totalorder %s38, 1
          %s548 = scalar_select %p547, %s38, 1
          %s549 = scalar_lea.vmem %s12, %s548
        $region64: #{tpu_custom_call.1} parent=23 // pred_fallthru
          _
        // Predicated region
        $region65: #{tpu_custom_call.1} parent=23 // pred_check
          %p550 = pneg %p369
        $region66: #{tpu_custom_call.1} parent=23 // pred_check_branch
          %552 = sbr.rel (%p550) target = $region68
        $region67: #{tpu_custom_call.1} parent=23 // pred_region
          %p553 = scmp.lt.s32.totalorder %s38, 1
          %s554 = scalar_select %p553, %s38, 1
          %s555 = scalar_lea.vmem %s13, %s554
        $region68: #{tpu_custom_call.1} parent=23 // pred_fallthru
          _
        // Predicated region
        $region69: #{tpu_custom_call.1} parent=23 // pred_check
          %p556 = pneg %p395
        $region70: #{tpu_custom_call.1} parent=23 // pred_check_branch
          %558 = sbr.rel (%p556) target = $region72
        $region71: #{tpu_custom_call.1} parent=23 // pred_region
          %p559 = scmp.lt.s32.totalorder %s38, 1
          %s560 = scalar_select %p559, %s38, 1
          %s561 = scalar_lea.vmem %s14, %s560
        $region72: #{tpu_custom_call.1} parent=23 // pred_fallthru
          _
      $region24: #{tpu_custom_call.1} parent=5 // pred_fallthru
        _
      %p562 = scmp.le.s32.totalorder 1, %s30
      %p563 = scmp.lt.s32.totalorder %s30, 3
      %p564 = pnand %p562, %p563
      %p565 = pneg %p564
      // Predicated region
      $region73: #{tpu_custom_call.1} parent=5 // pred_check
        _
      $region74: #{tpu_custom_call.1} parent=5 // pred_check_branch
        %567 = sbr.rel (%p564) target = $region76
      $region75: #{tpu_custom_call.1} parent=5 // pred_region
        %s568 = ssub.s32 %s30, 1
        // Predicated region
        $region77: #{tpu_custom_call.1} parent=75 // pred_check
          %p569 = pneg %p89
        $region78: #{tpu_custom_call.1} parent=75 // pred_check_branch
          %571 = sbr.rel (%p569) target = $region80
        $region79: #{tpu_custom_call.1} parent=75 // pred_region
          %572 = dma.done [#allocation6], 256
        $region80: #{tpu_custom_call.1} parent=75 // pred_fallthru
          _
        %s573 = sand.u32 %s258, 1
        %s574 = scalar_lea.sflag [#allocation9], %s573
        %s575 = sand.u32 %s258, 1
        %s576 = smul.addr %s575, 144
        %s577 = scalar_lea.vmem [#allocation8], %s576
        // Predicated region
        $region81: #{tpu_custom_call.1} parent=75 // pred_check
          %p578 = pneg %p271
        $region82: #{tpu_custom_call.1} parent=75 // pred_check_branch
          %580 = sbr.rel (%p578) target = $region84
        $region83: #{tpu_custom_call.1} parent=75 // pred_region
          %581 = dma.done %s574, 2304
        $region84: #{tpu_custom_call.1} parent=75 // pred_fallthru
          _
        %s582 = smul.u32 2, %s39
        %p583 = scmp.lt.s32.totalorder %s582, 1
        %s584 = scalar_select %p583, %s582, 1
        %s585 = smul.addr %s584, 2
        %s586 = smul.addr %s585, 8
        %s587 = scalar_lea.vmem %s1, %s586
        %p588 = pneg %p68
        %p589 = pneg %p65
        %p590 = pneg %p89
        %p591 = pneg %p86
        %p592 = scmp.lt.s32.totalorder %s40, 1
        %s593 = scalar_select %p592, %s40, 1
        %s594 = smul.addr %s593, 4
        %s595 = smul.addr %s594, 4
        %s596 = scalar_lea.vmem %s3, %s595
        %p597 = pneg %p115
        %p598 = pneg %p112
        %p599 = scmp.lt.s32.totalorder %s40, 1
        %s600 = scalar_select %p599, %s40, 1
        %s601 = scalar_lea.vmem %s4, %s600
        %p602 = pneg %p141
        %p603 = pneg %p138
        %p604 = scmp.lt.s32.totalorder %s40, 1
        %s605 = scalar_select %p604, %s40, 1
        %s606 = smul.addr %s605, 4
        %s607 = smul.addr %s606, 4
        %s608 = scalar_lea.vmem %s5, %s607
        %p609 = pneg %p167
        %p610 = pneg %p164
        %p611 = scmp.lt.s32.totalorder %s40, 1
        %s612 = scalar_select %p611, %s40, 1
        %s613 = scalar_lea.vmem %s6, %s612
        %p614 = pneg %p193
        %p615 = pneg %p190
        %p616 = scmp.lt.s32.totalorder %s40, 1
        %s617 = scalar_select %p616, %s40, 1
        %s618 = scalar_lea.vmem %s7, %s617
        %p619 = pneg %p219
        %p620 = pneg %p216
        %p621 = scmp.lt.s32.totalorder %s40, 1
        %s622 = scalar_select %p621, %s40, 1
        %s623 = scalar_lea.vmem %s8, %s622
        %p624 = pneg %p245
        %p625 = pneg %p242
        %s626 = sand.u32 %s258, 1
        %s627 = scalar_lea.sflag [#allocation9], %s626
        %s628 = sand.u32 %s258, 1
        %s629 = smul.addr %s628, 144
        %s630 = scalar_lea.vmem [#allocation8], %s629
        %p631 = pneg %p271
        %p632 = pneg %p268
        %p633 = scmp.lt.s32.totalorder %s40, 1
        %s634 = scalar_select %p633, %s40, 1
        %s635 = scalar_lea.vmem %s10, %s634
        %p636 = pneg %p297
        %p637 = pneg %p294
        %p638 = scmp.lt.s32.totalorder %s40, 1
        %s639 = scalar_select %p638, %s40, 1
        %s640 = smul.addr %s639, 8
        %s641 = smul.addr %s640, 4
        %s642 = scalar_lea.vmem %s11, %s641
        %p643 = pneg %p323
        %p644 = pneg %p320
        %p645 = scmp.lt.s32.totalorder %s40, 1
        %s646 = scalar_select %p645, %s40, 1
        %s647 = scalar_lea.vmem %s12, %s646
        %p648 = pneg %p349
        %p649 = pneg %p346
        %p650 = scmp.lt.s32.totalorder %s40, 1
        %s651 = scalar_select %p650, %s40, 1
        %s652 = scalar_lea.vmem %s13, %s651
        %p653 = pneg %p375
        %p654 = pneg %p372
        %p655 = scmp.lt.s32.totalorder %s40, 1
        %s656 = scalar_select %p655, %s40, 1
        %s657 = scalar_lea.vmem %s14, %s656
        %p658 = pneg %p401
        %p659 = pneg %p398
        %p660 = pneg %p427
        %p661 = pneg %p424
        %s662 = smul.u32 2, %s39
        %p663 = scmp.lt.s32.totalorder %s662, 1
        %s664 = scalar_select %p663, %s662, 1
        %s665 = smul.addr %s664, 2
        %s666 = smul.addr %s665, 8
        %s667 = scalar_lea.vmem %s1, %s666
        %s668 = smul.u32 2, %s39
        %p669 = scmp.lt.s32.totalorder %s40, 1
        %s670 = scalar_select %p669, %s40, 1
        %s671 = smul.addr %s670, 4
        %s672 = smul.addr %s671, 4
        %s673 = scalar_lea.vmem %s3, %s672
        %p674 = scmp.lt.s32.totalorder %s40, 1
        %s675 = scalar_select %p674, %s40, 1
        %s676 = scalar_lea.vmem %s4, %s675
        %p677 = scmp.lt.s32.totalorder %s40, 1
        %s678 = scalar_select %p677, %s40, 1
        %s679 = smul.addr %s678, 4
        %s680 = smul.addr %s679, 4
        %s681 = scalar_lea.vmem %s5, %s680
        %p682 = scmp.lt.s32.totalorder %s40, 1
        %s683 = scalar_select %p682, %s40, 1
        %s684 = scalar_lea.vmem %s6, %s683
        %p685 = scmp.lt.s32.totalorder %s40, 1
        %s686 = scalar_select %p685, %s40, 1
        %s687 = scalar_lea.vmem %s7, %s686
        %p688 = scmp.lt.s32.totalorder %s40, 1
        %s689 = scalar_select %p688, %s40, 1
        %s690 = scalar_lea.vmem %s8, %s689
        %p691 = scmp.lt.s32.totalorder %s40, 1
        %s692 = scalar_select %p691, %s40, 1
        %s693 = scalar_lea.vmem %s10, %s692
        %p694 = scmp.lt.s32.totalorder %s40, 1
        %s695 = scalar_select %p694, %s40, 1
        %s696 = smul.addr %s695, 8
        %s697 = smul.addr %s696, 4
        %s698 = scalar_lea.vmem %s11, %s697
        %p699 = scmp.lt.s32.totalorder %s40, 1
        %s700 = scalar_select %p699, %s40, 1
        %s701 = scalar_lea.vmem %s12, %s700
        %p702 = scmp.lt.s32.totalorder %s40, 1
        %s703 = scalar_select %p702, %s40, 1
        %s704 = scalar_lea.vmem %s13, %s703
        %p705 = scmp.lt.s32.totalorder %s40, 1
        %s706 = scalar_select %p705, %s40, 1
        %s707 = scalar_lea.vmem %s14, %s706
        %s708 = smul.u32 2, %s39
        %s710 = smul.u32 %s39, 2
        %v711 = vlaneseq
        %v712 = vand.u32 %v711, 127
        %v713 = vlaneseq
        %v714 = vshrl.u32 %v713, 7
        %v715 = vadd.s32 %v714, 8
        %v716 = vadd.s32 %v714, 16
        %v717 = vadd.s32 %v714, 24
        %s718 = sld [smem:[#allocation4 + %s710]]
        %v719 = vstv %s718
        %vm720 = vcmp.ge.s32.totalorder %v714, 0
        %vm721 = vcmp.ge.s32.totalorder %v715, 0
        %vm722 = vcmp.ge.s32.totalorder %v716, 0
        %vm723 = vcmp.ge.s32.totalorder %v717, 0
        %vm724 = vcmp.lt.s32.totalorder %v714, 16
        %vm725 = vcmp.lt.s32.totalorder %v715, 16
        %vm726 = vcmp.lt.s32.totalorder %v716, 16
        %vm727 = vcmp.lt.s32.totalorder %v717, 16
        %vm728 = vmand %vm720, %vm724
        %vm729 = vmand %vm721, %vm725
        %vm730 = vmand %vm722, %vm726
        %vm731 = vmand %vm723, %vm727
        %v732 = vsel %vm728, %v719, 0
        %v733 = vsel %vm729, %v719, 0
        %v734 = vsel %vm730, %v719, 0
        %v735 = vsel %vm731, %v719, 0
        %s736 = sadd.s32 %s710, 1
        %s737 = sld [smem:[#allocation4 + %s736]]
        %v738 = vstv %s737
        %vm739 = vcmp.ge.s32.totalorder %v714, 16
        %vm740 = vcmp.ge.s32.totalorder %v715, 16
        %vm741 = vcmp.ge.s32.totalorder %v716, 16
        %vm742 = vcmp.ge.s32.totalorder %v717, 16
        %vm743 = vcmp.lt.s32.totalorder %v714, 32
        %vm744 = vcmp.lt.s32.totalorder %v715, 32
        %vm745 = vcmp.lt.s32.totalorder %v716, 32
        %vm746 = vcmp.lt.s32.totalorder %v717, 32
        %vm747 = vmand %vm739, %vm743
        %vm748 = vmand %vm740, %vm744
        %vm749 = vmand %vm741, %vm745
        %vm750 = vmand %vm742, %vm746
        %s751 = sadd.s32 %s737, 16
        %v752 = vstv %s751
        %v753 = vsel %vm747, %v752, %v732
        %v754 = vsel %vm748, %v752, %v733
        %v755 = vsel %vm749, %v752, %v734
        %v756 = vsel %vm750, %v752, %v735
        %vm757 = vcmp.ge.s32.totalorder %v712, %v719
        %vm758 = vcmp.ge.s32.totalorder %v712, %v738
        %vm759 = vcmp.ge.s32.totalorder %v714, %v753
        %vm760 = vcmp.ge.s32.totalorder %v715, %v754
        %vm761 = vcmp.ge.s32.totalorder %v716, %v755
        %vm762 = vcmp.ge.s32.totalorder %v717, %v756
        %p763 = scmp.eq.s32.totalorder %s40, 0
        // Predicated region
        $region85: #{tpu_custom_call.1} parent=75 // pred_check
          %p764 = pneg %p763
        $region86: #{tpu_custom_call.1} parent=75 // pred_check_branch
          %766 = sbr.rel (%p764) target = $region88
        $region87: #{tpu_custom_call.1} parent=75 // pred_region
          %v767 = vld [vmem:[%s667] sm:$0xff]
          %v768 = vld [vmem:[%s667 + $0x8] sm:$0xff]
          %v769 = vld [vmem:[%s667 + $0x10] sm:$0xff]
          %v770 = vld [vmem:[%s667 + $0x18] sm:$0xff]
          %v771 = vld [vmem:[#allocation5] sm:$0xff]
          %v772 = vld [vmem:[#allocation5 + $0x8] sm:$0xff]
          %v773 = vadd.f32 %v767, %v771
          %v774 = vadd.f32 %v768, %v772
          %v775 = vadd.f32 %v769, %v771
          %v776 = vadd.f32 %v770, %v772
          %vm777 = vcmask 261120
          %778 = vst.msk [vmem:[#allocation10] sm:$0xff] %vm777, %v773
          %779 = vst.msk [vmem:[#allocation10 + $0x8] sm:$0xff] %vm777, %v774
          %780 = vst.msk [vmem:[#allocation10 + $0x10] sm:$0xff] %vm777, %v775
          %781 = vst.msk [vmem:[#allocation10 + $0x18] sm:$0xff] %vm777, %v776
          %vm782 = vcmask 257024
          %783 = vst.msk [vmem:[#allocation2] sm:$0xf] %vm782, 0.0
          %784 = vst.msk [vmem:[#allocation2 + $0x18] sm:$0xf] %vm782, 0.0
          %785 = vst.msk [vmem:[#allocation2 + $0x14] sm:$0xf] %vm782, 0.0
          %786 = vst.msk [vmem:[#allocation2 + $0x2c] sm:$0xf] %vm782, 0.0
        $region88: #{tpu_custom_call.1} parent=75 // pred_fallthru
          _
        %v787 = vld [vmem:[#allocation10] sm:$0xff]
        %v788 = vld [vmem:[#allocation10 + $0x8] sm:$0xff]
        %v789 = vld [vmem:[#allocation10 + $0x10] sm:$0xff]
        %v790 = vld [vmem:[#allocation10 + $0x18] sm:$0xff]
        %v791 = vpack.c.bf16 %v788, %v787
        %v792 = vpack.c.bf16 %v790, %v789
        %v793 = vld [vmem:[%s673] sm:$0xf]
        %v794 = vld [vmem:[%s673 + $0x4] sm:$0xf]
        %v795 = vld [vmem:[%s673 + $0x8] sm:$0xf]
        %v796 = vld [vmem:[%s673 + $0xc] sm:$0xf]
        %v797 = vld [vmem:[%s676] sm:$0x1]
        %v799 = vlaneseq
        %v800 = vshrl.u32 %v799, 7
        %v801 = vsub.s32 0, %v800
        %v802 = vrot.slane %v797, %v801
        %v808 = vunpack.c.l.b16 %v793
        %v809 = vunpack.c.l.b16 %v794
        %v810 = vunpack.c.l.b16 %v795
        %v811 = vunpack.c.l.b16 %v796
        %v812 = vpack.c.b16 %v809, %v808
        %v813 = vpack.c.b16 %v811, %v810
        %vm816 = vcmask 261120
        %v818 = vsel %vm816, %v791, 0
        %v821 = vsel %vm816, %v792, 0
        %823 = vmatprep.subr.bf16.mxu0 0
        %824 = vmatpush1.bf16.msra.mxu0 0
        %825 = vmatprep.subr.bf16.mxu0 0
        %826 = vmatpush1.bf16.msra.mxu0 0
        %827 = vmatprep.subr.bf16.mxu0 0
        %828 = vmatpush1.bf16.msra.mxu0 0
        %829 = vmatprep.subr.bf16.mxu0 0
        %830 = vmatpush1.bf16.msra.mxu0 0
        %831 = vmatprep.subr.bf16.mxu0 0
        %832 = vmatpush1.bf16.msra.mxu0 0
        %833 = vmatprep.subr.bf16.mxu0 0
        %834 = vmatpush1.bf16.msra.mxu0 0
        %835 = vmatprep.subr.bf16.mxu0 0
        %836 = vmatpush1.bf16.msra.mxu0 %v813
        %837 = vmatprep.subr.bf16.mxu0 0
        %838 = vmatpush1.bf16.msra.mxu0 %v812
        %839 = vmatprep.subr.bf16.mxu0 0
        %840 = vmatpush2.bf16.msra.mxu0 0
        %841 = vmatprep.subr.bf16.mxu0 0
        %842 = vmatpush2.bf16.msra.mxu0 0
        %843 = vmatprep.subr.bf16.mxu0 0
        %844 = vmatpush2.bf16.msra.mxu0 0
        %845 = vmatprep.subr.bf16.mxu0 0
        %846 = vmatpush2.bf16.msra.mxu0 0
        %847 = vmatprep.subr.bf16.mxu0 0
        %848 = vmatpush2.bf16.msra.mxu0 0
        %849 = vmatprep.subr.bf16.mxu0 0
        %850 = vmatpush2.bf16.msra.mxu0 0
        %851 = vmatprep.subr.bf16.mxu0 0
        %852 = vmatpush2.bf16.msra.mxu0 0
        %853 = vmatprep.subr.bf16.mxu0 0
        %854 = vmatpush2.bf16.msra.mxu0 0
        %855 = vmatprep.mubr.bf16.mxu0 0
        %856 = vmatmul.mubr.bf16.gmra.mxu0 %v818
        %v857 = vpop.f32.mrf.mxu0
        %v858 = vadd.f32 %v802, %v857
        %v859 = vpop.f32.mrf.mxu0
        %v860 = vpop.f32.mrf.mxu0
        %v861 = vadd.f32 %v802, %v860
        %v862 = vpop.f32.mrf.mxu0
        %863 = vmatprep.mubr.bf16.mxu0 0
        %864 = vmatmul.mubr.bf16.gmra.mxu0 %v821
        %v865 = vpop.f32.mrf.mxu0
        %v866 = vadd.f32 %v802, %v865
        %v867 = vpop.f32.mrf.mxu0
        %v868 = vpop.f32.mrf.mxu0
        %v869 = vadd.f32 %v802, %v868
        %v870 = vpop.f32.mrf.mxu0
        %871 = vdwg.mxu0
        %874 = vrot.lane.b32.xlu0 %v858, 96
        %v875 = vpop.permute.xlu0 %874
        %876 = vrot.lane.b32.xlu0 %v861, 96
        %v877 = vpop.permute.xlu0 %876
        %vm878 = vcmask 130048
        %v879 = vsel %vm878, %v858, 0
        %v881 = vsel %vm878, %v861, 0
        %v883 = vsel %vm878, %v875, 0
        %v885 = vsel %vm878, %v877, 0
        %887 = vmatprep.subr.mxu0 0.0
        %888 = vmatpush1.xpose.msra.mxu0 0.0
        %889 = vmatprep.subr.mxu0 0.0
        %890 = vmatpush1.xpose.msra.mxu0 0.0
        %891 = vmatprep.subr.mxu0 0.0
        %892 = vmatpush1.xpose.msra.mxu0 0.0
        %893 = vmatprep.subr.mxu0 0.0
        %894 = vmatpush1.xpose.msra.mxu0 0.0
        %895 = vmatprep.subr.mxu0 0.0
        %896 = vmatpush1.xpose.msra.mxu0 0.0
        %897 = vmatprep.subr.mxu0 0.0
        %898 = vmatpush1.xpose.msra.mxu0 0.0
        %899 = vmatprep.subr.mxu0 0.0
        %900 = vmatpush1.xpose.msra.mxu0 0.0
        %901 = vmatprep.subr.mxu0 0.0
        %902 = vmatpush1.xpose.msra.mxu0 0.0
        %903 = vmatprep.subr.mxu0 0.0
        %904 = vmatpush1.xpose.msra.mxu0 0.0
        %905 = vmatprep.subr.mxu0 0.0
        %906 = vmatpush1.xpose.msra.mxu0 0.0
        %907 = vmatprep.subr.mxu0 0.0
        %908 = vmatpush1.xpose.msra.mxu0 0.0
        %909 = vmatprep.subr.mxu0 0.0
        %910 = vmatpush1.xpose.msra.mxu0 0.0
        %911 = vmatprep.subr.mxu0 0.0
        %912 = vmatpush1.xpose.msra.mxu0 0.0
        %913 = vmatprep.subr.mxu0 0.0
        %914 = vmatpush1.xpose.msra.mxu0 0.0
        %915 = vmatprep.subr.mxu0 0.0
        %916 = vmatpush1.xpose.msra.mxu0 %v885
        %917 = vmatprep.subr.mxu0 0.0
        %918 = vmatpush1.xpose.msra.mxu0 %v883
        %919 = vmatprep.subr.mxu0 0.0
        %920 = vmatpush2.xpose.msra.mxu0 0.0
        %921 = vmatprep.subr.mxu0 0.0
        %922 = vmatpush2.xpose.msra.mxu0 0.0
        %923 = vmatprep.subr.mxu0 0.0
        %924 = vmatpush2.xpose.msra.mxu0 0.0
        %925 = vmatprep.subr.mxu0 0.0
        %926 = vmatpush2.xpose.msra.mxu0 0.0
        %927 = vmatprep.subr.mxu0 0.0
        %928 = vmatpush2.xpose.msra.mxu0 0.0
        %929 = vmatprep.subr.mxu0 0.0
        %930 = vmatpush2.xpose.msra.mxu0 0.0
        %931 = vmatprep.subr.mxu0 0.0
        %932 = vmatpush2.xpose.msra.mxu0 0.0
        %933 = vmatprep.subr.mxu0 0.0
        %934 = vmatpush2.xpose.msra.mxu0 0.0
        %935 = vmatprep.subr.mxu0 0.0
        %936 = vmatpush2.xpose.msra.mxu0 0.0
        %937 = vmatprep.subr.mxu0 0.0
        %938 = vmatpush2.xpose.msra.mxu0 0.0
        %939 = vmatprep.subr.mxu0 0.0
        %940 = vmatpush2.xpose.msra.mxu0 0.0
        %941 = vmatprep.subr.mxu0 0.0
        %942 = vmatpush2.xpose.msra.mxu0 0.0
        %943 = vmatprep.subr.mxu0 0.0
        %944 = vmatpush2.xpose.msra.mxu0 0.0
        %945 = vmatprep.subr.mxu0 0.0
        %946 = vmatpush2.xpose.msra.mxu0 0.0
        %947 = vmatprep.subr.mxu0 0.0
        %948 = vmatpush2.xpose.msra.mxu0 0.0
        %949 = vmatprep.subr.mxu0 0.0
        %950 = vmatpush2.xpose.msra.mxu0 0.0
        %951 = vmatprep.mubr.f32.mxu0 0.0
        %952 = vmatmul.mubr.f32.gmra.mxu0 %v879
        %v953 = vpop.f32.mrf.mxu0
        %v954 = vadd.f32 0.0, %v953
        %v955 = vpop.f32.mrf.mxu0
        %956 = vmatprep.mubr.f32.mxu0 0.0
        %957 = vmatmul.mubr.f32.gmra.mxu0 %v881
        %v958 = vpop.f32.mrf.mxu0
        %v959 = vadd.f32 0.0, %v958
        %v960 = vpop.f32.mrf.mxu0
        %961 = vdwg.mxu0
        %964 = vrot.lane.b32.xlu0 %v866, 96
        %v965 = vpop.permute.xlu0 %964
        %966 = vrot.lane.b32.xlu0 %v869, 96
        %v967 = vpop.permute.xlu0 %966
        %v968 = vsel %vm878, %v866, 0
        %v970 = vsel %vm878, %v869, 0
        %v972 = vsel %vm878, %v965, 0
        %v974 = vsel %vm878, %v967, 0
        %976 = vmatprep.subr.mxu0 0.0
        %977 = vmatpush1.xpose.msra.mxu0 0.0
        %978 = vmatprep.subr.mxu0 0.0
        %979 = vmatpush1.xpose.msra.mxu0 0.0
        %980 = vmatprep.subr.mxu0 0.0
        %981 = vmatpush1.xpose.msra.mxu0 0.0
        %982 = vmatprep.subr.mxu0 0.0
        %983 = vmatpush1.xpose.msra.mxu0 0.0
        %984 = vmatprep.subr.mxu0 0.0
        %985 = vmatpush1.xpose.msra.mxu0 0.0
        %986 = vmatprep.subr.mxu0 0.0
        %987 = vmatpush1.xpose.msra.mxu0 0.0
        %988 = vmatprep.subr.mxu0 0.0
        %989 = vmatpush1.xpose.msra.mxu0 0.0
        %990 = vmatprep.subr.mxu0 0.0
        %991 = vmatpush1.xpose.msra.mxu0 0.0
        %992 = vmatprep.subr.mxu0 0.0
        %993 = vmatpush1.xpose.msra.mxu0 0.0
        %994 = vmatprep.subr.mxu0 0.0
        %995 = vmatpush1.xpose.msra.mxu0 0.0
        %996 = vmatprep.subr.mxu0 0.0
        %997 = vmatpush1.xpose.msra.mxu0 0.0
        %998 = vmatprep.subr.mxu0 0.0
        %999 = vmatpush1.xpose.msra.mxu0 0.0
        %1000 = vmatprep.subr.mxu0 0.0
        %1001 = vmatpush1.xpose.msra.mxu0 0.0
        %1002 = vmatprep.subr.mxu0 0.0
        %1003 = vmatpush1.xpose.msra.mxu0 0.0
        %1004 = vmatprep.subr.mxu0 0.0
        %1005 = vmatpush1.xpose.msra.mxu0 %v974
        %1006 = vmatprep.subr.mxu0 0.0
        %1007 = vmatpush1.xpose.msra.mxu0 %v972
        %1008 = vmatprep.subr.mxu0 0.0
        %1009 = vmatpush2.xpose.msra.mxu0 0.0
        %1010 = vmatprep.subr.mxu0 0.0
        %1011 = vmatpush2.xpose.msra.mxu0 0.0
        %1012 = vmatprep.subr.mxu0 0.0
        %1013 = vmatpush2.xpose.msra.mxu0 0.0
        %1014 = vmatprep.subr.mxu0 0.0
        %1015 = vmatpush2.xpose.msra.mxu0 0.0
        %1016 = vmatprep.subr.mxu0 0.0
        %1017 = vmatpush2.xpose.msra.mxu0 0.0
        %1018 = vmatprep.subr.mxu0 0.0
        %1019 = vmatpush2.xpose.msra.mxu0 0.0
        %1020 = vmatprep.subr.mxu0 0.0
        %1021 = vmatpush2.xpose.msra.mxu0 0.0
        %1022 = vmatprep.subr.mxu0 0.0
        %1023 = vmatpush2.xpose.msra.mxu0 0.0
        %1024 = vmatprep.subr.mxu0 0.0
        %1025 = vmatpush2.xpose.msra.mxu0 0.0
        %1026 = vmatprep.subr.mxu0 0.0
        %1027 = vmatpush2.xpose.msra.mxu0 0.0
        %1028 = vmatprep.subr.mxu0 0.0
        %1029 = vmatpush2.xpose.msra.mxu0 0.0
        %1030 = vmatprep.subr.mxu0 0.0
        %1031 = vmatpush2.xpose.msra.mxu0 0.0
        %1032 = vmatprep.subr.mxu0 0.0
        %1033 = vmatpush2.xpose.msra.mxu0 0.0
        %1034 = vmatprep.subr.mxu0 0.0
        %1035 = vmatpush2.xpose.msra.mxu0 0.0
        %1036 = vmatprep.subr.mxu0 0.0
        %1037 = vmatpush2.xpose.msra.mxu0 0.0
        %1038 = vmatprep.subr.mxu0 0.0
        %1039 = vmatpush2.xpose.msra.mxu0 0.0
        %1040 = vmatprep.mubr.f32.mxu0 0.0
        %1041 = vmatmul.mubr.f32.gmra.mxu0 %v968
        %v1042 = vpop.f32.mrf.mxu0
        %v1043 = vadd.f32 0.0, %v1042
        %v1044 = vpop.f32.mrf.mxu0
        %1045 = vmatprep.mubr.f32.mxu0 0.0
        %1046 = vmatmul.mubr.f32.gmra.mxu0 %v970
        %v1047 = vpop.f32.mrf.mxu0
        %v1048 = vadd.f32 0.0, %v1047
        %v1049 = vpop.f32.mrf.mxu0
        %1050 = vdwg.mxu0
        %v1051 = vmul.f32 %v954, 0.25
        %v1052 = vmul.f32 %v959, 0.25
        %v1053 = vmul.f32 %v1043, 0.25
        %v1054 = vmul.f32 %v1048, 0.25
        %v1055 = vsel %vm757, 1, 0
        %v1056 = vsel %vm758, 1, 0
        %vm1057 = vcmp.eq.s32.totalorder %v1055, 1
        %vm1058 = vcmp.eq.s32.totalorder %v1056, 1
        %v1059 = vsel %vm1057, -1e+09, %v1051
        %v1060 = vsel %vm1057, -1e+09, %v1052
        %v1061 = vsel %vm1058, -1e+09, %v1053
        %v1062 = vsel %vm1058, -1e+09, %v1054
        %v1063 = vsel %vm878, %v1059, -inf
        %1064 = vmax.xlane.f32.xlu0 %v1063
        %v1065 = vpop.xlane.xlu0 %1064
        %v1066 = vsel %vm878, %v1060, -inf
        %1067 = vmax.xlane.f32.xlu0 %v1066
        %v1068 = vpop.xlane.xlu0 %1067
        %v1069 = vsel %vm878, %v1061, -inf
        %1070 = vmax.xlane.f32.xlu0 %v1069
        %v1071 = vpop.xlane.xlu0 %1070
        %v1072 = vsel %vm878, %v1062, -inf
        %1073 = vmax.xlane.f32.xlu0 %v1072
        %v1074 = vpop.xlane.xlu0 %1073
        %v1075 = vsub.f32 %v1059, %v1065
        %v1076 = vsub.f32 %v1060, %v1068
        %v1077 = vsub.f32 %v1061, %v1071
        %v1078 = vsub.f32 %v1062, %v1074
        %v1079 = vmul.f32 %v1075, 1.442695
        %v1080 = vpow.pop %v1079
        %v1081 = vmul.f32 %v1076, 1.442695
        %v1082 = vpow.pop %v1081
        %v1083 = vmul.f32 %v1077, 1.442695
        %v1084 = vpow.pop %v1083
        %v1085 = vmul.f32 %v1078, 1.442695
        %v1086 = vpow.pop %v1085
        %v1087 = vsel %vm878, %v1080, 0.0
        %1088 = vadd.xlane.f32.xlu0 %v1087
        %v1089 = vpop.xlane.xlu0 %1088
        %v1090 = vsel %vm878, %v1082, 0.0
        %1091 = vadd.xlane.f32.xlu0 %v1090
        %v1092 = vpop.xlane.xlu0 %1091
        %v1093 = vsel %vm878, %v1084, 0.0
        %1094 = vadd.xlane.f32.xlu0 %v1093
        %v1095 = vpop.xlane.xlu0 %1094
        %v1096 = vsel %vm878, %v1086, 0.0
        %1097 = vadd.xlane.f32.xlu0 %v1096
        %v1098 = vpop.xlane.xlu0 %1097
        %v1099 = vrcp.pop %v1089
        %v1100 = vrcp.pop %v1092
        %v1101 = vrcp.pop %v1095
        %v1102 = vrcp.pop %v1098
        %v1103 = vmul.f32 %v1080, %v1099
        %v1104 = vmul.f32 %v1082, %v1100
        %v1105 = vmul.f32 %v1084, %v1101
        %v1106 = vmul.f32 %v1086, %v1102
        %1107 = vrot.lane.b32.xlu0 %v858, 64
        %v1108 = vpop.permute.xlu0 %1107
        %1109 = vrot.lane.b32.xlu0 %v861, 64
        %v1110 = vpop.permute.xlu0 %1109
        %v1114 = vsel %vm878, %v1103, 0
        %v1117 = vsel %vm878, %v1104, 0
        %1119 = vmatprep.subr.mxu0 0.0
        %1120 = vmatpush1.msra.mxu0 0.0
        %1121 = vmatprep.subr.mxu0 0.0
        %1122 = vmatpush1.msra.mxu0 0.0
        %1123 = vmatprep.subr.mxu0 0.0
        %1124 = vmatpush1.msra.mxu0 0.0
        %1125 = vmatprep.subr.mxu0 0.0
        %1126 = vmatpush1.msra.mxu0 0.0
        %1127 = vmatprep.subr.mxu0 0.0
        %1128 = vmatpush1.msra.mxu0 0.0
        %1129 = vmatprep.subr.mxu0 0.0
        %1130 = vmatpush1.msra.mxu0 0.0
        %1131 = vmatprep.subr.mxu0 0.0
        %1132 = vmatpush1.msra.mxu0 0.0
        %1133 = vmatprep.subr.mxu0 0.0
        %1134 = vmatpush1.msra.mxu0 0.0
        %1135 = vmatprep.subr.mxu0 0.0
        %1136 = vmatpush1.msra.mxu0 0.0
        %1137 = vmatprep.subr.mxu0 0.0
        %1138 = vmatpush1.msra.mxu0 0.0
        %1139 = vmatprep.subr.mxu0 0.0
        %1140 = vmatpush1.msra.mxu0 0.0
        %1141 = vmatprep.subr.mxu0 0.0
        %1142 = vmatpush1.msra.mxu0 0.0
        %1143 = vmatprep.subr.mxu0 0.0
        %1144 = vmatpush1.msra.mxu0 0.0
        %1145 = vmatprep.subr.mxu0 0.0
        %1146 = vmatpush1.msra.mxu0 0.0
        %1147 = vmatprep.subr.mxu0 0.0
        %1148 = vmatpush1.msra.mxu0 %v1110
        %1149 = vmatprep.subr.mxu0 0.0
        %1150 = vmatpush1.msra.mxu0 %v1108
        %1151 = vmatprep.subr.mxu0 0.0
        %1152 = vmatpush2.msra.mxu0 0.0
        %1153 = vmatprep.subr.mxu0 0.0
        %1154 = vmatpush2.msra.mxu0 0.0
        %1155 = vmatprep.subr.mxu0 0.0
        %1156 = vmatpush2.msra.mxu0 0.0
        %1157 = vmatprep.subr.mxu0 0.0
        %1158 = vmatpush2.msra.mxu0 0.0
        %1159 = vmatprep.subr.mxu0 0.0
        %1160 = vmatpush2.msra.mxu0 0.0
        %1161 = vmatprep.subr.mxu0 0.0
        %1162 = vmatpush2.msra.mxu0 0.0
        %1163 = vmatprep.subr.mxu0 0.0
        %1164 = vmatpush2.msra.mxu0 0.0
        %1165 = vmatprep.subr.mxu0 0.0
        %1166 = vmatpush2.msra.mxu0 0.0
        %1167 = vmatprep.subr.mxu0 0.0
        %1168 = vmatpush2.msra.mxu0 0.0
        %1169 = vmatprep.subr.mxu0 0.0
        %1170 = vmatpush2.msra.mxu0 0.0
        %1171 = vmatprep.subr.mxu0 0.0
        %1172 = vmatpush2.msra.mxu0 0.0
        %1173 = vmatprep.subr.mxu0 0.0
        %1174 = vmatpush2.msra.mxu0 0.0
        %1175 = vmatprep.subr.mxu0 0.0
        %1176 = vmatpush2.msra.mxu0 0.0
        %1177 = vmatprep.subr.mxu0 0.0
        %1178 = vmatpush2.msra.mxu0 0.0
        %1179 = vmatprep.subr.mxu0 0.0
        %1180 = vmatpush2.msra.mxu0 0.0
        %1181 = vmatprep.subr.mxu0 0.0
        %1182 = vmatpush2.msra.mxu0 0.0
        %1183 = vmatprep.mubr.f32.mxu0 0.0
        %1184 = vmatmul.mubr.f32.gmra.mxu0 %v1114
        %v1185 = vpop.f32.mrf.mxu0
        %v1186 = vadd.f32 0.0, %v1185
        %v1187 = vpop.f32.mrf.mxu0
        %1188 = vmatprep.mubr.f32.mxu0 0.0
        %1189 = vmatmul.mubr.f32.gmra.mxu0 %v1117
        %v1190 = vpop.f32.mrf.mxu0
        %v1191 = vadd.f32 0.0, %v1190
        %v1192 = vpop.f32.mrf.mxu0
        %1193 = vdwg.mxu0
        %1194 = vrot.lane.b32.xlu0 %v866, 64
        %v1195 = vpop.permute.xlu0 %1194
        %1196 = vrot.lane.b32.xlu0 %v869, 64
        %v1197 = vpop.permute.xlu0 %1196
        %v1201 = vsel %vm878, %v1105, 0
        %v1204 = vsel %vm878, %v1106, 0
        %1206 = vmatprep.subr.mxu0 0.0
        %1207 = vmatpush1.msra.mxu0 0.0
        %1208 = vmatprep.subr.mxu0 0.0
        %1209 = vmatpush1.msra.mxu0 0.0
        %1210 = vmatprep.subr.mxu0 0.0
        %1211 = vmatpush1.msra.mxu0 0.0
        %1212 = vmatprep.subr.mxu0 0.0
        %1213 = vmatpush1.msra.mxu0 0.0
        %1214 = vmatprep.subr.mxu0 0.0
        %1215 = vmatpush1.msra.mxu0 0.0
        %1216 = vmatprep.subr.mxu0 0.0
        %1217 = vmatpush1.msra.mxu0 0.0
        %1218 = vmatprep.subr.mxu0 0.0
        %1219 = vmatpush1.msra.mxu0 0.0
        %1220 = vmatprep.subr.mxu0 0.0
        %1221 = vmatpush1.msra.mxu0 0.0
        %1222 = vmatprep.subr.mxu0 0.0
        %1223 = vmatpush1.msra.mxu0 0.0
        %1224 = vmatprep.subr.mxu0 0.0
        %1225 = vmatpush1.msra.mxu0 0.0
        %1226 = vmatprep.subr.mxu0 0.0
        %1227 = vmatpush1.msra.mxu0 0.0
        %1228 = vmatprep.subr.mxu0 0.0
        %1229 = vmatpush1.msra.mxu0 0.0
        %1230 = vmatprep.subr.mxu0 0.0
        %1231 = vmatpush1.msra.mxu0 0.0
        %1232 = vmatprep.subr.mxu0 0.0
        %1233 = vmatpush1.msra.mxu0 0.0
        %1234 = vmatprep.subr.mxu0 0.0
        %1235 = vmatpush1.msra.mxu0 %v1197
        %1236 = vmatprep.subr.mxu0 0.0
        %1237 = vmatpush1.msra.mxu0 %v1195
        %1238 = vmatprep.subr.mxu0 0.0
        %1239 = vmatpush2.msra.mxu0 0.0
        %1240 = vmatprep.subr.mxu0 0.0
        %1241 = vmatpush2.msra.mxu0 0.0
        %1242 = vmatprep.subr.mxu0 0.0
        %1243 = vmatpush2.msra.mxu0 0.0
        %1244 = vmatprep.subr.mxu0 0.0
        %1245 = vmatpush2.msra.mxu0 0.0
        %1246 = vmatprep.subr.mxu0 0.0
        %1247 = vmatpush2.msra.mxu0 0.0
        %1248 = vmatprep.subr.mxu0 0.0
        %1249 = vmatpush2.msra.mxu0 0.0
        %1250 = vmatprep.subr.mxu0 0.0
        %1251 = vmatpush2.msra.mxu0 0.0
        %1252 = vmatprep.subr.mxu0 0.0
        %1253 = vmatpush2.msra.mxu0 0.0
        %1254 = vmatprep.subr.mxu0 0.0
        %1255 = vmatpush2.msra.mxu0 0.0
        %1256 = vmatprep.subr.mxu0 0.0
        %1257 = vmatpush2.msra.mxu0 0.0
        %1258 = vmatprep.subr.mxu0 0.0
        %1259 = vmatpush2.msra.mxu0 0.0
        %1260 = vmatprep.subr.mxu0 0.0
        %1261 = vmatpush2.msra.mxu0 0.0
        %1262 = vmatprep.subr.mxu0 0.0
        %1263 = vmatpush2.msra.mxu0 0.0
        %1264 = vmatprep.subr.mxu0 0.0
        %1265 = vmatpush2.msra.mxu0 0.0
        %1266 = vmatprep.subr.mxu0 0.0
        %1267 = vmatpush2.msra.mxu0 0.0
        %1268 = vmatprep.subr.mxu0 0.0
        %1269 = vmatpush2.msra.mxu0 0.0
        %1270 = vmatprep.mubr.f32.mxu0 0.0
        %1271 = vmatmul.mubr.f32.gmra.mxu0 %v1201
        %v1272 = vpop.f32.mrf.mxu0
        %v1273 = vadd.f32 0.0, %v1272
        %v1274 = vpop.f32.mrf.mxu0
        %1275 = vmatprep.mubr.f32.mxu0 0.0
        %1276 = vmatmul.mubr.f32.gmra.mxu0 %v1204
        %v1277 = vpop.f32.mrf.mxu0
        %v1278 = vadd.f32 0.0, %v1277
        %v1279 = vpop.f32.mrf.mxu0
        %1280 = vdwg.mxu0
        %v1281 = vpack.c.bf16 %v1191, %v1186
        %v1282 = vpack.c.bf16 %v1278, %v1273
        %v1283 = vld [vmem:[%s681] sm:$0xf]
        %v1284 = vld [vmem:[%s681 + $0x4] sm:$0xf]
        %1285 = vrot.lane.b32.xlu0 %v858, 112
        %v1286 = vpop.permute.xlu0 %1285
        %1287 = vrot.lane.b32.xlu0 %v861, 112
        %v1288 = vpop.permute.xlu0 %1287
        %1289 = vrot.lane.b32.xlu0 %v858, 80
        %v1290 = vpop.permute.xlu0 %1289
        %1291 = vrot.lane.b32.xlu0 %v861, 80
        %v1292 = vpop.permute.xlu0 %1291
        %v1293 = vsel %vm878, %v1286, 0
        %v1295 = vsel %vm878, %v1288, 0
        %v1297 = vsel %vm878, %v1290, 0
        %v1299 = vsel %vm878, %v1292, 0
        %1301 = vmatprep.subr.mxu0 0.0
        %1302 = vmatpush1.xpose.msra.mxu0 0.0
        %1303 = vmatprep.subr.mxu0 0.0
        %1304 = vmatpush1.xpose.msra.mxu0 0.0
        %1305 = vmatprep.subr.mxu0 0.0
        %1306 = vmatpush1.xpose.msra.mxu0 0.0
        %1307 = vmatprep.subr.mxu0 0.0
        %1308 = vmatpush1.xpose.msra.mxu0 0.0
        %1309 = vmatprep.subr.mxu0 0.0
        %1310 = vmatpush1.xpose.msra.mxu0 0.0
        %1311 = vmatprep.subr.mxu0 0.0
        %1312 = vmatpush1.xpose.msra.mxu0 0.0
        %1313 = vmatprep.subr.mxu0 0.0
        %1314 = vmatpush1.xpose.msra.mxu0 0.0
        %1315 = vmatprep.subr.mxu0 0.0
        %1316 = vmatpush1.xpose.msra.mxu0 0.0
        %1317 = vmatprep.subr.mxu0 0.0
        %1318 = vmatpush1.xpose.msra.mxu0 0.0
        %1319 = vmatprep.subr.mxu0 0.0
        %1320 = vmatpush1.xpose.msra.mxu0 0.0
        %1321 = vmatprep.subr.mxu0 0.0
        %1322 = vmatpush1.xpose.msra.mxu0 0.0
        %1323 = vmatprep.subr.mxu0 0.0
        %1324 = vmatpush1.xpose.msra.mxu0 0.0
        %1325 = vmatprep.subr.mxu0 0.0
        %1326 = vmatpush1.xpose.msra.mxu0 0.0
        %1327 = vmatprep.subr.mxu0 0.0
        %1328 = vmatpush1.xpose.msra.mxu0 0.0
        %1329 = vmatprep.subr.mxu0 0.0
        %1330 = vmatpush1.xpose.msra.mxu0 %v1299
        %1331 = vmatprep.subr.mxu0 0.0
        %1332 = vmatpush1.xpose.msra.mxu0 %v1297
        %1333 = vmatprep.subr.mxu0 0.0
        %1334 = vmatpush2.xpose.msra.mxu0 0.0
        %1335 = vmatprep.subr.mxu0 0.0
        %1336 = vmatpush2.xpose.msra.mxu0 0.0
        %1337 = vmatprep.subr.mxu0 0.0
        %1338 = vmatpush2.xpose.msra.mxu0 0.0
        %1339 = vmatprep.subr.mxu0 0.0
        %1340 = vmatpush2.xpose.msra.mxu0 0.0
        %1341 = vmatprep.subr.mxu0 0.0
        %1342 = vmatpush2.xpose.msra.mxu0 0.0
        %1343 = vmatprep.subr.mxu0 0.0
        %1344 = vmatpush2.xpose.msra.mxu0 0.0
        %1345 = vmatprep.subr.mxu0 0.0
        %1346 = vmatpush2.xpose.msra.mxu0 0.0
        %1347 = vmatprep.subr.mxu0 0.0
        %1348 = vmatpush2.xpose.msra.mxu0 0.0
        %1349 = vmatprep.subr.mxu0 0.0
        %1350 = vmatpush2.xpose.msra.mxu0 0.0
        %1351 = vmatprep.subr.mxu0 0.0
        %1352 = vmatpush2.xpose.msra.mxu0 0.0
        %1353 = vmatprep.subr.mxu0 0.0
        %1354 = vmatpush2.xpose.msra.mxu0 0.0
        %1355 = vmatprep.subr.mxu0 0.0
        %1356 = vmatpush2.xpose.msra.mxu0 0.0
        %1357 = vmatprep.subr.mxu0 0.0
        %1358 = vmatpush2.xpose.msra.mxu0 0.0
        %1359 = vmatprep.subr.mxu0 0.0
        %1360 = vmatpush2.xpose.msra.mxu0 0.0
        %1361 = vmatprep.subr.mxu0 0.0
        %1362 = vmatpush2.xpose.msra.mxu0 0.0
        %1363 = vmatprep.subr.mxu0 0.0
        %1364 = vmatpush2.xpose.msra.mxu0 0.0
        %1365 = vmatprep.mubr.f32.mxu0 0.0
        %1366 = vmatmul.mubr.f32.gmra.mxu0 %v1293
        %v1367 = vpop.f32.mrf.mxu0
        %v1368 = vadd.f32 0.0, %v1367
        %v1369 = vpop.f32.mrf.mxu0
        %1370 = vmatprep.mubr.f32.mxu0 0.0
        %1371 = vmatmul.mubr.f32.gmra.mxu0 %v1295
        %v1372 = vpop.f32.mrf.mxu0
        %v1373 = vadd.f32 0.0, %v1372
        %v1374 = vpop.f32.mrf.mxu0
        %1375 = vdwg.mxu0
        %1376 = vrot.lane.b32.xlu0 %v866, 112
        %v1377 = vpop.permute.xlu0 %1376
        %1378 = vrot.lane.b32.xlu0 %v869, 112
        %v1379 = vpop.permute.xlu0 %1378
        %1380 = vrot.lane.b32.xlu0 %v866, 80
        %v1381 = vpop.permute.xlu0 %1380
        %1382 = vrot.lane.b32.xlu0 %v869, 80
        %v1383 = vpop.permute.xlu0 %1382
        %v1384 = vsel %vm878, %v1377, 0
        %v1386 = vsel %vm878, %v1379, 0
        %v1388 = vsel %vm878, %v1381, 0
        %v1390 = vsel %vm878, %v1383, 0
        %1392 = vmatprep.subr.mxu0 0.0
        %1393 = vmatpush1.xpose.msra.mxu0 0.0
        %1394 = vmatprep.subr.mxu0 0.0
        %1395 = vmatpush1.xpose.msra.mxu0 0.0
        %1396 = vmatprep.subr.mxu0 0.0
        %1397 = vmatpush1.xpose.msra.mxu0 0.0
        %1398 = vmatprep.subr.mxu0 0.0
        %1399 = vmatpush1.xpose.msra.mxu0 0.0
        %1400 = vmatprep.subr.mxu0 0.0
        %1401 = vmatpush1.xpose.msra.mxu0 0.0
        %1402 = vmatprep.subr.mxu0 0.0
        %1403 = vmatpush1.xpose.msra.mxu0 0.0
        %1404 = vmatprep.subr.mxu0 0.0
        %1405 = vmatpush1.xpose.msra.mxu0 0.0
        %1406 = vmatprep.subr.mxu0 0.0
        %1407 = vmatpush1.xpose.msra.mxu0 0.0
        %1408 = vmatprep.subr.mxu0 0.0
        %1409 = vmatpush1.xpose.msra.mxu0 0.0
        %1410 = vmatprep.subr.mxu0 0.0
        %1411 = vmatpush1.xpose.msra.mxu0 0.0
        %1412 = vmatprep.subr.mxu0 0.0
        %1413 = vmatpush1.xpose.msra.mxu0 0.0
        %1414 = vmatprep.subr.mxu0 0.0
        %1415 = vmatpush1.xpose.msra.mxu0 0.0
        %1416 = vmatprep.subr.mxu0 0.0
        %1417 = vmatpush1.xpose.msra.mxu0 0.0
        %1418 = vmatprep.subr.mxu0 0.0
        %1419 = vmatpush1.xpose.msra.mxu0 0.0
        %1420 = vmatprep.subr.mxu0 0.0
        %1421 = vmatpush1.xpose.msra.mxu0 %v1390
        %1422 = vmatprep.subr.mxu0 0.0
        %1423 = vmatpush1.xpose.msra.mxu0 %v1388
        %1424 = vmatprep.subr.mxu0 0.0
        %1425 = vmatpush2.xpose.msra.mxu0 0.0
        %1426 = vmatprep.subr.mxu0 0.0
        %1427 = vmatpush2.xpose.msra.mxu0 0.0
        %1428 = vmatprep.subr.mxu0 0.0
        %1429 = vmatpush2.xpose.msra.mxu0 0.0
        %1430 = vmatprep.subr.mxu0 0.0
        %1431 = vmatpush2.xpose.msra.mxu0 0.0
        %1432 = vmatprep.subr.mxu0 0.0
        %1433 = vmatpush2.xpose.msra.mxu0 0.0
        %1434 = vmatprep.subr.mxu0 0.0
        %1435 = vmatpush2.xpose.msra.mxu0 0.0
        %1436 = vmatprep.subr.mxu0 0.0
        %1437 = vmatpush2.xpose.msra.mxu0 0.0
        %1438 = vmatprep.subr.mxu0 0.0
        %1439 = vmatpush2.xpose.msra.mxu0 0.0
        %1440 = vmatprep.subr.mxu0 0.0
        %1441 = vmatpush2.xpose.msra.mxu0 0.0
        %1442 = vmatprep.subr.mxu0 0.0
        %1443 = vmatpush2.xpose.msra.mxu0 0.0
        %1444 = vmatprep.subr.mxu0 0.0
        %1445 = vmatpush2.xpose.msra.mxu0 0.0
        %1446 = vmatprep.subr.mxu0 0.0
        %1447 = vmatpush2.xpose.msra.mxu0 0.0
        %1448 = vmatprep.subr.mxu0 0.0
        %1449 = vmatpush2.xpose.msra.mxu0 0.0
        %1450 = vmatprep.subr.mxu0 0.0
        %1451 = vmatpush2.xpose.msra.mxu0 0.0
        %1452 = vmatprep.subr.mxu0 0.0
        %1453 = vmatpush2.xpose.msra.mxu0 0.0
        %1454 = vmatprep.subr.mxu0 0.0
        %1455 = vmatpush2.xpose.msra.mxu0 0.0
        %1456 = vmatprep.mubr.f32.mxu0 0.0
        %1457 = vmatmul.mubr.f32.gmra.mxu0 %v1384
        %v1458 = vpop.f32.mrf.mxu0
        %v1459 = vadd.f32 0.0, %v1458
        %v1460 = vpop.f32.mrf.mxu0
        %1461 = vmatprep.mubr.f32.mxu0 0.0
        %1462 = vmatmul.mubr.f32.gmra.mxu0 %v1386
        %v1463 = vpop.f32.mrf.mxu0
        %v1464 = vadd.f32 0.0, %v1463
        %v1465 = vpop.f32.mrf.mxu0
        %1466 = vdwg.mxu0
        %v1467 = vmul.f32 %v1368, 0.25
        %v1468 = vmul.f32 %v1373, 0.25
        %v1469 = vmul.f32 %v1459, 0.25
        %v1470 = vmul.f32 %v1464, 0.25
        %v1471 = vsel %vm1057, -1e+09, %v1467
        %v1472 = vsel %vm1057, -1e+09, %v1468
        %v1473 = vsel %vm1058, -1e+09, %v1469
        %v1474 = vsel %vm1058, -1e+09, %v1470
        %v1475 = vsel %vm878, %v1471, -inf
        %1476 = vmax.xlane.f32.xlu0 %v1475
        %v1477 = vpop.xlane.xlu0 %1476
        %v1478 = vsel %vm878, %v1472, -inf
        %1479 = vmax.xlane.f32.xlu0 %v1478
        %v1480 = vpop.xlane.xlu0 %1479
        %v1481 = vsel %vm878, %v1473, -inf
        %1482 = vmax.xlane.f32.xlu0 %v1481
        %v1483 = vpop.xlane.xlu0 %1482
        %v1484 = vsel %vm878, %v1474, -inf
        %1485 = vmax.xlane.f32.xlu0 %v1484
        %v1486 = vpop.xlane.xlu0 %1485
        %v1487 = vsub.f32 %v1471, %v1477
        %v1488 = vsub.f32 %v1472, %v1480
        %v1489 = vsub.f32 %v1473, %v1483
        %v1490 = vsub.f32 %v1474, %v1486
        %v1491 = vmul.f32 %v1487, 1.442695
        %v1492 = vpow.pop %v1491
        %v1493 = vmul.f32 %v1488, 1.442695
        %v1494 = vpow.pop %v1493
        %v1495 = vmul.f32 %v1489, 1.442695
        %v1496 = vpow.pop %v1495
        %v1497 = vmul.f32 %v1490, 1.442695
        %v1498 = vpow.pop %v1497
        %v1499 = vsel %vm878, %v1492, 0.0
        %1500 = vadd.xlane.f32.xlu0 %v1499
        %v1501 = vpop.xlane.xlu0 %1500
        %v1502 = vsel %vm878, %v1494, 0.0
        %1503 = vadd.xlane.f32.xlu0 %v1502
        %v1504 = vpop.xlane.xlu0 %1503
        %v1505 = vsel %vm878, %v1496, 0.0
        %1506 = vadd.xlane.f32.xlu0 %v1505
        %v1507 = vpop.xlane.xlu0 %1506
        %v1508 = vsel %vm878, %v1498, 0.0
        %1509 = vadd.xlane.f32.xlu0 %v1508
        %v1510 = vpop.xlane.xlu0 %1509
        %v1511 = vrcp.pop %v1501
        %v1512 = vrcp.pop %v1504
        %v1513 = vrcp.pop %v1507
        %v1514 = vrcp.pop %v1510
        %v1515 = vmul.f32 %v1492, %v1511
        %v1516 = vmul.f32 %v1494, %v1512
        %v1517 = vmul.f32 %v1496, %v1513
        %v1518 = vmul.f32 %v1498, %v1514
        %1519 = vrot.lane.b32.xlu0 %v858, 48
        %v1520 = vpop.permute.xlu0 %1519
        %1521 = vrot.lane.b32.xlu0 %v861, 48
        %v1522 = vpop.permute.xlu0 %1521
        %v1526 = vsel %vm878, %v1515, 0
        %v1529 = vsel %vm878, %v1516, 0
        %1531 = vmatprep.subr.mxu0 0.0
        %1532 = vmatpush1.msra.mxu0 0.0
        %1533 = vmatprep.subr.mxu0 0.0
        %1534 = vmatpush1.msra.mxu0 0.0
        %1535 = vmatprep.subr.mxu0 0.0
        %1536 = vmatpush1.msra.mxu0 0.0
        %1537 = vmatprep.subr.mxu0 0.0
        %1538 = vmatpush1.msra.mxu0 0.0
        %1539 = vmatprep.subr.mxu0 0.0
        %1540 = vmatpush1.msra.mxu0 0.0
        %1541 = vmatprep.subr.mxu0 0.0
        %1542 = vmatpush1.msra.mxu0 0.0
        %1543 = vmatprep.subr.mxu0 0.0
        %1544 = vmatpush1.msra.mxu0 0.0
        %1545 = vmatprep.subr.mxu0 0.0
        %1546 = vmatpush1.msra.mxu0 0.0
        %1547 = vmatprep.subr.mxu0 0.0
        %1548 = vmatpush1.msra.mxu0 0.0
        %1549 = vmatprep.subr.mxu0 0.0
        %1550 = vmatpush1.msra.mxu0 0.0
        %1551 = vmatprep.subr.mxu0 0.0
        %1552 = vmatpush1.msra.mxu0 0.0
        %1553 = vmatprep.subr.mxu0 0.0
        %1554 = vmatpush1.msra.mxu0 0.0
        %1555 = vmatprep.subr.mxu0 0.0
        %1556 = vmatpush1.msra.mxu0 0.0
        %1557 = vmatprep.subr.mxu0 0.0
        %1558 = vmatpush1.msra.mxu0 0.0
        %1559 = vmatprep.subr.mxu0 0.0
        %1560 = vmatpush1.msra.mxu0 %v1522
        %1561 = vmatprep.subr.mxu0 0.0
        %1562 = vmatpush1.msra.mxu0 %v1520
        %1563 = vmatprep.subr.mxu0 0.0
        %1564 = vmatpush2.msra.mxu0 0.0
        %1565 = vmatprep.subr.mxu0 0.0
        %1566 = vmatpush2.msra.mxu0 0.0
        %1567 = vmatprep.subr.mxu0 0.0
        %1568 = vmatpush2.msra.mxu0 0.0
        %1569 = vmatprep.subr.mxu0 0.0
        %1570 = vmatpush2.msra.mxu0 0.0
        %1571 = vmatprep.subr.mxu0 0.0
        %1572 = vmatpush2.msra.mxu0 0.0
        %1573 = vmatprep.subr.mxu0 0.0
        %1574 = vmatpush2.msra.mxu0 0.0
        %1575 = vmatprep.subr.mxu0 0.0
        %1576 = vmatpush2.msra.mxu0 0.0
        %1577 = vmatprep.subr.mxu0 0.0
        %1578 = vmatpush2.msra.mxu0 0.0
        %1579 = vmatprep.subr.mxu0 0.0
        %1580 = vmatpush2.msra.mxu0 0.0
        %1581 = vmatprep.subr.mxu0 0.0
        %1582 = vmatpush2.msra.mxu0 0.0
        %1583 = vmatprep.subr.mxu0 0.0
        %1584 = vmatpush2.msra.mxu0 0.0
        %1585 = vmatprep.subr.mxu0 0.0
        %1586 = vmatpush2.msra.mxu0 0.0
        %1587 = vmatprep.subr.mxu0 0.0
        %1588 = vmatpush2.msra.mxu0 0.0
        %1589 = vmatprep.subr.mxu0 0.0
        %1590 = vmatpush2.msra.mxu0 0.0
        %1591 = vmatprep.subr.mxu0 0.0
        %1592 = vmatpush2.msra.mxu0 0.0
        %1593 = vmatprep.subr.mxu0 0.0
        %1594 = vmatpush2.msra.mxu0 0.0
        %1595 = vmatprep.mubr.f32.mxu0 0.0
        %1596 = vmatmul.mubr.f32.gmra.mxu0 %v1526
        %v1597 = vpop.f32.mrf.mxu0
        %v1598 = vadd.f32 0.0, %v1597
        %v1599 = vpop.f32.mrf.mxu0
        %1600 = vmatprep.mubr.f32.mxu0 0.0
        %1601 = vmatmul.mubr.f32.gmra.mxu0 %v1529
        %v1602 = vpop.f32.mrf.mxu0
        %v1603 = vadd.f32 0.0, %v1602
        %v1604 = vpop.f32.mrf.mxu0
        %1605 = vdwg.mxu0
        %1606 = vrot.lane.b32.xlu0 %v866, 48
        %v1607 = vpop.permute.xlu0 %1606
        %1608 = vrot.lane.b32.xlu0 %v869, 48
        %v1609 = vpop.permute.xlu0 %1608
        %v1613 = vsel %vm878, %v1517, 0
        %v1616 = vsel %vm878, %v1518, 0
        %1618 = vmatprep.subr.mxu0 0.0
        %1619 = vmatpush1.msra.mxu0 0.0
        %1620 = vmatprep.subr.mxu0 0.0
        %1621 = vmatpush1.msra.mxu0 0.0
        %1622 = vmatprep.subr.mxu0 0.0
        %1623 = vmatpush1.msra.mxu0 0.0
        %1624 = vmatprep.subr.mxu0 0.0
        %1625 = vmatpush1.msra.mxu0 0.0
        %1626 = vmatprep.subr.mxu0 0.0
        %1627 = vmatpush1.msra.mxu0 0.0
        %1628 = vmatprep.subr.mxu0 0.0
        %1629 = vmatpush1.msra.mxu0 0.0
        %1630 = vmatprep.subr.mxu0 0.0
        %1631 = vmatpush1.msra.mxu0 0.0
        %1632 = vmatprep.subr.mxu0 0.0
        %1633 = vmatpush1.msra.mxu0 0.0
        %1634 = vmatprep.subr.mxu0 0.0
        %1635 = vmatpush1.msra.mxu0 0.0
        %1636 = vmatprep.subr.mxu0 0.0
        %1637 = vmatpush1.msra.mxu0 0.0
        %1638 = vmatprep.subr.mxu0 0.0
        %1639 = vmatpush1.msra.mxu0 0.0
        %1640 = vmatprep.subr.mxu0 0.0
        %1641 = vmatpush1.msra.mxu0 0.0
        %1642 = vmatprep.subr.mxu0 0.0
        %1643 = vmatpush1.msra.mxu0 0.0
        %1644 = vmatprep.subr.mxu0 0.0
        %1645 = vmatpush1.msra.mxu0 0.0
        %1646 = vmatprep.subr.mxu0 0.0
        %1647 = vmatpush1.msra.mxu0 %v1609
        %1648 = vmatprep.subr.mxu0 0.0
        %1649 = vmatpush1.msra.mxu0 %v1607
        %1650 = vmatprep.subr.mxu0 0.0
        %1651 = vmatpush2.msra.mxu0 0.0
        %1652 = vmatprep.subr.mxu0 0.0
        %1653 = vmatpush2.msra.mxu0 0.0
        %1654 = vmatprep.subr.mxu0 0.0
        %1655 = vmatpush2.msra.mxu0 0.0
        %1656 = vmatprep.subr.mxu0 0.0
        %1657 = vmatpush2.msra.mxu0 0.0
        %1658 = vmatprep.subr.mxu0 0.0
        %1659 = vmatpush2.msra.mxu0 0.0
        %1660 = vmatprep.subr.mxu0 0.0
        %1661 = vmatpush2.msra.mxu0 0.0
        %1662 = vmatprep.subr.mxu0 0.0
        %1663 = vmatpush2.msra.mxu0 0.0
        %1664 = vmatprep.subr.mxu0 0.0
        %1665 = vmatpush2.msra.mxu0 0.0
        %1666 = vmatprep.subr.mxu0 0.0
        %1667 = vmatpush2.msra.mxu0 0.0
        %1668 = vmatprep.subr.mxu0 0.0
        %1669 = vmatpush2.msra.mxu0 0.0
        %1670 = vmatprep.subr.mxu0 0.0
        %1671 = vmatpush2.msra.mxu0 0.0
        %1672 = vmatprep.subr.mxu0 0.0
        %1673 = vmatpush2.msra.mxu0 0.0
        %1674 = vmatprep.subr.mxu0 0.0
        %1675 = vmatpush2.msra.mxu0 0.0
        %1676 = vmatprep.subr.mxu0 0.0
        %1677 = vmatpush2.msra.mxu0 0.0
        %1678 = vmatprep.subr.mxu0 0.0
        %1679 = vmatpush2.msra.mxu0 0.0
        %1680 = vmatprep.subr.mxu0 0.0
        %1681 = vmatpush2.msra.mxu0 0.0
        %1682 = vmatprep.mubr.f32.mxu0 0.0
        %1683 = vmatmul.mubr.f32.gmra.mxu0 %v1613
        %v1684 = vpop.f32.mrf.mxu0
        %v1685 = vadd.f32 0.0, %v1684
        %v1686 = vpop.f32.mrf.mxu0
        %1687 = vmatprep.mubr.f32.mxu0 0.0
        %1688 = vmatmul.mubr.f32.gmra.mxu0 %v1616
        %v1689 = vpop.f32.mrf.mxu0
        %v1690 = vadd.f32 0.0, %v1689
        %v1691 = vpop.f32.mrf.mxu0
        %1692 = vdwg.mxu0
        %v1693 = vpack.c.bf16 %v1603, %v1598
        %v1694 = vpack.c.bf16 %v1690, %v1685
        %v1695 = vld [vmem:[%s681 + $0x8] sm:$0xf]
        %v1696 = vld [vmem:[%s681 + $0xc] sm:$0xf]
        %v1699 = vunpack.c.l.b16 %v1695
        %v1700 = vunpack.c.l.b16 %v1696
        %v1701 = vpack.c.b16 %v1700, %v1699
        %v1704 = vsel %vm878, %v1693, 0
        %v1707 = vsel %vm878, %v1694, 0
        %1709 = vmatprep.subr.bf16.mxu0 0
        %1710 = vmatpush1.bf16.msra.mxu0 0
        %1711 = vmatprep.subr.bf16.mxu0 0
        %1712 = vmatpush1.bf16.msra.mxu0 0
        %1713 = vmatprep.subr.bf16.mxu0 0
        %1714 = vmatpush1.bf16.msra.mxu0 0
        %1715 = vmatprep.subr.bf16.mxu0 0
        %1716 = vmatpush1.bf16.msra.mxu0 0
        %1717 = vmatprep.subr.bf16.mxu0 0
        %1718 = vmatpush1.bf16.msra.mxu0 0
        %1719 = vmatprep.subr.bf16.mxu0 0
        %1720 = vmatpush1.bf16.msra.mxu0 0
        %1721 = vmatprep.subr.bf16.mxu0 0
        %1722 = vmatpush1.bf16.msra.mxu0 0
        %1723 = vmatprep.subr.bf16.mxu0 0
        %1724 = vmatpush1.bf16.msra.mxu0 %v1701
        %1725 = vmatprep.subr.bf16.mxu0 0
        %1726 = vmatpush2.bf16.msra.mxu0 0
        %1727 = vmatprep.subr.bf16.mxu0 0
        %1728 = vmatpush2.bf16.msra.mxu0 0
        %1729 = vmatprep.subr.bf16.mxu0 0
        %1730 = vmatpush2.bf16.msra.mxu0 0
        %1731 = vmatprep.subr.bf16.mxu0 0
        %1732 = vmatpush2.bf16.msra.mxu0 0
        %1733 = vmatprep.subr.bf16.mxu0 0
        %1734 = vmatpush2.bf16.msra.mxu0 0
        %1735 = vmatprep.subr.bf16.mxu0 0
        %1736 = vmatpush2.bf16.msra.mxu0 0
        %1737 = vmatprep.subr.bf16.mxu0 0
        %1738 = vmatpush2.bf16.msra.mxu0 0
        %1739 = vmatprep.subr.bf16.mxu0 0
        %1740 = vmatpush2.bf16.msra.mxu0 0
        %1741 = vmatprep.mubr.bf16.mxu0 0
        %1742 = vmatmul.mubr.bf16.gmra.mxu0 %v1704
        %v1743 = vpop.f32.mrf.mxu0
        %v1744 = vadd.f32 0.0, %v1743
        %v1745 = vpop.f32.mrf.mxu0
        %v1746 = vpop.f32.mrf.mxu0
        %v1747 = vadd.f32 0.0, %v1746
        %v1748 = vpop.f32.mrf.mxu0
        %1749 = vmatprep.mubr.bf16.mxu0 0
        %1750 = vmatmul.mubr.bf16.gmra.mxu0 %v1707
        %v1751 = vpop.f32.mrf.mxu0
        %v1752 = vadd.f32 0.0, %v1751
        %v1753 = vpop.f32.mrf.mxu0
        %v1754 = vpop.f32.mrf.mxu0
        %v1755 = vadd.f32 0.0, %v1754
        %v1756 = vpop.f32.mrf.mxu0
        %1757 = vdwg.mxu0
        %v1760 = vunpack.c.l.b16 %v1283
        %v1761 = vunpack.c.l.b16 %v1284
        %v1762 = vpack.c.b16 %v1761, %v1760
        %v1765 = vsel %vm878, %v1281, 0
        %v1768 = vsel %vm878, %v1282, 0
        %1770 = vmatprep.subr.bf16.mxu0 0
        %1771 = vmatpush1.bf16.msra.mxu0 0
        %1772 = vmatprep.subr.bf16.mxu0 0
        %1773 = vmatpush1.bf16.msra.mxu0 0
        %1774 = vmatprep.subr.bf16.mxu0 0
        %1775 = vmatpush1.bf16.msra.mxu0 0
        %1776 = vmatprep.subr.bf16.mxu0 0
        %1777 = vmatpush1.bf16.msra.mxu0 0
        %1778 = vmatprep.subr.bf16.mxu0 0
        %1779 = vmatpush1.bf16.msra.mxu0 0
        %1780 = vmatprep.subr.bf16.mxu0 0
        %1781 = vmatpush1.bf16.msra.mxu0 0
        %1782 = vmatprep.subr.bf16.mxu0 0
        %1783 = vmatpush1.bf16.msra.mxu0 0
        %1784 = vmatprep.subr.bf16.mxu0 0
        %1785 = vmatpush1.bf16.msra.mxu0 %v1762
        %1786 = vmatprep.subr.bf16.mxu0 0
        %1787 = vmatpush2.bf16.msra.mxu0 0
        %1788 = vmatprep.subr.bf16.mxu0 0
        %1789 = vmatpush2.bf16.msra.mxu0 0
        %1790 = vmatprep.subr.bf16.mxu0 0
        %1791 = vmatpush2.bf16.msra.mxu0 0
        %1792 = vmatprep.subr.bf16.mxu0 0
        %1793 = vmatpush2.bf16.msra.mxu0 0
        %1794 = vmatprep.subr.bf16.mxu0 0
        %1795 = vmatpush2.bf16.msra.mxu0 0
        %1796 = vmatprep.subr.bf16.mxu0 0
        %1797 = vmatpush2.bf16.msra.mxu0 0
        %1798 = vmatprep.subr.bf16.mxu0 0
        %1799 = vmatpush2.bf16.msra.mxu0 0
        %1800 = vmatprep.subr.bf16.mxu0 0
        %1801 = vmatpush2.bf16.msra.mxu0 0
        %1802 = vmatprep.mubr.bf16.mxu0 0
        %1803 = vmatmul.mubr.bf16.gmra.mxu0 %v1765
        %v1804 = vpop.f32.mrf.mxu0
        %v1805 = vadd.f32 %v1744, %v1804
        %v1806 = vpop.f32.mrf.mxu0
        %v1807 = vpop.f32.mrf.mxu0
        %v1808 = vadd.f32 %v1747, %v1807
        %v1809 = vpop.f32.mrf.mxu0
        %1810 = vmatprep.mubr.bf16.mxu0 0
        %1811 = vmatmul.mubr.bf16.gmra.mxu0 %v1768
        %v1812 = vpop.f32.mrf.mxu0
        %v1813 = vadd.f32 %v1752, %v1812
        %v1814 = vpop.f32.mrf.mxu0
        %v1815 = vpop.f32.mrf.mxu0
        %v1816 = vadd.f32 %v1755, %v1815
        %v1817 = vpop.f32.mrf.mxu0
        %1818 = vdwg.mxu0
        %v1819 = vld [vmem:[%s684] sm:$0x1]
        %v1821 = vlaneseq
        %v1822 = vshrl.u32 %v1821, 7
        %v1823 = vsub.s32 0, %v1822
        %v1824 = vrot.slane %v1819, %v1823
        %v1826 = vadd.f32 %v1805, %v1824
        %v1827 = vadd.f32 %v1808, %v1824
        %v1828 = vadd.f32 %v1813, %v1824
        %v1829 = vadd.f32 %v1816, %v1824
        %v1830 = vadd.f32 %v1826, %v787
        %v1831 = vadd.f32 %v1827, %v788
        %v1832 = vadd.f32 %v1828, %v789
        %v1833 = vadd.f32 %v1829, %v790
        %v1834 = vld [vmem:[%s687] sm:$0x1]
        %v1835 = vld [vmem:[%s690] sm:$0x1]
        %v1836 = vsel %vm816, %v1830, 0.0
        %1837 = vadd.xlane.f32.xlu0 %v1836
        %v1838 = vpop.xlane.xlu0 %1837
        %v1839 = vsel %vm816, %v1831, 0.0
        %1840 = vadd.xlane.f32.xlu0 %v1839
        %v1841 = vpop.xlane.xlu0 %1840
        %v1842 = vsel %vm816, %v1832, 0.0
        %1843 = vadd.xlane.f32.xlu0 %v1842
        %v1844 = vpop.xlane.xlu0 %1843
        %v1845 = vsel %vm816, %v1833, 0.0
        %1846 = vadd.xlane.f32.xlu0 %v1845
        %v1847 = vpop.xlane.xlu0 %1846
        %v1848 = vrcp.pop 32.0
        %v1849 = vmul.f32 %v1838, %v1848
        %v1850 = vmul.f32 %v1841, %v1848
        %v1851 = vmul.f32 %v1844, %v1848
        %v1852 = vmul.f32 %v1847, %v1848
        %v1853 = vsub.f32 %v1830, %v1849
        %v1854 = vsub.f32 %v1831, %v1850
        %v1855 = vsub.f32 %v1832, %v1851
        %v1856 = vsub.f32 %v1833, %v1852
        %v1857 = vmul.f32 %v1853, %v1853
        %v1858 = vmul.f32 %v1854, %v1854
        %v1859 = vmul.f32 %v1855, %v1855
        %v1860 = vmul.f32 %v1856, %v1856
        %v1861 = vsel %vm816, %v1857, 0.0
        %1862 = vadd.xlane.f32.xlu0 %v1861
        %v1863 = vpop.xlane.xlu0 %1862
        %v1864 = vsel %vm816, %v1858, 0.0
        %1865 = vadd.xlane.f32.xlu0 %v1864
        %v1866 = vpop.xlane.xlu0 %1865
        %v1867 = vsel %vm816, %v1859, 0.0
        %1868 = vadd.xlane.f32.xlu0 %v1867
        %v1869 = vpop.xlane.xlu0 %1868
        %v1870 = vsel %vm816, %v1860, 0.0
        %1871 = vadd.xlane.f32.xlu0 %v1870
        %v1872 = vpop.xlane.xlu0 %1871
        %v1873 = vmul.f32 %v1863, %v1848
        %v1874 = vmul.f32 %v1866, %v1848
        %v1875 = vmul.f32 %v1869, %v1848
        %v1876 = vmul.f32 %v1872, %v1848
        %v1877 = vadd.f32 %v1873, 1e-05
        %v1878 = vadd.f32 %v1874, 1e-05
        %v1879 = vadd.f32 %v1875, 1e-05
        %v1880 = vadd.f32 %v1876, 1e-05
        %v1881 = vrsqrt.pop %v1877
        %v1882 = vrsqrt.pop %v1878
        %v1883 = vrsqrt.pop %v1879
        %v1884 = vrsqrt.pop %v1880
        %v1885 = vmul.f32 %v1853, %v1881
        %v1886 = vmul.f32 %v1854, %v1882
        %v1887 = vmul.f32 %v1855, %v1883
        %v1888 = vmul.f32 %v1856, %v1884
        %v1890 = vlaneseq
        %v1891 = vshrl.u32 %v1890, 7
        %v1892 = vsub.s32 0, %v1891
        %v1893 = vrot.slane %v1834, %v1892
        %v1895 = vmul.f32 %v1885, %v1893
        %v1896 = vmul.f32 %v1886, %v1893
        %v1897 = vmul.f32 %v1887, %v1893
        %v1898 = vmul.f32 %v1888, %v1893
        %v1900 = vlaneseq
        %v1901 = vshrl.u32 %v1900, 7
        %v1902 = vsub.s32 0, %v1901
        %v1903 = vrot.slane %v1835, %v1902
        %v1905 = vadd.f32 %v1895, %v1903
        %v1906 = vadd.f32 %v1896, %v1903
        %v1907 = vadd.f32 %v1897, %v1903
        %v1908 = vadd.f32 %v1898, %v1903
        %v1909 = vsel %vm759, 1, 0
        %v1910 = vsel %vm760, 1, 0
        %v1911 = vsel %vm761, 1, 0
        %v1912 = vsel %vm762, 1, 0
        %vm1913 = vcmp.eq.s32.totalorder %v1909, 1
        %vm1914 = vcmp.eq.s32.totalorder %v1910, 1
        %vm1915 = vcmp.eq.s32.totalorder %v1911, 1
        %vm1916 = vcmp.eq.s32.totalorder %v1912, 1
        %v1917 = vsel %vm1913, 0.0, %v1905
        %v1918 = vsel %vm1914, 0.0, %v1906
        %v1919 = vsel %vm1915, 0.0, %v1907
        %v1920 = vsel %vm1916, 0.0, %v1908
        %1921 = vst.msk [vmem:[#allocation2 + $0x4] sm:$0xff] %vm816, %v1917
        %1922 = vst.msk [vmem:[#allocation2 + $0xc] sm:$0xff] %vm816, %v1918
        %1923 = vst.msk [vmem:[#allocation2 + $0x1c] sm:$0xff] %vm816, %v1919
        %1924 = vst.msk [vmem:[#allocation2 + $0x24] sm:$0xff] %vm816, %v1920
        %v1925 = vld [vmem:[#allocation2] sm:$0xff]
        %v1926 = vld [vmem:[#allocation2 + $0x8] sm:$0xff]
        %v1927 = vld [vmem:[#allocation2 + $0x18] sm:$0xff]
        %v1928 = vld [vmem:[#allocation2 + $0x20] sm:$0xff]
        %v1929 = vpack.c.bf16 %v1926, %v1925
        %v1930 = vpack.c.bf16 %v1928, %v1927
        %v1931 = vld [vmem:[%s577] sm:$0xf]
        %v1932 = vld [vmem:[%s577 + $0x4] sm:$0xf]
        %v1933 = vld [vmem:[%s577 + $0x8] sm:$0xf]
        %v1934 = vld [vmem:[%s577 + $0xc] sm:$0xf]
        %v1935 = vld [vmem:[#allocation2 + $0x1] sm:$0xff]
        %v1936 = vld [vmem:[#allocation2 + $0x9] sm:$0xff]
        %v1937 = vld [vmem:[#allocation2 + $0x19] sm:$0xff]
        %v1938 = vld [vmem:[#allocation2 + $0x21] sm:$0xff]
        %v1939 = vpack.c.bf16 %v1936, %v1935
        %v1940 = vpack.c.bf16 %v1938, %v1937
        %s1941 = scalar_lea.vmem %s577, 16 [#allocation8]
        %v1942 = vld [vmem:[%s1941] sm:$0xf]
        %v1943 = vld [vmem:[%s1941 + $0x4] sm:$0xf]
        %v1944 = vld [vmem:[%s1941 + $0x8] sm:$0xf]
        %v1945 = vld [vmem:[%s1941 + $0xc] sm:$0xf]
        %v1950 = vunpack.c.l.b16 %v1942
        %v1951 = vunpack.c.l.b16 %v1943
        %v1952 = vunpack.c.l.b16 %v1944
        %v1953 = vunpack.c.l.b16 %v1945
        %v1954 = vpack.c.b16 %v1951, %v1950
        %v1955 = vpack.c.b16 %v1953, %v1952
        %v1959 = vsel %vm816, %v1939, 0
        %v1962 = vsel %vm816, %v1940, 0
        %1964 = vmatprep.subr.bf16.mxu0 0
        %1965 = vmatpush1.bf16.msra.mxu0 0
        %1966 = vmatprep.subr.bf16.mxu0 0
        %1967 = vmatpush1.bf16.msra.mxu0 0
        %1968 = vmatprep.subr.bf16.mxu0 0
        %1969 = vmatpush1.bf16.msra.mxu0 0
        %1970 = vmatprep.subr.bf16.mxu0 0
        %1971 = vmatpush1.bf16.msra.mxu0 0
        %1972 = vmatprep.subr.bf16.mxu0 0
        %1973 = vmatpush1.bf16.msra.mxu0 0
        %1974 = vmatprep.subr.bf16.mxu0 0
        %1975 = vmatpush1.bf16.msra.mxu0 0
        %1976 = vmatprep.subr.bf16.mxu0 0
        %1977 = vmatpush1.bf16.msra.mxu0 %v1955
        %1978 = vmatprep.subr.bf16.mxu0 0
        %1979 = vmatpush1.bf16.msra.mxu0 %v1954
        %1980 = vmatprep.subr.bf16.mxu0 0
        %1981 = vmatpush2.bf16.msra.mxu0 0
        %1982 = vmatprep.subr.bf16.mxu0 0
        %1983 = vmatpush2.bf16.msra.mxu0 0
        %1984 = vmatprep.subr.bf16.mxu0 0
        %1985 = vmatpush2.bf16.msra.mxu0 0
        %1986 = vmatprep.subr.bf16.mxu0 0
        %1987 = vmatpush2.bf16.msra.mxu0 0
        %1988 = vmatprep.subr.bf16.mxu0 0
        %1989 = vmatpush2.bf16.msra.mxu0 0
        %1990 = vmatprep.subr.bf16.mxu0 0
        %1991 = vmatpush2.bf16.msra.mxu0 0
        %1992 = vmatprep.subr.bf16.mxu0 0
        %1993 = vmatpush2.bf16.msra.mxu0 0
        %1994 = vmatprep.subr.bf16.mxu0 0
        %1995 = vmatpush2.bf16.msra.mxu0 0
        %1996 = vmatprep.mubr.bf16.mxu0 0
        %1997 = vmatmul.mubr.bf16.gmra.mxu0 %v1959
        %v1998 = vpop.f32.mrf.mxu0
        %v1999 = vadd.f32 0.0, %v1998
        %v2000 = vpop.f32.mrf.mxu0
        %v2001 = vpop.f32.mrf.mxu0
        %v2002 = vadd.f32 0.0, %v2001
        %v2003 = vpop.f32.mrf.mxu0
        %2004 = vmatprep.mubr.bf16.mxu0 0
        %2005 = vmatmul.mubr.bf16.gmra.mxu0 %v1962
        %v2006 = vpop.f32.mrf.mxu0
        %v2007 = vadd.f32 0.0, %v2006
        %v2008 = vpop.f32.mrf.mxu0
        %v2009 = vpop.f32.mrf.mxu0
        %v2010 = vadd.f32 0.0, %v2009
        %v2011 = vpop.f32.mrf.mxu0
        %2012 = vdwg.mxu0
        %v2017 = vunpack.c.l.b16 %v1931
        %v2018 = vunpack.c.l.b16 %v1932
        %v2019 = vunpack.c.l.b16 %v1933
        %v2020 = vunpack.c.l.b16 %v1934
        %v2021 = vpack.c.b16 %v2018, %v2017
        %v2022 = vpack.c.b16 %v2020, %v2019
        %v2026 = vsel %vm816, %v1929, 0
        %v2029 = vsel %vm816, %v1930, 0
        %2031 = vmatprep.subr.bf16.mxu0 0
        %2032 = vmatpush1.bf16.msra.mxu0 0
        %2033 = vmatprep.subr.bf16.mxu0 0
        %2034 = vmatpush1.bf16.msra.mxu0 0
        %2035 = vmatprep.subr.bf16.mxu0 0
        %2036 = vmatpush1.bf16.msra.mxu0 0
        %2037 = vmatprep.subr.bf16.mxu0 0
        %2038 = vmatpush1.bf16.msra.mxu0 0
        %2039 = vmatprep.subr.bf16.mxu0 0
        %2040 = vmatpush1.bf16.msra.mxu0 0
        %2041 = vmatprep.subr.bf16.mxu0 0
        %2042 = vmatpush1.bf16.msra.mxu0 0
        %2043 = vmatprep.subr.bf16.mxu0 0
        %2044 = vmatpush1.bf16.msra.mxu0 %v2022
        %2045 = vmatprep.subr.bf16.mxu0 0
        %2046 = vmatpush1.bf16.msra.mxu0 %v2021
        %2047 = vmatprep.subr.bf16.mxu0 0
        %2048 = vmatpush2.bf16.msra.mxu0 0
        %2049 = vmatprep.subr.bf16.mxu0 0
        %2050 = vmatpush2.bf16.msra.mxu0 0
        %2051 = vmatprep.subr.bf16.mxu0 0
        %2052 = vmatpush2.bf16.msra.mxu0 0
        %2053 = vmatprep.subr.bf16.mxu0 0
        %2054 = vmatpush2.bf16.msra.mxu0 0
        %2055 = vmatprep.subr.bf16.mxu0 0
        %2056 = vmatpush2.bf16.msra.mxu0 0
        %2057 = vmatprep.subr.bf16.mxu0 0
        %2058 = vmatpush2.bf16.msra.mxu0 0
        %2059 = vmatprep.subr.bf16.mxu0 0
        %2060 = vmatpush2.bf16.msra.mxu0 0
        %2061 = vmatprep.subr.bf16.mxu0 0
        %2062 = vmatpush2.bf16.msra.mxu0 0
        %2063 = vmatprep.mubr.bf16.mxu0 0
        %2064 = vmatmul.mubr.bf16.gmra.mxu0 %v2026
        %v2065 = vpop.f32.mrf.mxu0
        %v2066 = vadd.f32 %v1999, %v2065
        %v2067 = vpop.f32.mrf.mxu0
        %v2068 = vpop.f32.mrf.mxu0
        %v2069 = vadd.f32 %v2002, %v2068
        %v2070 = vpop.f32.mrf.mxu0
        %2071 = vmatprep.mubr.bf16.mxu0 0
        %2072 = vmatmul.mubr.bf16.gmra.mxu0 %v2029
        %v2073 = vpop.f32.mrf.mxu0
        %v2074 = vadd.f32 %v2007, %v2073
        %v2075 = vpop.f32.mrf.mxu0
        %v2076 = vpop.f32.mrf.mxu0
        %v2077 = vadd.f32 %v2010, %v2076
        %v2078 = vpop.f32.mrf.mxu0
        %2079 = vdwg.mxu0
        %v2080 = vld [vmem:[#allocation2 + $0x2] sm:$0xff]
        %v2081 = vld [vmem:[#allocation2 + $0xa] sm:$0xff]
        %v2082 = vld [vmem:[#allocation2 + $0x1a] sm:$0xff]
        %v2083 = vld [vmem:[#allocation2 + $0x22] sm:$0xff]
        %v2084 = vpack.c.bf16 %v2081, %v2080
        %v2085 = vpack.c.bf16 %v2083, %v2082
        %s2086 = scalar_lea.vmem %s577, 32 [#allocation8]
        %v2087 = vld [vmem:[%s2086] sm:$0xf]
        %v2088 = vld [vmem:[%s2086 + $0x4] sm:$0xf]
        %v2089 = vld [vmem:[%s2086 + $0x8] sm:$0xf]
        %v2090 = vld [vmem:[%s2086 + $0xc] sm:$0xf]
        %v2095 = vunpack.c.l.b16 %v2087
        %v2096 = vunpack.c.l.b16 %v2088
        %v2097 = vunpack.c.l.b16 %v2089
        %v2098 = vunpack.c.l.b16 %v2090
        %v2099 = vpack.c.b16 %v2096, %v2095
        %v2100 = vpack.c.b16 %v2098, %v2097
        %v2104 = vsel %vm816, %v2084, 0
        %v2107 = vsel %vm816, %v2085, 0
        %2109 = vmatprep.subr.bf16.mxu0 0
        %2110 = vmatpush1.bf16.msra.mxu0 0
        %2111 = vmatprep.subr.bf16.mxu0 0
        %2112 = vmatpush1.bf16.msra.mxu0 0
        %2113 = vmatprep.subr.bf16.mxu0 0
        %2114 = vmatpush1.bf16.msra.mxu0 0
        %2115 = vmatprep.subr.bf16.mxu0 0
        %2116 = vmatpush1.bf16.msra.mxu0 0
        %2117 = vmatprep.subr.bf16.mxu0 0
        %2118 = vmatpush1.bf16.msra.mxu0 0
        %2119 = vmatprep.subr.bf16.mxu0 0
        %2120 = vmatpush1.bf16.msra.mxu0 0
        %2121 = vmatprep.subr.bf16.mxu0 0
        %2122 = vmatpush1.bf16.msra.mxu0 %v2100
        %2123 = vmatprep.subr.bf16.mxu0 0
        %2124 = vmatpush1.bf16.msra.mxu0 %v2099
        %2125 = vmatprep.subr.bf16.mxu0 0
        %2126 = vmatpush2.bf16.msra.mxu0 0
        %2127 = vmatprep.subr.bf16.mxu0 0
        %2128 = vmatpush2.bf16.msra.mxu0 0
        %2129 = vmatprep.subr.bf16.mxu0 0
        %2130 = vmatpush2.bf16.msra.mxu0 0
        %2131 = vmatprep.subr.bf16.mxu0 0
        %2132 = vmatpush2.bf16.msra.mxu0 0
        %2133 = vmatprep.subr.bf16.mxu0 0
        %2134 = vmatpush2.bf16.msra.mxu0 0
        %2135 = vmatprep.subr.bf16.mxu0 0
        %2136 = vmatpush2.bf16.msra.mxu0 0
        %2137 = vmatprep.subr.bf16.mxu0 0
        %2138 = vmatpush2.bf16.msra.mxu0 0
        %2139 = vmatprep.subr.bf16.mxu0 0
        %2140 = vmatpush2.bf16.msra.mxu0 0
        %2141 = vmatprep.mubr.bf16.mxu0 0
        %2142 = vmatmul.mubr.bf16.gmra.mxu0 %v2104
        %v2143 = vpop.f32.mrf.mxu0
        %v2144 = vadd.f32 0.0, %v2143
        %v2145 = vpop.f32.mrf.mxu0
        %v2146 = vpop.f32.mrf.mxu0
        %v2147 = vadd.f32 0.0, %v2146
        %v2148 = vpop.f32.mrf.mxu0
        %2149 = vmatprep.mubr.bf16.mxu0 0
        %2150 = vmatmul.mubr.bf16.gmra.mxu0 %v2107
        %v2151 = vpop.f32.mrf.mxu0
        %v2152 = vadd.f32 0.0, %v2151
        %v2153 = vpop.f32.mrf.mxu0
        %v2154 = vpop.f32.mrf.mxu0
        %v2155 = vadd.f32 0.0, %v2154
        %v2156 = vpop.f32.mrf.mxu0
        %2157 = vdwg.mxu0
        %v2158 = vadd.f32 %v2066, %v2144
        %v2159 = vadd.f32 %v2069, %v2147
        %v2160 = vadd.f32 %v2074, %v2152
        %v2161 = vadd.f32 %v2077, %v2155
        %v2162 = vld [vmem:[#allocation2 + $0x3] sm:$0xff]
        %v2163 = vld [vmem:[#allocation2 + $0xb] sm:$0xff]
        %v2164 = vld [vmem:[#allocation2 + $0x1b] sm:$0xff]
        %v2165 = vld [vmem:[#allocation2 + $0x23] sm:$0xff]
        %v2166 = vpack.c.bf16 %v2163, %v2162
        %v2167 = vpack.c.bf16 %v2165, %v2164
        %s2168 = scalar_lea.vmem %s577, 48 [#allocation8]
        %v2169 = vld [vmem:[%s2168] sm:$0xf]
        %v2170 = vld [vmem:[%s2168 + $0x4] sm:$0xf]
        %v2171 = vld [vmem:[%s2168 + $0x8] sm:$0xf]
        %v2172 = vld [vmem:[%s2168 + $0xc] sm:$0xf]
        %v2177 = vunpack.c.l.b16 %v2169
        %v2178 = vunpack.c.l.b16 %v2170
        %v2179 = vunpack.c.l.b16 %v2171
        %v2180 = vunpack.c.l.b16 %v2172
        %v2181 = vpack.c.b16 %v2178, %v2177
        %v2182 = vpack.c.b16 %v2180, %v2179
        %v2186 = vsel %vm816, %v2166, 0
        %v2189 = vsel %vm816, %v2167, 0
        %2191 = vmatprep.subr.bf16.mxu0 0
        %2192 = vmatpush1.bf16.msra.mxu0 0
        %2193 = vmatprep.subr.bf16.mxu0 0
        %2194 = vmatpush1.bf16.msra.mxu0 0
        %2195 = vmatprep.subr.bf16.mxu0 0
        %2196 = vmatpush1.bf16.msra.mxu0 0
        %2197 = vmatprep.subr.bf16.mxu0 0
        %2198 = vmatpush1.bf16.msra.mxu0 0
        %2199 = vmatprep.subr.bf16.mxu0 0
        %2200 = vmatpush1.bf16.msra.mxu0 0
        %2201 = vmatprep.subr.bf16.mxu0 0
        %2202 = vmatpush1.bf16.msra.mxu0 0
        %2203 = vmatprep.subr.bf16.mxu0 0
        %2204 = vmatpush1.bf16.msra.mxu0 %v2182
        %2205 = vmatprep.subr.bf16.mxu0 0
        %2206 = vmatpush1.bf16.msra.mxu0 %v2181
        %2207 = vmatprep.subr.bf16.mxu0 0
        %2208 = vmatpush2.bf16.msra.mxu0 0
        %2209 = vmatprep.subr.bf16.mxu0 0
        %2210 = vmatpush2.bf16.msra.mxu0 0
        %2211 = vmatprep.subr.bf16.mxu0 0
        %2212 = vmatpush2.bf16.msra.mxu0 0
        %2213 = vmatprep.subr.bf16.mxu0 0
        %2214 = vmatpush2.bf16.msra.mxu0 0
        %2215 = vmatprep.subr.bf16.mxu0 0
        %2216 = vmatpush2.bf16.msra.mxu0 0
        %2217 = vmatprep.subr.bf16.mxu0 0
        %2218 = vmatpush2.bf16.msra.mxu0 0
        %2219 = vmatprep.subr.bf16.mxu0 0
        %2220 = vmatpush2.bf16.msra.mxu0 0
        %2221 = vmatprep.subr.bf16.mxu0 0
        %2222 = vmatpush2.bf16.msra.mxu0 0
        %2223 = vmatprep.mubr.bf16.mxu0 0
        %2224 = vmatmul.mubr.bf16.gmra.mxu0 %v2186
        %v2225 = vpop.f32.mrf.mxu0
        %v2226 = vadd.f32 0.0, %v2225
        %v2227 = vpop.f32.mrf.mxu0
        %v2228 = vpop.f32.mrf.mxu0
        %v2229 = vadd.f32 0.0, %v2228
        %v2230 = vpop.f32.mrf.mxu0
        %2231 = vmatprep.mubr.bf16.mxu0 0
        %2232 = vmatmul.mubr.bf16.gmra.mxu0 %v2189
        %v2233 = vpop.f32.mrf.mxu0
        %v2234 = vadd.f32 0.0, %v2233
        %v2235 = vpop.f32.mrf.mxu0
        %v2236 = vpop.f32.mrf.mxu0
        %v2237 = vadd.f32 0.0, %v2236
        %v2238 = vpop.f32.mrf.mxu0
        %2239 = vdwg.mxu0
        %v2240 = vadd.f32 %v2158, %v2226
        %v2241 = vadd.f32 %v2159, %v2229
        %v2242 = vadd.f32 %v2160, %v2234
        %v2243 = vadd.f32 %v2161, %v2237
        %v2244 = vld [vmem:[#allocation2 + $0x4] sm:$0xff]
        %v2245 = vld [vmem:[#allocation2 + $0xc] sm:$0xff]
        %v2246 = vld [vmem:[#allocation2 + $0x1c] sm:$0xff]
        %v2247 = vld [vmem:[#allocation2 + $0x24] sm:$0xff]
        %v2248 = vpack.c.bf16 %v2245, %v2244
        %v2249 = vpack.c.bf16 %v2247, %v2246
        %s2250 = scalar_lea.vmem %s577, 64 [#allocation8]
        %v2251 = vld [vmem:[%s2250] sm:$0xf]
        %v2252 = vld [vmem:[%s2250 + $0x4] sm:$0xf]
        %v2253 = vld [vmem:[%s2250 + $0x8] sm:$0xf]
        %v2254 = vld [vmem:[%s2250 + $0xc] sm:$0xf]
        %v2259 = vunpack.c.l.b16 %v2251
        %v2260 = vunpack.c.l.b16 %v2252
        %v2261 = vunpack.c.l.b16 %v2253
        %v2262 = vunpack.c.l.b16 %v2254
        %v2263 = vpack.c.b16 %v2260, %v2259
        %v2264 = vpack.c.b16 %v2262, %v2261
        %v2268 = vsel %vm816, %v2248, 0
        %v2271 = vsel %vm816, %v2249, 0
        %2273 = vmatprep.subr.bf16.mxu0 0
        %2274 = vmatpush1.bf16.msra.mxu0 0
        %2275 = vmatprep.subr.bf16.mxu0 0
        %2276 = vmatpush1.bf16.msra.mxu0 0
        %2277 = vmatprep.subr.bf16.mxu0 0
        %2278 = vmatpush1.bf16.msra.mxu0 0
        %2279 = vmatprep.subr.bf16.mxu0 0
        %2280 = vmatpush1.bf16.msra.mxu0 0
        %2281 = vmatprep.subr.bf16.mxu0 0
        %2282 = vmatpush1.bf16.msra.mxu0 0
        %2283 = vmatprep.subr.bf16.mxu0 0
        %2284 = vmatpush1.bf16.msra.mxu0 0
        %2285 = vmatprep.subr.bf16.mxu0 0
        %2286 = vmatpush1.bf16.msra.mxu0 %v2264
        %2287 = vmatprep.subr.bf16.mxu0 0
        %2288 = vmatpush1.bf16.msra.mxu0 %v2263
        %2289 = vmatprep.subr.bf16.mxu0 0
        %2290 = vmatpush2.bf16.msra.mxu0 0
        %2291 = vmatprep.subr.bf16.mxu0 0
        %2292 = vmatpush2.bf16.msra.mxu0 0
        %2293 = vmatprep.subr.bf16.mxu0 0
        %2294 = vmatpush2.bf16.msra.mxu0 0
        %2295 = vmatprep.subr.bf16.mxu0 0
        %2296 = vmatpush2.bf16.msra.mxu0 0
        %2297 = vmatprep.subr.bf16.mxu0 0
        %2298 = vmatpush2.bf16.msra.mxu0 0
        %2299 = vmatprep.subr.bf16.mxu0 0
        %2300 = vmatpush2.bf16.msra.mxu0 0
        %2301 = vmatprep.subr.bf16.mxu0 0
        %2302 = vmatpush2.bf16.msra.mxu0 0
        %2303 = vmatprep.subr.bf16.mxu0 0
        %2304 = vmatpush2.bf16.msra.mxu0 0
        %2305 = vmatprep.mubr.bf16.mxu0 0
        %2306 = vmatmul.mubr.bf16.gmra.mxu0 %v2268
        %v2307 = vpop.f32.mrf.mxu0
        %v2308 = vadd.f32 0.0, %v2307
        %v2309 = vpop.f32.mrf.mxu0
        %v2310 = vpop.f32.mrf.mxu0
        %v2311 = vadd.f32 0.0, %v2310
        %v2312 = vpop.f32.mrf.mxu0
        %2313 = vmatprep.mubr.bf16.mxu0 0
        %2314 = vmatmul.mubr.bf16.gmra.mxu0 %v2271
        %v2315 = vpop.f32.mrf.mxu0
        %v2316 = vadd.f32 0.0, %v2315
        %v2317 = vpop.f32.mrf.mxu0
        %v2318 = vpop.f32.mrf.mxu0
        %v2319 = vadd.f32 0.0, %v2318
        %v2320 = vpop.f32.mrf.mxu0
        %2321 = vdwg.mxu0
        %v2322 = vadd.f32 %v2240, %v2308
        %v2323 = vadd.f32 %v2241, %v2311
        %v2324 = vadd.f32 %v2242, %v2316
        %v2325 = vadd.f32 %v2243, %v2319
        %v2326 = vld [vmem:[#allocation2 + $0x5] sm:$0xff]
        %v2327 = vld [vmem:[#allocation2 + $0xd] sm:$0xff]
        %v2328 = vld [vmem:[#allocation2 + $0x1d] sm:$0xff]
        %v2329 = vld [vmem:[#allocation2 + $0x25] sm:$0xff]
        %v2330 = vpack.c.bf16 %v2327, %v2326
        %v2331 = vpack.c.bf16 %v2329, %v2328
        %s2332 = scalar_lea.vmem %s577, 80 [#allocation8]
        %v2333 = vld [vmem:[%s2332] sm:$0xf]
        %v2334 = vld [vmem:[%s2332 + $0x4] sm:$0xf]
        %v2335 = vld [vmem:[%s2332 + $0x8] sm:$0xf]
        %v2336 = vld [vmem:[%s2332 + $0xc] sm:$0xf]
        %v2341 = vunpack.c.l.b16 %v2333
        %v2342 = vunpack.c.l.b16 %v2334
        %v2343 = vunpack.c.l.b16 %v2335
        %v2344 = vunpack.c.l.b16 %v2336
        %v2345 = vpack.c.b16 %v2342, %v2341
        %v2346 = vpack.c.b16 %v2344, %v2343
        %v2350 = vsel %vm816, %v2330, 0
        %v2353 = vsel %vm816, %v2331, 0
        %2355 = vmatprep.subr.bf16.mxu0 0
        %2356 = vmatpush1.bf16.msra.mxu0 0
        %2357 = vmatprep.subr.bf16.mxu0 0
        %2358 = vmatpush1.bf16.msra.mxu0 0
        %2359 = vmatprep.subr.bf16.mxu0 0
        %2360 = vmatpush1.bf16.msra.mxu0 0
        %2361 = vmatprep.subr.bf16.mxu0 0
        %2362 = vmatpush1.bf16.msra.mxu0 0
        %2363 = vmatprep.subr.bf16.mxu0 0
        %2364 = vmatpush1.bf16.msra.mxu0 0
        %2365 = vmatprep.subr.bf16.mxu0 0
        %2366 = vmatpush1.bf16.msra.mxu0 0
        %2367 = vmatprep.subr.bf16.mxu0 0
        %2368 = vmatpush1.bf16.msra.mxu0 %v2346
        %2369 = vmatprep.subr.bf16.mxu0 0
        %2370 = vmatpush1.bf16.msra.mxu0 %v2345
        %2371 = vmatprep.subr.bf16.mxu0 0
        %2372 = vmatpush2.bf16.msra.mxu0 0
        %2373 = vmatprep.subr.bf16.mxu0 0
        %2374 = vmatpush2.bf16.msra.mxu0 0
        %2375 = vmatprep.subr.bf16.mxu0 0
        %2376 = vmatpush2.bf16.msra.mxu0 0
        %2377 = vmatprep.subr.bf16.mxu0 0
        %2378 = vmatpush2.bf16.msra.mxu0 0
        %2379 = vmatprep.subr.bf16.mxu0 0
        %2380 = vmatpush2.bf16.msra.mxu0 0
        %2381 = vmatprep.subr.bf16.mxu0 0
        %2382 = vmatpush2.bf16.msra.mxu0 0
        %2383 = vmatprep.subr.bf16.mxu0 0
        %2384 = vmatpush2.bf16.msra.mxu0 0
        %2385 = vmatprep.subr.bf16.mxu0 0
        %2386 = vmatpush2.bf16.msra.mxu0 0
        %2387 = vmatprep.mubr.bf16.mxu0 0
        %2388 = vmatmul.mubr.bf16.gmra.mxu0 %v2350
        %v2389 = vpop.f32.mrf.mxu0
        %v2390 = vadd.f32 0.0, %v2389
        %v2391 = vpop.f32.mrf.mxu0
        %v2392 = vpop.f32.mrf.mxu0
        %v2393 = vadd.f32 0.0, %v2392
        %v2394 = vpop.f32.mrf.mxu0
        %2395 = vmatprep.mubr.bf16.mxu0 0
        %2396 = vmatmul.mubr.bf16.gmra.mxu0 %v2353
        %v2397 = vpop.f32.mrf.mxu0
        %v2398 = vadd.f32 0.0, %v2397
        %v2399 = vpop.f32.mrf.mxu0
        %v2400 = vpop.f32.mrf.mxu0
        %v2401 = vadd.f32 0.0, %v2400
        %v2402 = vpop.f32.mrf.mxu0
        %2403 = vdwg.mxu0
        %v2404 = vadd.f32 %v2322, %v2390
        %v2405 = vadd.f32 %v2323, %v2393
        %v2406 = vadd.f32 %v2324, %v2398
        %v2407 = vadd.f32 %v2325, %v2401
        %v2408 = vld [vmem:[#allocation2 + $0x6] sm:$0xff]
        %v2409 = vld [vmem:[#allocation2 + $0xe] sm:$0xff]
        %v2410 = vld [vmem:[#allocation2 + $0x1e] sm:$0xff]
        %v2411 = vld [vmem:[#allocation2 + $0x26] sm:$0xff]
        %v2412 = vpack.c.bf16 %v2409, %v2408
        %v2413 = vpack.c.bf16 %v2411, %v2410
        %s2414 = scalar_lea.vmem %s577, 96 [#allocation8]
        %v2415 = vld [vmem:[%s2414] sm:$0xf]
        %v2416 = vld [vmem:[%s2414 + $0x4] sm:$0xf]
        %v2417 = vld [vmem:[%s2414 + $0x8] sm:$0xf]
        %v2418 = vld [vmem:[%s2414 + $0xc] sm:$0xf]
        %v2423 = vunpack.c.l.b16 %v2415
        %v2424 = vunpack.c.l.b16 %v2416
        %v2425 = vunpack.c.l.b16 %v2417
        %v2426 = vunpack.c.l.b16 %v2418
        %v2427 = vpack.c.b16 %v2424, %v2423
        %v2428 = vpack.c.b16 %v2426, %v2425
        %v2432 = vsel %vm816, %v2412, 0
        %v2435 = vsel %vm816, %v2413, 0
        %2437 = vmatprep.subr.bf16.mxu0 0
        %2438 = vmatpush1.bf16.msra.mxu0 0
        %2439 = vmatprep.subr.bf16.mxu0 0
        %2440 = vmatpush1.bf16.msra.mxu0 0
        %2441 = vmatprep.subr.bf16.mxu0 0
        %2442 = vmatpush1.bf16.msra.mxu0 0
        %2443 = vmatprep.subr.bf16.mxu0 0
        %2444 = vmatpush1.bf16.msra.mxu0 0
        %2445 = vmatprep.subr.bf16.mxu0 0
        %2446 = vmatpush1.bf16.msra.mxu0 0
        %2447 = vmatprep.subr.bf16.mxu0 0
        %2448 = vmatpush1.bf16.msra.mxu0 0
        %2449 = vmatprep.subr.bf16.mxu0 0
        %2450 = vmatpush1.bf16.msra.mxu0 %v2428
        %2451 = vmatprep.subr.bf16.mxu0 0
        %2452 = vmatpush1.bf16.msra.mxu0 %v2427
        %2453 = vmatprep.subr.bf16.mxu0 0
        %2454 = vmatpush2.bf16.msra.mxu0 0
        %2455 = vmatprep.subr.bf16.mxu0 0
        %2456 = vmatpush2.bf16.msra.mxu0 0
        %2457 = vmatprep.subr.bf16.mxu0 0
        %2458 = vmatpush2.bf16.msra.mxu0 0
        %2459 = vmatprep.subr.bf16.mxu0 0
        %2460 = vmatpush2.bf16.msra.mxu0 0
        %2461 = vmatprep.subr.bf16.mxu0 0
        %2462 = vmatpush2.bf16.msra.mxu0 0
        %2463 = vmatprep.subr.bf16.mxu0 0
        %2464 = vmatpush2.bf16.msra.mxu0 0
        %2465 = vmatprep.subr.bf16.mxu0 0
        %2466 = vmatpush2.bf16.msra.mxu0 0
        %2467 = vmatprep.subr.bf16.mxu0 0
        %2468 = vmatpush2.bf16.msra.mxu0 0
        %2469 = vmatprep.mubr.bf16.mxu0 0
        %2470 = vmatmul.mubr.bf16.gmra.mxu0 %v2432
        %v2471 = vpop.f32.mrf.mxu0
        %v2472 = vadd.f32 0.0, %v2471
        %v2473 = vpop.f32.mrf.mxu0
        %v2474 = vpop.f32.mrf.mxu0
        %v2475 = vadd.f32 0.0, %v2474
        %v2476 = vpop.f32.mrf.mxu0
        %2477 = vmatprep.mubr.bf16.mxu0 0
        %2478 = vmatmul.mubr.bf16.gmra.mxu0 %v2435
        %v2479 = vpop.f32.mrf.mxu0
        %v2480 = vadd.f32 0.0, %v2479
        %v2481 = vpop.f32.mrf.mxu0
        %v2482 = vpop.f32.mrf.mxu0
        %v2483 = vadd.f32 0.0, %v2482
        %v2484 = vpop.f32.mrf.mxu0
        %2485 = vdwg.mxu0
        %v2486 = vadd.f32 %v2404, %v2472
        %v2487 = vadd.f32 %v2405, %v2475
        %v2488 = vadd.f32 %v2406, %v2480
        %v2489 = vadd.f32 %v2407, %v2483
        %v2490 = vld [vmem:[#allocation2 + $0x7] sm:$0xff]
        %v2491 = vld [vmem:[#allocation2 + $0xf] sm:$0xff]
        %v2492 = vld [vmem:[#allocation2 + $0x1f] sm:$0xff]
        %v2493 = vld [vmem:[#allocation2 + $0x27] sm:$0xff]
        %v2494 = vpack.c.bf16 %v2491, %v2490
        %v2495 = vpack.c.bf16 %v2493, %v2492
        %s2496 = scalar_lea.vmem %s577, 112 [#allocation8]
        %v2497 = vld [vmem:[%s2496] sm:$0xf]
        %v2498 = vld [vmem:[%s2496 + $0x4] sm:$0xf]
        %v2499 = vld [vmem:[%s2496 + $0x8] sm:$0xf]
        %v2500 = vld [vmem:[%s2496 + $0xc] sm:$0xf]
        %v2505 = vunpack.c.l.b16 %v2497
        %v2506 = vunpack.c.l.b16 %v2498
        %v2507 = vunpack.c.l.b16 %v2499
        %v2508 = vunpack.c.l.b16 %v2500
        %v2509 = vpack.c.b16 %v2506, %v2505
        %v2510 = vpack.c.b16 %v2508, %v2507
        %v2514 = vsel %vm816, %v2494, 0
        %v2517 = vsel %vm816, %v2495, 0
        %2519 = vmatprep.subr.bf16.mxu0 0
        %2520 = vmatpush1.bf16.msra.mxu0 0
        %2521 = vmatprep.subr.bf16.mxu0 0
        %2522 = vmatpush1.bf16.msra.mxu0 0
        %2523 = vmatprep.subr.bf16.mxu0 0
        %2524 = vmatpush1.bf16.msra.mxu0 0
        %2525 = vmatprep.subr.bf16.mxu0 0
        %2526 = vmatpush1.bf16.msra.mxu0 0
        %2527 = vmatprep.subr.bf16.mxu0 0
        %2528 = vmatpush1.bf16.msra.mxu0 0
        %2529 = vmatprep.subr.bf16.mxu0 0
        %2530 = vmatpush1.bf16.msra.mxu0 0
        %2531 = vmatprep.subr.bf16.mxu0 0
        %2532 = vmatpush1.bf16.msra.mxu0 %v2510
        %2533 = vmatprep.subr.bf16.mxu0 0
        %2534 = vmatpush1.bf16.msra.mxu0 %v2509
        %2535 = vmatprep.subr.bf16.mxu0 0
        %2536 = vmatpush2.bf16.msra.mxu0 0
        %2537 = vmatprep.subr.bf16.mxu0 0
        %2538 = vmatpush2.bf16.msra.mxu0 0
        %2539 = vmatprep.subr.bf16.mxu0 0
        %2540 = vmatpush2.bf16.msra.mxu0 0
        %2541 = vmatprep.subr.bf16.mxu0 0
        %2542 = vmatpush2.bf16.msra.mxu0 0
        %2543 = vmatprep.subr.bf16.mxu0 0
        %2544 = vmatpush2.bf16.msra.mxu0 0
        %2545 = vmatprep.subr.bf16.mxu0 0
        %2546 = vmatpush2.bf16.msra.mxu0 0
        %2547 = vmatprep.subr.bf16.mxu0 0
        %2548 = vmatpush2.bf16.msra.mxu0 0
        %2549 = vmatprep.subr.bf16.mxu0 0
        %2550 = vmatpush2.bf16.msra.mxu0 0
        %2551 = vmatprep.mubr.bf16.mxu0 0
        %2552 = vmatmul.mubr.bf16.gmra.mxu0 %v2514
        %v2553 = vpop.f32.mrf.mxu0
        %v2554 = vadd.f32 0.0, %v2553
        %v2555 = vpop.f32.mrf.mxu0
        %v2556 = vpop.f32.mrf.mxu0
        %v2557 = vadd.f32 0.0, %v2556
        %v2558 = vpop.f32.mrf.mxu0
        %2559 = vmatprep.mubr.bf16.mxu0 0
        %2560 = vmatmul.mubr.bf16.gmra.mxu0 %v2517
        %v2561 = vpop.f32.mrf.mxu0
        %v2562 = vadd.f32 0.0, %v2561
        %v2563 = vpop.f32.mrf.mxu0
        %v2564 = vpop.f32.mrf.mxu0
        %v2565 = vadd.f32 0.0, %v2564
        %v2566 = vpop.f32.mrf.mxu0
        %2567 = vdwg.mxu0
        %v2568 = vadd.f32 %v2486, %v2554
        %v2569 = vadd.f32 %v2487, %v2557
        %v2570 = vadd.f32 %v2488, %v2562
        %v2571 = vadd.f32 %v2489, %v2565
        %v2572 = vld [vmem:[#allocation2 + $0x8] sm:$0xff]
        %v2573 = vld [vmem:[#allocation2 + $0x10] sm:$0xff]
        %v2574 = vld [vmem:[#allocation2 + $0x20] sm:$0xff]
        %v2575 = vld [vmem:[#allocation2 + $0x28] sm:$0xff]
        %v2576 = vpack.c.bf16 %v2573, %v2572
        %v2577 = vpack.c.bf16 %v2575, %v2574
        %s2578 = scalar_lea.vmem %s577, 128 [#allocation8]
        %v2579 = vld [vmem:[%s2578] sm:$0xf]
        %v2580 = vld [vmem:[%s2578 + $0x4] sm:$0xf]
        %v2581 = vld [vmem:[%s2578 + $0x8] sm:$0xf]
        %v2582 = vld [vmem:[%s2578 + $0xc] sm:$0xf]
        %v2587 = vunpack.c.l.b16 %v2579
        %v2588 = vunpack.c.l.b16 %v2580
        %v2589 = vunpack.c.l.b16 %v2581
        %v2590 = vunpack.c.l.b16 %v2582
        %v2591 = vpack.c.b16 %v2588, %v2587
        %v2592 = vpack.c.b16 %v2590, %v2589
        %v2596 = vsel %vm816, %v2576, 0
        %v2599 = vsel %vm816, %v2577, 0
        %2601 = vmatprep.subr.bf16.mxu0 0
        %2602 = vmatpush1.bf16.msra.mxu0 0
        %2603 = vmatprep.subr.bf16.mxu0 0
        %2604 = vmatpush1.bf16.msra.mxu0 0
        %2605 = vmatprep.subr.bf16.mxu0 0
        %2606 = vmatpush1.bf16.msra.mxu0 0
        %2607 = vmatprep.subr.bf16.mxu0 0
        %2608 = vmatpush1.bf16.msra.mxu0 0
        %2609 = vmatprep.subr.bf16.mxu0 0
        %2610 = vmatpush1.bf16.msra.mxu0 0
        %2611 = vmatprep.subr.bf16.mxu0 0
        %2612 = vmatpush1.bf16.msra.mxu0 0
        %2613 = vmatprep.subr.bf16.mxu0 0
        %2614 = vmatpush1.bf16.msra.mxu0 %v2592
        %2615 = vmatprep.subr.bf16.mxu0 0
        %2616 = vmatpush1.bf16.msra.mxu0 %v2591
        %2617 = vmatprep.subr.bf16.mxu0 0
        %2618 = vmatpush2.bf16.msra.mxu0 0
        %2619 = vmatprep.subr.bf16.mxu0 0
        %2620 = vmatpush2.bf16.msra.mxu0 0
        %2621 = vmatprep.subr.bf16.mxu0 0
        %2622 = vmatpush2.bf16.msra.mxu0 0
        %2623 = vmatprep.subr.bf16.mxu0 0
        %2624 = vmatpush2.bf16.msra.mxu0 0
        %2625 = vmatprep.subr.bf16.mxu0 0
        %2626 = vmatpush2.bf16.msra.mxu0 0
        %2627 = vmatprep.subr.bf16.mxu0 0
        %2628 = vmatpush2.bf16.msra.mxu0 0
        %2629 = vmatprep.subr.bf16.mxu0 0
        %2630 = vmatpush2.bf16.msra.mxu0 0
        %2631 = vmatprep.subr.bf16.mxu0 0
        %2632 = vmatpush2.bf16.msra.mxu0 0
        %2633 = vmatprep.mubr.bf16.mxu0 0
        %2634 = vmatmul.mubr.bf16.gmra.mxu0 %v2596
        %v2635 = vpop.f32.mrf.mxu0
        %v2636 = vadd.f32 0.0, %v2635
        %v2637 = vpop.f32.mrf.mxu0
        %v2638 = vpop.f32.mrf.mxu0
        %v2639 = vadd.f32 0.0, %v2638
        %v2640 = vpop.f32.mrf.mxu0
        %2641 = vmatprep.mubr.bf16.mxu0 0
        %2642 = vmatmul.mubr.bf16.gmra.mxu0 %v2599
        %v2643 = vpop.f32.mrf.mxu0
        %v2644 = vadd.f32 0.0, %v2643
        %v2645 = vpop.f32.mrf.mxu0
        %v2646 = vpop.f32.mrf.mxu0
        %v2647 = vadd.f32 0.0, %v2646
        %v2648 = vpop.f32.mrf.mxu0
        %2649 = vdwg.mxu0
        %v2650 = vadd.f32 %v2568, %v2636
        %v2651 = vadd.f32 %v2569, %v2639
        %v2652 = vadd.f32 %v2570, %v2644
        %v2653 = vadd.f32 %v2571, %v2647
        %v2654 = vld [vmem:[%s693] sm:$0x1]
        %v2656 = vlaneseq
        %v2657 = vshrl.u32 %v2656, 7
        %v2658 = vsub.s32 0, %v2657
        %v2659 = vrot.slane %v2654, %v2658
        %v2661 = vadd.f32 %v2650, %v2659
        %v2662 = vadd.f32 %v2651, %v2659
        %v2663 = vadd.f32 %v2652, %v2659
        %v2664 = vadd.f32 %v2653, %v2659
        %v2665 = vmax.f32 %v2661, 0.0
        %v2666 = vmax.f32 %v2662, 0.0
        %v2667 = vmax.f32 %v2663, 0.0
        %v2668 = vmax.f32 %v2664, 0.0
        %v2669 = vpack.c.bf16 %v2666, %v2665
        %v2670 = vpack.c.bf16 %v2668, %v2667
        %v2671 = vld [vmem:[%s698] sm:$0xf]
        %v2672 = vld [vmem:[%s698 + $0x4] sm:$0xf]
        %v2673 = vld [vmem:[%s698 + $0x8] sm:$0xf]
        %v2674 = vld [vmem:[%s698 + $0xc] sm:$0xf]
        %v2675 = vld [vmem:[%s698 + $0x10] sm:$0xf]
        %v2676 = vld [vmem:[%s698 + $0x14] sm:$0xf]
        %v2677 = vld [vmem:[%s698 + $0x18] sm:$0xf]
        %v2678 = vld [vmem:[%s698 + $0x1c] sm:$0xf]
        %v2679 = vld [vmem:[%s701] sm:$0x1]
        %v2681 = vlaneseq
        %v2682 = vshrl.u32 %v2681, 7
        %v2683 = vsub.s32 0, %v2682
        %v2684 = vrot.slane %v2679, %v2683
        %v2694 = vunpack.c.l.b16 %v2671
        %v2695 = vunpack.c.l.b16 %v2672
        %v2696 = vunpack.c.l.b16 %v2673
        %v2697 = vunpack.c.l.b16 %v2674
        %v2698 = vunpack.c.l.b16 %v2675
        %v2699 = vunpack.c.l.b16 %v2676
        %v2700 = vunpack.c.l.b16 %v2677
        %v2701 = vunpack.c.l.b16 %v2678
        %v2702 = vpack.c.b16 %v2695, %v2694
        %v2703 = vpack.c.b16 %v2697, %v2696
        %v2704 = vpack.c.b16 %v2699, %v2698
        %v2705 = vpack.c.b16 %v2701, %v2700
        %vm2710 = vcmask 523264
        %v2712 = vsel %vm2710, %v2669, 0
        %v2715 = vsel %vm2710, %v2670, 0
        %2717 = vmatprep.subr.bf16.mxu0 0
        %2718 = vmatpush1.bf16.msra.mxu0 0
        %2719 = vmatprep.subr.bf16.mxu0 0
        %2720 = vmatpush1.bf16.msra.mxu0 0
        %2721 = vmatprep.subr.bf16.mxu0 0
        %2722 = vmatpush1.bf16.msra.mxu0 0
        %2723 = vmatprep.subr.bf16.mxu0 0
        %2724 = vmatpush1.bf16.msra.mxu0 0
        %2725 = vmatprep.subr.bf16.mxu0 0
        %2726 = vmatpush1.bf16.msra.mxu0 %v2705
        %2727 = vmatprep.subr.bf16.mxu0 0
        %2728 = vmatpush1.bf16.msra.mxu0 %v2704
        %2729 = vmatprep.subr.bf16.mxu0 0
        %2730 = vmatpush1.bf16.msra.mxu0 %v2703
        %2731 = vmatprep.subr.bf16.mxu0 0
        %2732 = vmatpush1.bf16.msra.mxu0 %v2702
        %2733 = vmatprep.subr.bf16.mxu0 0
        %2734 = vmatpush2.bf16.msra.mxu0 0
        %2735 = vmatprep.subr.bf16.mxu0 0
        %2736 = vmatpush2.bf16.msra.mxu0 0
        %2737 = vmatprep.subr.bf16.mxu0 0
        %2738 = vmatpush2.bf16.msra.mxu0 0
        %2739 = vmatprep.subr.bf16.mxu0 0
        %2740 = vmatpush2.bf16.msra.mxu0 0
        %2741 = vmatprep.subr.bf16.mxu0 0
        %2742 = vmatpush2.bf16.msra.mxu0 0
        %2743 = vmatprep.subr.bf16.mxu0 0
        %2744 = vmatpush2.bf16.msra.mxu0 0
        %2745 = vmatprep.subr.bf16.mxu0 0
        %2746 = vmatpush2.bf16.msra.mxu0 0
        %2747 = vmatprep.subr.bf16.mxu0 0
        %2748 = vmatpush2.bf16.msra.mxu0 0
        %2749 = vmatprep.mubr.bf16.mxu0 0
        %2750 = vmatmul.mubr.bf16.gmra.mxu0 %v2712
        %v2751 = vpop.f32.mrf.mxu0
        %v2752 = vadd.f32 %v2684, %v2751
        %v2753 = vpop.f32.mrf.mxu0
        %v2754 = vpop.f32.mrf.mxu0
        %v2755 = vadd.f32 %v2684, %v2754
        %v2756 = vpop.f32.mrf.mxu0
        %2757 = vmatprep.mubr.bf16.mxu0 0
        %2758 = vmatmul.mubr.bf16.gmra.mxu0 %v2715
        %v2759 = vpop.f32.mrf.mxu0
        %v2760 = vadd.f32 %v2684, %v2759
        %v2761 = vpop.f32.mrf.mxu0
        %v2762 = vpop.f32.mrf.mxu0
        %v2763 = vadd.f32 %v2684, %v2762
        %v2764 = vpop.f32.mrf.mxu0
        %2765 = vdwg.mxu0
        %v2766 = vadd.f32 %v2752, %v1917
        %v2767 = vadd.f32 %v2755, %v1918
        %v2768 = vadd.f32 %v2760, %v1919
        %v2769 = vadd.f32 %v2763, %v1920
        %v2770 = vld [vmem:[%s704] sm:$0x1]
        %v2771 = vld [vmem:[%s707] sm:$0x1]
        %v2772 = vsel %vm816, %v2766, 0.0
        %2773 = vadd.xlane.f32.xlu0 %v2772
        %v2774 = vpop.xlane.xlu0 %2773
        %v2775 = vsel %vm816, %v2767, 0.0
        %2776 = vadd.xlane.f32.xlu0 %v2775
        %v2777 = vpop.xlane.xlu0 %2776
        %v2778 = vsel %vm816, %v2768, 0.0
        %2779 = vadd.xlane.f32.xlu0 %v2778
        %v2780 = vpop.xlane.xlu0 %2779
        %v2781 = vsel %vm816, %v2769, 0.0
        %2782 = vadd.xlane.f32.xlu0 %v2781
        %v2783 = vpop.xlane.xlu0 %2782
        %v2784 = vmul.f32 %v2774, %v1848
        %v2785 = vmul.f32 %v2777, %v1848
        %v2786 = vmul.f32 %v2780, %v1848
        %v2787 = vmul.f32 %v2783, %v1848
        %v2788 = vsub.f32 %v2766, %v2784
        %v2789 = vsub.f32 %v2767, %v2785
        %v2790 = vsub.f32 %v2768, %v2786
        %v2791 = vsub.f32 %v2769, %v2787
        %v2792 = vmul.f32 %v2788, %v2788
        %v2793 = vmul.f32 %v2789, %v2789
        %v2794 = vmul.f32 %v2790, %v2790
        %v2795 = vmul.f32 %v2791, %v2791
        %v2796 = vsel %vm816, %v2792, 0.0
        %2797 = vadd.xlane.f32.xlu0 %v2796
        %v2798 = vpop.xlane.xlu0 %2797
        %v2799 = vsel %vm816, %v2793, 0.0
        %2800 = vadd.xlane.f32.xlu0 %v2799
        %v2801 = vpop.xlane.xlu0 %2800
        %v2802 = vsel %vm816, %v2794, 0.0
        %2803 = vadd.xlane.f32.xlu0 %v2802
        %v2804 = vpop.xlane.xlu0 %2803
        %v2805 = vsel %vm816, %v2795, 0.0
        %2806 = vadd.xlane.f32.xlu0 %v2805
        %v2807 = vpop.xlane.xlu0 %2806
        %v2808 = vmul.f32 %v2798, %v1848
        %v2809 = vmul.f32 %v2801, %v1848
        %v2810 = vmul.f32 %v2804, %v1848
        %v2811 = vmul.f32 %v2807, %v1848
        %v2812 = vadd.f32 %v2808, 1e-05
        %v2813 = vadd.f32 %v2809, 1e-05
        %v2814 = vadd.f32 %v2810, 1e-05
        %v2815 = vadd.f32 %v2811, 1e-05
        %v2816 = vrsqrt.pop %v2812
        %v2817 = vrsqrt.pop %v2813
        %v2818 = vrsqrt.pop %v2814
        %v2819 = vrsqrt.pop %v2815
        %v2820 = vmul.f32 %v2788, %v2816
        %v2821 = vmul.f32 %v2789, %v2817
        %v2822 = vmul.f32 %v2790, %v2818
        %v2823 = vmul.f32 %v2791, %v2819
        %v2825 = vlaneseq
        %v2826 = vshrl.u32 %v2825, 7
        %v2827 = vsub.s32 0, %v2826
        %v2828 = vrot.slane %v2770, %v2827
        %v2830 = vmul.f32 %v2820, %v2828
        %v2831 = vmul.f32 %v2821, %v2828
        %v2832 = vmul.f32 %v2822, %v2828
        %v2833 = vmul.f32 %v2823, %v2828
        %v2835 = vlaneseq
        %v2836 = vshrl.u32 %v2835, 7
        %v2837 = vsub.s32 0, %v2836
        %v2838 = vrot.slane %v2771, %v2837
        %v2840 = vadd.f32 %v2830, %v2838
        %v2841 = vadd.f32 %v2831, %v2838
        %v2842 = vadd.f32 %v2832, %v2838
        %v2843 = vadd.f32 %v2833, %v2838
        %v2844 = vsel %vm1913, 0.0, %v2840
        %v2845 = vsel %vm1914, 0.0, %v2841
        %v2846 = vsel %vm1915, 0.0, %v2842
        %v2847 = vsel %vm1916, 0.0, %v2843
        %2848 = vst.msk [vmem:[#allocation10] sm:$0xff] %vm816, %v2844
        %2849 = vst.msk [vmem:[#allocation10 + $0x8] sm:$0xff] %vm816, %v2845
        %2850 = vst.msk [vmem:[#allocation10 + $0x10] sm:$0xff] %vm816, %v2846
        %2851 = vst.msk [vmem:[#allocation10 + $0x18] sm:$0xff] %vm816, %v2847
        // Predicated region
        $region89: #{tpu_custom_call.1} parent=75 // pred_check
          %p2852 = pneg %p424
        $region90: #{tpu_custom_call.1} parent=75 // pred_check_branch
          %2854 = sbr.rel (%p2852) target = $region92
        $region91: #{tpu_custom_call.1} parent=75 // pred_region
          %s2855 = smul.u32 2, %s39
          %s2857 = ssub.s32 512, 512
          %2858 = vsyncadd [#allocation7], %s2857
          %s2859 = smul.addr %s2855, 2
          %s2860 = smul.addr %s2859, 128
          %s2861 = scalar_lea.hbm %s15, %s2860
          %s2862 = sshll.u32 [#allocation10], 4
          %s2863 = int_to_ptr.vmem [resolvable:$true] %s2862
          %2868 = dma.vmem_to_hbm [thread:$0]  %s2863, 512, %s2861, [#allocation7], 128, 128, 8
        $region92: #{tpu_custom_call.1} parent=75 // pred_fallthru
          _
        // Predicated region
        $region93: #{tpu_custom_call.1} parent=75 // pred_check
          %p2869 = pneg %p424
        $region94: #{tpu_custom_call.1} parent=75 // pred_check_branch
          %2871 = sbr.rel (%p2869) target = $region96
        $region95: #{tpu_custom_call.1} parent=75 // pred_region
          %2872 = dma.done [#allocation7], 512
        $region96: #{tpu_custom_call.1} parent=75 // pred_fallthru
          _
      $region76: #{tpu_custom_call.1} parent=5 // pred_fallthru
        _
      %p2873 = scmp.le.s32.totalorder 2, %s30
      // Predicated region
      $region97: #{tpu_custom_call.1} parent=5 // pred_check
        %p2874 = pneg %p2873
      $region98: #{tpu_custom_call.1} parent=5 // pred_check_branch
        %2876 = sbr.rel (%p2874) target = $region100
      $region99: #{tpu_custom_call.1} parent=5 // pred_region
        %s2877 = ssub.s32 %s30, 2
      $region100: #{tpu_custom_call.1} parent=5 // pred_fallthru
        _
    $region6: #{tpu_custom_call.1} parent=1 // loop_footer
      %s34 = sadd.s32 1, %s30
    $region7: #{tpu_custom_call.1} parent=1 // loop_footer_branch
      %29 = sbr.rel target = $region3
    $region8: #{tpu_custom_call.1} parent=1 // loop_exit
      _
    %2878 = vsyncpa [#allocation6], 1
    %s2879 = scalar_lea.sflag [#allocation6], 1
    %2880 = vsyncpa %s2879, 1
    %2881 = vsyncpa [#allocation9], 1
    %s2882 = scalar_lea.sflag [#allocation9], 1
    %2883 = vsyncpa %s2882, 1
    %2884 = vsyncpa [#allocation7], 1
    %s2885 = scalar_lea.sflag [#allocation7], 1
    %2886 = vsyncpa %s2885, 1

</llo_original>
